<compile_context>
chip_gen: v6e
topology: v6e:2x2x1
jax: 0.10.0
libtpu: 0.0.40
codegen_flags: <defaults>
</compile_context>

<pallas_src>
import math

import jax
import jax.numpy as jnp
from jax import lax
from jax.experimental import pallas as pl
from jax.experimental.pallas import tpu as pltpu


def _resblock_kernel(xa_ref, xh1_ref, xh2_ref, w1b_ref, b1_ref, w2b_ref, b2_ref,
                     o_ref, slab_ref):
    """One grid step = one (sample n, TD-deep output-depth chunk) slab.

    xa_ref : (1, TD, Hp, Wp*Cin)  padded input, padded depths [d*TD, d*TD+TD)
    xh1_ref: (1, 1,  Hp, Wp*Cin)  halo slab at padded depth d*TD+TD
    xh2_ref: (1, 1,  Hp, Wp*Cin)  halo slab at padded depth d*TD+TD+1
    w1b_ref: (9, Wp*Cin, W*Cmid)  conv1 as W-banded matrices, one per (kd,kh)
    b1_ref : (1, W*Cmid)          conv1 bias tiled along W
    w2b_ref: (W*Cmid, W*Cin)      conv2 (1x1x1) as a block-diagonal matrix
    b2_ref : (1, W*Cin)           conv2 bias tiled along W
    o_ref  : (1, TD, H, W*Cin)    lane-dense output slab
    slab_ref: VMEM scratch (TD+2, Hp, Wp*Cin) holding the assembled depth halo
    """
    TD = xa_ref.shape[1]
    Hp, WCp = xa_ref.shape[2], xa_ref.shape[3]
    H = Hp - 2
    WCm = w1b_ref.shape[2]          # W*Cmid
    WC = o_ref.shape[3]             # W*Cin
    Cin = (WCp - WC) // 2
    M = TD * H

    # Assemble the (TD+2)-deep halo slab (three cheap VMEM copies, ~100 KB).
    slab_ref[pl.ds(0, TD), :, :] = xa_ref[0]
    slab_ref[pl.ds(TD, 1), :, :] = xh1_ref[0]
    slab_ref[pl.ds(TD + 1, 1), :, :] = xh2_ref[0]

    slab = slab_ref[...]                       # pre-ReLU input (residual source)
    relu = jnp.maximum(slab, 0.0)              # ReLU(x); zero padding stays zero

    # Conv3d(3x3x3, pad=1) applied to ReLU(x): 9 dense GEMMs.  The kw shift is
    # baked into the banded RHS, so the LHS is just a (kd,kh)-shifted dense
    # window of the slab (leading-dim + sublane slices only).
    acc = jnp.zeros((M, WCm), jnp.float32)
    for kd in range(3):
        for kh in range(3):
            lhs = relu[kd:kd + TD, kh:kh + H, :].reshape(M, WCp)
            acc = acc + jnp.dot(lhs, w1b_ref[kd * 3 + kh],
                                preferred_element_type=jnp.float32)

    hmid = jnp.maximum(acc + b1_ref[...], 0.0)             # bias + ReLU, dense

    # Conv3d(1x1x1) back to Cin: one block-diagonal GEMM straight into the
    # lane-dense output layout, then bias + residual (pre-ReLU input).
    y = jnp.dot(hmid, w2b_ref[...], preferred_element_type=jnp.float32)
    y = y + b2_ref[...]
    y = y + slab[1:1 + TD, 1:1 + H, Cin:Cin + WC].reshape(M, WC)

    o_ref[...] = y.reshape(1, TD, H, WC)


def resblock3d_forward(x, w1, b1, w2, b2):
    """x: (N, Cin, D, H, W) float32 (PyTorch NCDHW).  Returns same shape."""
    N, Cin, D, H, W = x.shape
    Cmid = w1.shape[0]
    Hp, Wp = H + 2, W + 2
    WC, WCm, WCp = W * Cin, W * Cmid, Wp * Cin

    # Depth-chunk size: largest divisor of D up to 8 (keeps blocks small enough
    # for v7x's 64 MiB VMEM and leaves >=2 grid steps for megacore balance).
    TD = 1
    for t in (8, 4, 2, 1):
        if D % t == 0:
            TD = t
            break

    # Channels-last, lane-dense padded layout: (N, D+2, H+2, (W+2)*Cin).
    # TODO(synk): keep the model channels-last end-to-end so this transpose
    # and pad stop being extra full-HBM passes.
    x_cl = jnp.transpose(x, (0, 2, 3, 4, 1))
    xpad = jnp.pad(x_cl, ((0, 0), (1, 1), (1, 1), (1, 1), (0, 0)))
    xpad = xpad.reshape(N, D + 2, Hp, WCp)

    # conv1 weight (Cmid, Cin, 3,3,3) -> 9 W-banded matrices (Wp*Cin, W*Cmid):
    # w1b[kd*3+kh, (w+kw)*Cin + c, w*Cmid + m] = w1[m, c, kd, kh, kw].
    taps = jnp.transpose(w1, (2, 3, 4, 1, 0)).astype(jnp.float32)   # (kd,kh,kw,Cin,Cmid)
    w1b = jnp.zeros((3, 3, WCp, WCm), jnp.float32)
    for kw in range(3):
        shift = jnp.zeros((Wp, W), jnp.float32).at[
            jnp.arange(W) + kw, jnp.arange(W)].set(1.0)              # S[w+kw, w] = 1
        w1b = w1b + jnp.einsum('pq,dhcm->dhpcqm', shift,
                               taps[:, :, kw]).reshape(3, 3, WCp, WCm)
    w1b = w1b.reshape(9, WCp, WCm)

    # conv2 weight (Cin, Cmid, 1,1,1) -> block-diagonal (W*Cmid, W*Cin).
    w2r = jnp.transpose(w2.reshape(Cin, Cmid), (1, 0))               # (Cmid, Cin)
    w2b = jnp.kron(jnp.eye(W, dtype=jnp.float32), w2r.astype(jnp.float32))

    b1t = jnp.tile(b1.astype(jnp.float32), W).reshape(1, WCm)
    b2t = jnp.tile(b2.astype(jnp.float32), W).reshape(1, WC)

    # VMEM budget: double-buffered blocks + weights + halo scratch, capped at
    # 48 MiB (>=16 MiB headroom on v7x's 64 MiB physical VMEM).
    xa_bytes = TD * Hp * WCp * 4
    halo_bytes = 2 * Hp * WCp * 4
    out_bytes = TD * H * WC * 4
    w_bytes = (9 * WCp * WCm + WCm + WCm * WC + WC) * 4
    slab_bytes = (TD + 2) * Hp * WCp * 4
    vmem_needed = 2 * (xa_bytes + halo_bytes + out_bytes + w_bytes) + slab_bytes
    vmem_limit = int(min(max(4 * vmem_needed + (8 << 20), 32 << 20), 48 << 20))

    grid = (N, D // TD)

    out = pl.pallas_call(
        _resblock_kernel,
        out_shape=jax.ShapeDtypeStruct((N, D, H, WC), jnp.float32),
        grid_spec=pltpu.PrefetchScalarGridSpec(
            num_scalar_prefetch=0,
            grid=grid,
            in_specs=[
                # main TD-deep chunk: padded depths [d*TD, d*TD+TD)
                pl.BlockSpec((1, TD, Hp, WCp), lambda n, d: (n, d, 0, 0)),
                # single-depth halos at padded depths d*TD+TD and d*TD+TD+1
                pl.BlockSpec((1, 1, Hp, WCp), lambda n, d: (n, (d + 1) * TD, 0, 0)),
                pl.BlockSpec((1, 1, Hp, WCp), lambda n, d: (n, (d + 1) * TD + 1, 0, 0)),
                # weights / biases: constant index maps -> VMEM-resident
                pl.BlockSpec((9, WCp, WCm), lambda n, d: (0, 0, 0)),
                pl.BlockSpec((1, WCm), lambda n, d: (0, 0)),
                pl.BlockSpec((WCm, WC), lambda n, d: (0, 0)),
                pl.BlockSpec((1, WC), lambda n, d: (0, 0)),
            ],
            out_specs=pl.BlockSpec((1, TD, H, WC), lambda n, d: (n, d, 0, 0)),
            scratch_shapes=[pltpu.VMEM((TD + 2, Hp, WCp), jnp.float32)],
        ),
        compiler_params=pltpu.CompilerParams(
            dimension_semantics=("parallel", "parallel"),
            vmem_limit_bytes=vmem_limit,
        ),
    )(xpad, xpad, xpad, w1b, b1t, w2b, b2t)

    out = out.reshape(N, D, H, W, Cin)
    return jnp.transpose(out, (0, 4, 1, 2, 3))                       # back to NCDHW


def _xavier_uniform(key, shape, fan_in, fan_out):
    bound = math.sqrt(6.0 / (fan_in + fan_out))
    return jax.random.uniform(key, shape, jnp.float32, -bound, bound)


def _ref_forward(x, w1, b1, w2, b2):
    """Pure-JAX reference matching the PyTorch module semantics."""
    dn = ("NCDHW", "OIDHW", "NCDHW")
    h = jnp.maximum(x, 0.0)
    h = lax.conv_general_dilated(h, w1, (1, 1, 1),
                                 ((1, 1), (1, 1), (1, 1)),
                                 dimension_numbers=dn,
                                 precision=lax.Precision.HIGHEST)
    h = h + b1[None, :, None, None, None]
    h = jnp.maximum(h, 0.0)
    h = lax.conv_general_dilated(h, w2, (1, 1, 1), "VALID",
                                 dimension_numbers=dn,
                                 precision=lax.Precision.HIGHEST)
    h = h + b2[None, :, None, None, None]
    return h + x


if __name__ == "__main__":
    key = jax.random.PRNGKey(0)
    kx, k1, k2 = jax.random.split(key, 3)

    # Small shapes consistent with the module (NCDHW).  W*Cin = 128 so the
    # kernel's output stores are exactly lane-dense.
    N, Cin, Cmid, D, H, W = 2, 8, 16, 16, 16, 16

    x = jax.random.normal(kx, (N, Cin, D, H, W), jnp.float32)

    # Deterministic "xavier_uniform_" init (random_init); biases zeroed.
    w1 = _xavier_uniform(k1, (Cmid, Cin, 3, 3, 3),
                         fan_in=Cin * 27, fan_out=Cmid * 27)
    b1 = jnp.zeros((Cmid,), jnp.float32)
    w2 = _xavier_uniform(k2, (Cin, Cmid, 1, 1, 1), fan_in=Cmid, fan_out=Cin)
    b2 = jnp.zeros((Cin,), jnp.float32)

    fwd = jax.jit(resblock3d_forward)
    out = fwd(x, w1, b1, w2, b2)
    out = jax.block_until_ready(out)

    ref = _ref_forward(x, w1, b1, w2, b2)
    assert out.shape == (N, Cin, D, H, W)
    assert jnp.allclose(out, ref, atol=1e-3, rtol=1e-3), "mismatch vs reference"

    print("KERNEL_OK")
</pallas_src>

<mosaic_0001>
module attributes {stable_mosaic.version = 11 : i64} {
  func.func @_resblock_kernel(%arg0: i32, %arg1: i32, %arg2: memref<1x8x18x144xf32, #tpu.memory_space<vmem>>, %arg3: memref<1x1x18x144xf32, #tpu.memory_space<vmem>>, %arg4: memref<1x1x18x144xf32, #tpu.memory_space<vmem>>, %arg5: memref<9x144x256xf32, #tpu.memory_space<vmem>>, %arg6: memref<1x256xf32, #tpu.memory_space<vmem>>, %arg7: memref<256x128xf32, #tpu.memory_space<vmem>>, %arg8: memref<1x128xf32, #tpu.memory_space<vmem>>, %arg9: memref<1x8x16x128xf32, #tpu.memory_space<vmem>>, %arg10: memref<10x18x144xf32, #tpu.memory_space<vmem>>) attributes {dimension_semantics = [#tpu.dimension_semantics<parallel>, #tpu.dimension_semantics<parallel>], iteration_bounds = array<i64: 2, 2>, scalar_prefetch = 0 : i64, scratch_operands = 1 : i64, tpu.core_type = #tpu.core_type<tc>, window_params = [{transform_indices = @transform_0, window_bounds = array<i64: 1, 8, 18, 144>}, {transform_indices = @transform_1, window_bounds = array<i64: 1, 1, 18, 144>}, {transform_indices = @transform_2, window_bounds = array<i64: 1, 1, 18, 144>}, {pipeline_mode = #tpu.pipeline_mode<synchronous>, transform_indices = @transform_3, window_bounds = array<i64: 9, 144, 256>}, {pipeline_mode = #tpu.pipeline_mode<synchronous>, transform_indices = @transform_4, window_bounds = array<i64: 1, 256>}, {pipeline_mode = #tpu.pipeline_mode<synchronous>, transform_indices = @transform_5, window_bounds = array<i64: 256, 128>}, {pipeline_mode = #tpu.pipeline_mode<synchronous>, transform_indices = @transform_6, window_bounds = array<i64: 1, 128>}, {transform_indices = @transform_7, window_bounds = array<i64: 1, 8, 16, 128>}]} {
    %c0 = arith.constant 0 : index
    %c0_0 = arith.constant 0 : index
    %c0_1 = arith.constant 0 : index
    %c0_2 = arith.constant 0 : index
    %0 = vector.load %arg2[%c0, %c0_0, %c0_1, %c0_2] : memref<1x8x18x144xf32, #tpu.memory_space<vmem>>, vector<1x8x18x144xf32>
    %1 = vector.shape_cast %0 : vector<1x8x18x144xf32> to vector<8x18x144xf32>
    %c0_3 = arith.constant 0 : index
    %c0_4 = arith.constant 0 : index
    %c0_5 = arith.constant 0 : index
    %2 = vector.load %arg10[%c0_3, %c0_4, %c0_5] : memref<10x18x144xf32, #tpu.memory_space<vmem>>, vector<8x18x144xf32>
    tpu.vector_store %arg10[%c0_3, %c0_4, %c0_5], %1 {strides = array<i32>} : memref<10x18x144xf32, #tpu.memory_space<vmem>>, vector<8x18x144xf32>,
    %c0_6 = arith.constant 0 : index
    %c0_7 = arith.constant 0 : index
    %c0_8 = arith.constant 0 : index
    %c0_9 = arith.constant 0 : index
    %3 = vector.load %arg3[%c0_6, %c0_7, %c0_8, %c0_9] : memref<1x1x18x144xf32, #tpu.memory_space<vmem>>, vector<1x1x18x144xf32>
    %4 = vector.shape_cast %3 : vector<1x1x18x144xf32> to vector<1x18x144xf32>
    %c8 = arith.constant 8 : index
    %c0_10 = arith.constant 0 : index
    %c0_11 = arith.constant 0 : index
    %5 = vector.load %arg10[%c8, %c0_10, %c0_11] : memref<10x18x144xf32, #tpu.memory_space<vmem>>, vector<1x18x144xf32>
    tpu.vector_store %arg10[%c8, %c0_10, %c0_11], %4 {strides = array<i32>} : memref<10x18x144xf32, #tpu.memory_space<vmem>>, vector<1x18x144xf32>,
    %c0_12 = arith.constant 0 : index
    %c0_13 = arith.constant 0 : index
    %c0_14 = arith.constant 0 : index
    %c0_15 = arith.constant 0 : index
    %6 = vector.load %arg4[%c0_12, %c0_13, %c0_14, %c0_15] : memref<1x1x18x144xf32, #tpu.memory_space<vmem>>, vector<1x1x18x144xf32>
    %7 = vector.shape_cast %6 : vector<1x1x18x144xf32> to vector<1x18x144xf32>
    %c9 = arith.constant 9 : index
    %c0_16 = arith.constant 0 : index
    %c0_17 = arith.constant 0 : index
    %8 = vector.load %arg10[%c9, %c0_16, %c0_17] : memref<10x18x144xf32, #tpu.memory_space<vmem>>, vector<1x18x144xf32>
    tpu.vector_store %arg10[%c9, %c0_16, %c0_17], %7 {strides = array<i32>} : memref<10x18x144xf32, #tpu.memory_space<vmem>>, vector<1x18x144xf32>,
    %c0_18 = arith.constant 0 : index
    %c0_19 = arith.constant 0 : index
    %c0_20 = arith.constant 0 : index
    %9 = vector.load %arg10[%c0_18, %c0_19, %c0_20] : memref<10x18x144xf32, #tpu.memory_space<vmem>>, vector<10x18x144xf32>
    %cst = arith.constant 0.000000e+00 : f32
    %10 = vector.broadcast %cst : f32 to vector<10x18x144xf32>
    %11 = arith.maximumf %9, %10 : vector<10x18x144xf32>
    %cst_21 = arith.constant 0.000000e+00 : f32
    %12 = vector.broadcast %cst_21 : f32 to vector<128x256xf32>
    %13 = vector.extract_strided_slice %11 {offsets = [0, 0, 0], sizes = [8, 16, 144], strides = [1, 1, 1]} : vector<10x18x144xf32> to vector<8x16x144xf32>
    %14 = vector.shape_cast %13 : vector<8x16x144xf32> to vector<128x144xf32>
    %c0_22 = arith.constant 0 : index
    %c0_23 = arith.constant 0 : index
    %c0_24 = arith.constant 0 : index
    %15 = vector.load %arg5[%c0_22, %c0_23, %c0_24] : memref<9x144x256xf32, #tpu.memory_space<vmem>>, vector<1x144x256xf32>
    %16 = vector.shape_cast %15 : vector<1x144x256xf32> to vector<144x256xf32>
    %cst_25 = arith.constant dense<0.000000e+00> : vector<128x256xf32>
    %17 = tpu.matmul %14, %16, %cst_25 {dimension_numbers = #tpu.dot_dimension_numbers<[1], [0], [0], [1], [0, 0, 1, 1], [], []>} : vector<128x144xf32>, vector<144x256xf32>, vector<128x256xf32> -> vector<128x256xf32>
    %18 = arith.addf %12, %17 : vector<128x256xf32>
    %19 = vector.extract_strided_slice %11 {offsets = [0, 1, 0], sizes = [8, 16, 144], strides = [1, 1, 1]} : vector<10x18x144xf32> to vector<8x16x144xf32>
    %20 = vector.shape_cast %19 : vector<8x16x144xf32> to vector<128x144xf32>
    %c1 = arith.constant 1 : index
    %c0_26 = arith.constant 0 : index
    %c0_27 = arith.constant 0 : index
    %21 = vector.load %arg5[%c1, %c0_26, %c0_27] : memref<9x144x256xf32, #tpu.memory_space<vmem>>, vector<1x144x256xf32>
    %22 = vector.shape_cast %21 : vector<1x144x256xf32> to vector<144x256xf32>
    %cst_28 = arith.constant dense<0.000000e+00> : vector<128x256xf32>
    %23 = tpu.matmul %20, %22, %cst_28 {dimension_numbers = #tpu.dot_dimension_numbers<[1], [0], [0], [1], [0, 0, 1, 1], [], []>} : vector<128x144xf32>, vector<144x256xf32>, vector<128x256xf32> -> vector<128x256xf32>
    %24 = arith.addf %18, %23 : vector<128x256xf32>
    %25 = vector.extract_strided_slice %11 {offsets = [0, 2, 0], sizes = [8, 16, 144], strides = [1, 1, 1]} : vector<10x18x144xf32> to vector<8x16x144xf32>
    %26 = vector.shape_cast %25 : vector<8x16x144xf32> to vector<128x144xf32>
    %c2 = arith.constant 2 : index
    %c0_29 = arith.constant 0 : index
    %c0_30 = arith.constant 0 : index
    %27 = vector.load %arg5[%c2, %c0_29, %c0_30] : memref<9x144x256xf32, #tpu.memory_space<vmem>>, vector<1x144x256xf32>
    %28 = vector.shape_cast %27 : vector<1x144x256xf32> to vector<144x256xf32>
    %cst_31 = arith.constant dense<0.000000e+00> : vector<128x256xf32>
    %29 = tpu.matmul %26, %28, %cst_31 {dimension_numbers = #tpu.dot_dimension_numbers<[1], [0], [0], [1], [0, 0, 1, 1], [], []>} : vector<128x144xf32>, vector<144x256xf32>, vector<128x256xf32> -> vector<128x256xf32>
    %30 = arith.addf %24, %29 : vector<128x256xf32>
    %31 = vector.extract_strided_slice %11 {offsets = [1, 0, 0], sizes = [8, 16, 144], strides = [1, 1, 1]} : vector<10x18x144xf32> to vector<8x16x144xf32>
    %32 = vector.shape_cast %31 : vector<8x16x144xf32> to vector<128x144xf32>
    %c3 = arith.constant 3 : index
    %c0_32 = arith.constant 0 : index
    %c0_33 = arith.constant 0 : index
    %33 = vector.load %arg5[%c3, %c0_32, %c0_33] : memref<9x144x256xf32, #tpu.memory_space<vmem>>, vector<1x144x256xf32>
    %34 = vector.shape_cast %33 : vector<1x144x256xf32> to vector<144x256xf32>
    %cst_34 = arith.constant dense<0.000000e+00> : vector<128x256xf32>
    %35 = tpu.matmul %32, %34, %cst_34 {dimension_numbers = #tpu.dot_dimension_numbers<[1], [0], [0], [1], [0, 0, 1, 1], [], []>} : vector<128x144xf32>, vector<144x256xf32>, vector<128x256xf32> -> vector<128x256xf32>
    %36 = arith.addf %30, %35 : vector<128x256xf32>
    %37 = vector.extract_strided_slice %11 {offsets = [1, 1, 0], sizes = [8, 16, 144], strides = [1, 1, 1]} : vector<10x18x144xf32> to vector<8x16x144xf32>
    %38 = vector.shape_cast %37 : vector<8x16x144xf32> to vector<128x144xf32>
    %c4 = arith.constant 4 : index
    %c0_35 = arith.constant 0 : index
    %c0_36 = arith.constant 0 : index
    %39 = vector.load %arg5[%c4, %c0_35, %c0_36] : memref<9x144x256xf32, #tpu.memory_space<vmem>>, vector<1x144x256xf32>
    %40 = vector.shape_cast %39 : vector<1x144x256xf32> to vector<144x256xf32>
    %cst_37 = arith.constant dense<0.000000e+00> : vector<128x256xf32>
    %41 = tpu.matmul %38, %40, %cst_37 {dimension_numbers = #tpu.dot_dimension_numbers<[1], [0], [0], [1], [0, 0, 1, 1], [], []>} : vector<128x144xf32>, vector<144x256xf32>, vector<128x256xf32> -> vector<128x256xf32>
    %42 = arith.addf %36, %41 : vector<128x256xf32>
    %43 = vector.extract_strided_slice %11 {offsets = [1, 2, 0], sizes = [8, 16, 144], strides = [1, 1, 1]} : vector<10x18x144xf32> to vector<8x16x144xf32>
    %44 = vector.shape_cast %43 : vector<8x16x144xf32> to vector<128x144xf32>
    %c5 = arith.constant 5 : index
    %c0_38 = arith.constant 0 : index
    %c0_39 = arith.constant 0 : index
    %45 = vector.load %arg5[%c5, %c0_38, %c0_39] : memref<9x144x256xf32, #tpu.memory_space<vmem>>, vector<1x144x256xf32>
    %46 = vector.shape_cast %45 : vector<1x144x256xf32> to vector<144x256xf32>
    %cst_40 = arith.constant dense<0.000000e+00> : vector<128x256xf32>
    %47 = tpu.matmul %44, %46, %cst_40 {dimension_numbers = #tpu.dot_dimension_numbers<[1], [0], [0], [1], [0, 0, 1, 1], [], []>} : vector<128x144xf32>, vector<144x256xf32>, vector<128x256xf32> -> vector<128x256xf32>
    %48 = arith.addf %42, %47 : vector<128x256xf32>
    %49 = vector.extract_strided_slice %11 {offsets = [2, 0, 0], sizes = [8, 16, 144], strides = [1, 1, 1]} : vector<10x18x144xf32> to vector<8x16x144xf32>
    %50 = vector.shape_cast %49 : vector<8x16x144xf32> to vector<128x144xf32>
    %c6 = arith.constant 6 : index
    %c0_41 = arith.constant 0 : index
    %c0_42 = arith.constant 0 : index
    %51 = vector.load %arg5[%c6, %c0_41, %c0_42] : memref<9x144x256xf32, #tpu.memory_space<vmem>>, vector<1x144x256xf32>
    %52 = vector.shape_cast %51 : vector<1x144x256xf32> to vector<144x256xf32>
    %cst_43 = arith.constant dense<0.000000e+00> : vector<128x256xf32>
    %53 = tpu.matmul %50, %52, %cst_43 {dimension_numbers = #tpu.dot_dimension_numbers<[1], [0], [0], [1], [0, 0, 1, 1], [], []>} : vector<128x144xf32>, vector<144x256xf32>, vector<128x256xf32> -> vector<128x256xf32>
    %54 = arith.addf %48, %53 : vector<128x256xf32>
    %55 = vector.extract_strided_slice %11 {offsets = [2, 1, 0], sizes = [8, 16, 144], strides = [1, 1, 1]} : vector<10x18x144xf32> to vector<8x16x144xf32>
    %56 = vector.shape_cast %55 : vector<8x16x144xf32> to vector<128x144xf32>
    %c7 = arith.constant 7 : index
    %c0_44 = arith.constant 0 : index
    %c0_45 = arith.constant 0 : index
    %57 = vector.load %arg5[%c7, %c0_44, %c0_45] : memref<9x144x256xf32, #tpu.memory_space<vmem>>, vector<1x144x256xf32>
    %58 = vector.shape_cast %57 : vector<1x144x256xf32> to vector<144x256xf32>
    %cst_46 = arith.constant dense<0.000000e+00> : vector<128x256xf32>
    %59 = tpu.matmul %56, %58, %cst_46 {dimension_numbers = #tpu.dot_dimension_numbers<[1], [0], [0], [1], [0, 0, 1, 1], [], []>} : vector<128x144xf32>, vector<144x256xf32>, vector<128x256xf32> -> vector<128x256xf32>
    %60 = arith.addf %54, %59 : vector<128x256xf32>
    %61 = vector.extract_strided_slice %11 {offsets = [2, 2, 0], sizes = [8, 16, 144], strides = [1, 1, 1]} : vector<10x18x144xf32> to vector<8x16x144xf32>
    %62 = vector.shape_cast %61 : vector<8x16x144xf32> to vector<128x144xf32>
    %c8_47 = arith.constant 8 : index
    %c0_48 = arith.constant 0 : index
    %c0_49 = arith.constant 0 : index
    %63 = vector.load %arg5[%c8_47, %c0_48, %c0_49] : memref<9x144x256xf32, #tpu.memory_space<vmem>>, vector<1x144x256xf32>
    %64 = vector.shape_cast %63 : vector<1x144x256xf32> to vector<144x256xf32>
    %cst_50 = arith.constant dense<0.000000e+00> : vector<128x256xf32>
    %65 = tpu.matmul %62, %64, %cst_50 {dimension_numbers = #tpu.dot_dimension_numbers<[1], [0], [0], [1], [0, 0, 1, 1], [], []>} : vector<128x144xf32>, vector<144x256xf32>, vector<128x256xf32> -> vector<128x256xf32>
    %66 = arith.addf %60, %65 : vector<128x256xf32>
    %c0_51 = arith.constant 0 : index
    %c0_52 = arith.constant 0 : index
    %67 = vector.load %arg6[%c0_51, %c0_52] : memref<1x256xf32, #tpu.memory_space<vmem>>, vector<1x256xf32>
    %68 = vector.broadcast %67 : vector<1x256xf32> to vector<128x256xf32>
    %69 = arith.addf %66, %68 : vector<128x256xf32>
    %cst_53 = arith.constant 0.000000e+00 : f32
    %70 = vector.broadcast %cst_53 : f32 to vector<128x256xf32>
    %71 = arith.maximumf %69, %70 : vector<128x256xf32>
    %c0_54 = arith.constant 0 : index
    %c0_55 = arith.constant 0 : index
    %72 = vector.load %arg7[%c0_54, %c0_55] : memref<256x128xf32, #tpu.memory_space<vmem>>, vector<256x128xf32>
    %cst_56 = arith.constant dense<0.000000e+00> : vector<128x128xf32>
    %73 = tpu.matmul %71, %72, %cst_56 {dimension_numbers = #tpu.dot_dimension_numbers<[1], [0], [0], [1], [0, 0, 1, 1], [], []>} : vector<128x256xf32>, vector<256x128xf32>, vector<128x128xf32> -> vector<128x128xf32>
    %c0_57 = arith.constant 0 : index
    %c0_58 = arith.constant 0 : index
    %74 = vector.load %arg8[%c0_57, %c0_58] : memref<1x128xf32, #tpu.memory_space<vmem>>, vector<1x128xf32>
    %75 = vector.broadcast %74 : vector<1x128xf32> to vector<128x128xf32>
    %76 = arith.addf %73, %75 : vector<128x128xf32>
    %77 = vector.extract_strided_slice %9 {offsets = [1, 1, 8], sizes = [8, 16, 128], strides = [1, 1, 1]} : vector<10x18x144xf32> to vector<8x16x128xf32>
    %78 = vector.shape_cast %77 : vector<8x16x128xf32> to vector<128x128xf32>
    %79 = arith.addf %76, %78 : vector<128x128xf32>
    %80 = vector.shape_cast %79 : vector<128x128xf32> to vector<1x8x16x128xf32>
    %c0_59 = arith.constant 0 : index
    %c0_60 = arith.constant 0 : index
    %c0_61 = arith.constant 0 : index
    %c0_62 = arith.constant 0 : index
    %81 = vector.load %arg9[%c0_59, %c0_60, %c0_61, %c0_62] : memref<1x8x16x128xf32, #tpu.memory_space<vmem>>, vector<1x8x16x128xf32>
    tpu.vector_store %arg9[%c0_59, %c0_60, %c0_61, %c0_62], %80 {strides = array<i32>} : memref<1x8x16x128xf32, #tpu.memory_space<vmem>>, vector<1x8x16x128xf32>,
    return
  }
  func.func @transform_0(%arg0: i32, %arg1: i32) -> (i32, i32, i32, i32) {
    %c0_i32 = arith.constant 0 : i32
    %c0_i32_0 = arith.constant 0 : i32
    %c0_i32_1 = arith.constant 0 : i32
    return %arg0, %arg1, %c0_i32, %c0_i32_0 : i32, i32, i32, i32
  }
  func.func @transform_1(%arg0: i32, %arg1: i32) -> (i32, i32, i32, i32) {
    %c1_i32 = arith.constant 1 : i32
    %0 = arith.addi %arg1, %c1_i32 : i32
    %c8_i32 = arith.constant 8 : i32
    %1 = arith.muli %0, %c8_i32 : i32
    %c0_i32 = arith.constant 0 : i32
    %c0_i32_0 = arith.constant 0 : i32
    %c0_i32_1 = arith.constant 0 : i32
    return %arg0, %1, %c0_i32, %c0_i32_0 : i32, i32, i32, i32
  }
  func.func @transform_2(%arg0: i32, %arg1: i32) -> (i32, i32, i32, i32) {
    %c1_i32 = arith.constant 1 : i32
    %0 = arith.addi %arg1, %c1_i32 : i32
    %c8_i32 = arith.constant 8 : i32
    %1 = arith.muli %0, %c8_i32 : i32
    %c1_i32_0 = arith.constant 1 : i32
    %2 = arith.addi %1, %c1_i32_0 : i32
    %c0_i32 = arith.constant 0 : i32
    %c0_i32_1 = arith.constant 0 : i32
    %c0_i32_2 = arith.constant 0 : i32
    return %arg0, %2, %c0_i32, %c0_i32_1 : i32, i32, i32, i32
  }
  func.func @transform_3(%arg0: i32, %arg1: i32) -> (i32, i32, i32) {
    %c0_i32 = arith.constant 0 : i32
    %c0_i32_0 = arith.constant 0 : i32
    %c0_i32_1 = arith.constant 0 : i32
    %c0_i32_2 = arith.constant 0 : i32
    return %c0_i32, %c0_i32_0, %c0_i32_1 : i32, i32, i32
  }
  func.func @transform_4(%arg0: i32, %arg1: i32) -> (i32, i32) {
    %c0_i32 = arith.constant 0 : i32
    %c0_i32_0 = arith.constant 0 : i32
    %c0_i32_1 = arith.constant 0 : i32
    return %c0_i32, %c0_i32_0 : i32, i32
  }
  func.func @transform_5(%arg0: i32, %arg1: i32) -> (i32, i32) {
    %c0_i32 = arith.constant 0 : i32
    %c0_i32_0 = arith.constant 0 : i32
    %c0_i32_1 = arith.constant 0 : i32
    return %c0_i32, %c0_i32_0 : i32, i32
  }
  func.func @transform_6(%arg0: i32, %arg1: i32) -> (i32, i32) {
    %c0_i32 = arith.constant 0 : i32
    %c0_i32_0 = arith.constant 0 : i32
    %c0_i32_1 = arith.constant 0 : i32
    return %c0_i32, %c0_i32_0 : i32, i32
  }
  func.func @transform_7(%arg0: i32, %arg1: i32) -> (i32, i32, i32, i32) {
    %c0_i32 = arith.constant 0 : i32
    %c0_i32_0 = arith.constant 0 : i32
    %c0_i32_1 = arith.constant 0 : i32
    return %arg0, %arg1, %c0_i32, %c0_i32_0 : i32, i32, i32, i32
  }
}

</mosaic_0001>

<llo_original>
// kernel: tile.13
$region0: #{tile.13}
  #allocation0 [shape = 's32[1]{0}', space=sflag, size = 0x4, scoped, tag = 'scoped memory for tile.13']
  %s0 = inlined_call_operand.vmem [shape: f32[16], index: 0, kind: input, shape index: {}]
  %s1 = inlined_call_operand.vmem [shape: f32[16,16], index: 1, kind: output, shape index: {}]
  // Predicated region
  $region2: #{tile.13} parent=0 // pred_check
    _
  $region3: #{tile.13} parent=0 // pred_check_branch
    %3 = sbr.rel (0) target = $region5
  $region4: #{tile.13} parent=0 // pred_region
    _
  $region5: #{tile.13} parent=0 // pred_fallthru
    _
  %v4 = vld [vmem:[%s0] ss:$0 sm:$0xff]
  %5 = vst [vmem:[%s1] sm:$0xff] %v4
  %s6 = scalar_lea.vmem %s1, 8
  %7 = vst [vmem:[%s6] sm:$0xff] %v4

// kernel: tile.14
$region0: #{tile.14}
  %s0 = inlined_call_operand.vmem [shape: f32[16,16], index: 0, kind: input, shape index: {}]
  %s1 = inlined_call_operand.vmem [shape: f32[1,256], index: 1, kind: output, shape index: {}]
  $region1: #{tile.14} parent=0
    #allocation0 [shape = 'u8[8192]{0}', space=vmem, size = 0x2000, scoped, tag = 'scoped mem for output reshape']
    %s2 = smov 3
    %v3 = vld [vmem:[%s0] ss:$8 sm:%s2]
    %vm4 = vcmask 130048
    %5 = vst.msk [vmem:[#allocation0] ss:$8 sm:$0x3] %vm4, %v3
    %s6 = scalar_lea.vmem %s0, 7
    %s7 = smov 3
    %v8 = vld [vmem:[%s6] ss:$8 sm:%s7]
    %9 = vrot.lane.b32.xlu0 %v8, 112
    %v10 = vpop.permute.xlu0 %9
    %vm11 = vcmask 1048448
    %12 = vst.msk [vmem:[#allocation0] ss:$8 sm:$0x3] %vm11, %v10
    %s13 = scalar_lea.vmem %s0, 6
    %s14 = smov 3
    %v15 = vld [vmem:[%s13] ss:$8 sm:%s14]
    %16 = vrot.lane.b32.xlu0 %v15, 96
    %v17 = vpop.permute.xlu0 %16
    %vm18 = vcmask 917248
    %19 = vst.msk [vmem:[#allocation0] ss:$8 sm:$0x3] %vm18, %v17
    %s20 = scalar_lea.vmem %s0, 5
    %s21 = smov 3
    %v22 = vld [vmem:[%s20] ss:$8 sm:%s21]
    %23 = vrot.lane.b32.xlu0 %v22, 80
    %v24 = vpop.permute.xlu0 %23
    %vm25 = vcmask 786048
    %26 = vst.msk [vmem:[#allocation0] ss:$8 sm:$0x3] %vm25, %v24
    %s27 = scalar_lea.vmem %s0, 4
    %s28 = smov 3
    %v29 = vld [vmem:[%s27] ss:$8 sm:%s28]
    %30 = vrot.lane.b32.xlu0 %v29, 64
    %v31 = vpop.permute.xlu0 %30
    %vm32 = vcmask 654848
    %33 = vst.msk [vmem:[#allocation0] ss:$8 sm:$0x3] %vm32, %v31
    %s34 = scalar_lea.vmem %s0, 3
    %s35 = smov 3
    %v36 = vld [vmem:[%s34] ss:$8 sm:%s35]
    %37 = vrot.lane.b32.xlu0 %v36, 48
    %v38 = vpop.permute.xlu0 %37
    %vm39 = vcmask 523648
    %40 = vst.msk [vmem:[#allocation0] ss:$8 sm:$0x3] %vm39, %v38
    %s41 = scalar_lea.vmem %s0, 2
    %s42 = smov 3
    %v43 = vld [vmem:[%s41] ss:$8 sm:%s42]
    %44 = vrot.lane.b32.xlu0 %v43, 32
    %v45 = vpop.permute.xlu0 %44
    %vm46 = vcmask 392448
    %47 = vst.msk [vmem:[#allocation0] ss:$8 sm:$0x3] %vm46, %v45
    %s48 = scalar_lea.vmem %s0, 1
    %s49 = smov 3
    %v50 = vld [vmem:[%s48] ss:$8 sm:%s49]
    %51 = vrot.lane.b32.xlu0 %v50, 16
    %v52 = vpop.permute.xlu0 %51
    %vm53 = vcmask 261248
    %54 = vst.msk [vmem:[#allocation0] ss:$8 sm:$0x3] %vm53, %v52
    %s56 = sshll.u32 1, 1
    %s57 = ssub.s32 %s56, 1
    %v59 = vld [vmem:[#allocation0] sm:%s57]
    %s60 = sshll.u32 1, 1
    %s61 = ssub.s32 %s60, 1
    %62 = vst [vmem:[%s1] sm:%s61] %v59
    %s63 = scalar_lea.vmem [#allocation0], 8
    %v64 = vld [vmem:[%s63] sm:%s57]
    %s65 = sshll.u32 1, 1
    %s66 = ssub.s32 %s65, 1
    %s67 = scalar_lea.vmem %s1, 1
    %68 = vst [vmem:[%s67] sm:%s66] %v64

// kernel: tile.18
$region0: #{tile.18}
  #allocation0 [shape = 's32[1]{0}', space=sflag, size = 0x4, scoped, tag = 'scoped memory for tile.18']
  %s0 = inlined_call_operand.vmem [shape: f32[8], index: 0, kind: input, shape index: {}]
  %s1 = inlined_call_operand.vmem [shape: f32[16,8], index: 1, kind: output, shape index: {}]
  // Predicated region
  $region2: #{tile.18} parent=0 // pred_check
    _
  $region3: #{tile.18} parent=0 // pred_check_branch
    %3 = sbr.rel (0) target = $region5
  $region4: #{tile.18} parent=0 // pred_region
    _
  $region5: #{tile.18} parent=0 // pred_fallthru
    _
  %v4 = vld [vmem:[%s0] ss:$0 sm:$0xff]
  %5 = vst [vmem:[%s1] sm:$0xff] %v4
  %s6 = scalar_lea.vmem %s1, 8
  %7 = vst [vmem:[%s6] sm:$0xff] %v4

// kernel: tile.19
$region0: #{tile.19}
  %s0 = inlined_call_operand.vmem [shape: f32[16,8], index: 0, kind: input, shape index: {}]
  %s1 = inlined_call_operand.vmem [shape: f32[1,128], index: 1, kind: output, shape index: {}]
  $region1: #{tile.19} parent=0
    #allocation0 [shape = 'u8[4096]{0}', space=vmem, size = 0x1000, scoped, tag = 'scoped mem for output reshape']
    %v2 = vld [vmem:[%s0] sm:$0x1]
    %vm3 = vcmask 64512
    %4 = vst.msk [vmem:[#allocation0] sm:$0x1] %vm3, %v2
    %s5 = scalar_lea.vmem %s0, 15
    %v6 = vld [vmem:[%s5] sm:$0x1]
    %7 = vrot.lane.b32.xlu0 %v6, 120
    %v8 = vpop.permute.xlu0 %7
    %vm9 = vcmask 1048512
    %10 = vst.msk [vmem:[#allocation0] sm:$0x1] %vm9, %v8
    %s11 = scalar_lea.vmem %s0, 14
    %v12 = vld [vmem:[%s11] sm:$0x1]
    %13 = vrot.lane.b32.xlu0 %v12, 112
    %v14 = vpop.permute.xlu0 %13
    %vm15 = vcmask 982912
    %16 = vst.msk [vmem:[#allocation0] sm:$0x1] %vm15, %v14
    %s17 = scalar_lea.vmem %s0, 13
    %v18 = vld [vmem:[%s17] sm:$0x1]
    %19 = vrot.lane.b32.xlu0 %v18, 104
    %v20 = vpop.permute.xlu0 %19
    %vm21 = vcmask 917312
    %22 = vst.msk [vmem:[#allocation0] sm:$0x1] %vm21, %v20
    %s23 = scalar_lea.vmem %s0, 12
    %v24 = vld [vmem:[%s23] sm:$0x1]
    %25 = vrot.lane.b32.xlu0 %v24, 96
    %v26 = vpop.permute.xlu0 %25
    %vm27 = vcmask 851712
    %28 = vst.msk [vmem:[#allocation0] sm:$0x1] %vm27, %v26
    %s29 = scalar_lea.vmem %s0, 11
    %v30 = vld [vmem:[%s29] sm:$0x1]
    %31 = vrot.lane.b32.xlu0 %v30, 88
    %v32 = vpop.permute.xlu0 %31
    %vm33 = vcmask 786112
    %34 = vst.msk [vmem:[#allocation0] sm:$0x1] %vm33, %v32
    %s35 = scalar_lea.vmem %s0, 10
    %v36 = vld [vmem:[%s35] sm:$0x1]
    %37 = vrot.lane.b32.xlu0 %v36, 80
    %v38 = vpop.permute.xlu0 %37
    %vm39 = vcmask 720512
    %40 = vst.msk [vmem:[#allocation0] sm:$0x1] %vm39, %v38
    %s41 = scalar_lea.vmem %s0, 9
    %v42 = vld [vmem:[%s41] sm:$0x1]
    %43 = vrot.lane.b32.xlu0 %v42, 72
    %v44 = vpop.permute.xlu0 %43
    %vm45 = vcmask 654912
    %46 = vst.msk [vmem:[#allocation0] sm:$0x1] %vm45, %v44
    %s47 = scalar_lea.vmem %s0, 8
    %v48 = vld [vmem:[%s47] sm:$0x1]
    %49 = vrot.lane.b32.xlu0 %v48, 64
    %v50 = vpop.permute.xlu0 %49
    %vm51 = vcmask 589312
    %52 = vst.msk [vmem:[#allocation0] sm:$0x1] %vm51, %v50
    %s53 = scalar_lea.vmem %s0, 7
    %v54 = vld [vmem:[%s53] sm:$0x1]
    %55 = vrot.lane.b32.xlu0 %v54, 56
    %v56 = vpop.permute.xlu0 %55
    %vm57 = vcmask 523712
    %58 = vst.msk [vmem:[#allocation0] sm:$0x1] %vm57, %v56
    %s59 = scalar_lea.vmem %s0, 6
    %v60 = vld [vmem:[%s59] sm:$0x1]
    %61 = vrot.lane.b32.xlu0 %v60, 48
    %v62 = vpop.permute.xlu0 %61
    %vm63 = vcmask 458112
    %64 = vst.msk [vmem:[#allocation0] sm:$0x1] %vm63, %v62
    %s65 = scalar_lea.vmem %s0, 5
    %v66 = vld [vmem:[%s65] sm:$0x1]
    %67 = vrot.lane.b32.xlu0 %v66, 40
    %v68 = vpop.permute.xlu0 %67
    %vm69 = vcmask 392512
    %70 = vst.msk [vmem:[#allocation0] sm:$0x1] %vm69, %v68
    %s71 = scalar_lea.vmem %s0, 4
    %v72 = vld [vmem:[%s71] sm:$0x1]
    %73 = vrot.lane.b32.xlu0 %v72, 32
    %v74 = vpop.permute.xlu0 %73
    %vm75 = vcmask 326912
    %76 = vst.msk [vmem:[#allocation0] sm:$0x1] %vm75, %v74
    %s77 = scalar_lea.vmem %s0, 3
    %v78 = vld [vmem:[%s77] sm:$0x1]
    %79 = vrot.lane.b32.xlu0 %v78, 24
    %v80 = vpop.permute.xlu0 %79
    %vm81 = vcmask 261312
    %82 = vst.msk [vmem:[#allocation0] sm:$0x1] %vm81, %v80
    %s83 = scalar_lea.vmem %s0, 2
    %v84 = vld [vmem:[%s83] sm:$0x1]
    %85 = vrot.lane.b32.xlu0 %v84, 16
    %v86 = vpop.permute.xlu0 %85
    %vm87 = vcmask 195712
    %88 = vst.msk [vmem:[#allocation0] sm:$0x1] %vm87, %v86
    %s89 = scalar_lea.vmem %s0, 1
    %v90 = vld [vmem:[%s89] sm:$0x1]
    %91 = vrot.lane.b32.xlu0 %v90, 8
    %v92 = vpop.permute.xlu0 %91
    %vm93 = vcmask 130112
    %94 = vst.msk [vmem:[#allocation0] sm:$0x1] %vm93, %v92
    %s96 = sshll.u32 1, 1
    %s97 = ssub.s32 %s96, 1
    %v99 = vld [vmem:[#allocation0] sm:%s97]
    %s100 = sshll.u32 1, 1
    %s101 = ssub.s32 %s100, 1
    %102 = vst [vmem:[%s1] sm:%s101] %v99

// kernel: resblock3d_forward.1
$region0: #{resblock3d_forward.1}
  #allocation0 [shape = 'u32[]', space=smem, size = 0x4, offset = 0x4, fixed_abs, tag = 'smem constant byte address 0x4 - core index']
  #allocation1 [shape = 'u32[144,128]{1,0:T(1,128)}', space=vmem, size = 0x12000, scoped, tag = 'internal scratch']
  #allocation2 [shape = 'f32[10,18,144]{2,1,0:T(8,128)}', space=vmem, size = 0x3c000, scoped, tag = 'scratch operand']
  %s0 = inlined_call_operand.vmem [shape: f32[2,18,18,144], index: 0, kind: input, shape index: {}, may-alias: {0,1,2}]
  %s1 = inlined_call_operand.vmem [shape: f32[2,18,18,144], index: 1, kind: input, shape index: {}, may-alias: {0,1,2}]
  %s2 = inlined_call_operand.vmem [shape: f32[2,18,18,144], index: 2, kind: input, shape index: {}, may-alias: {0,1,2}]
  %s3 = inlined_call_operand.vmem [shape: f32[9,144,256], index: 3, kind: input, shape index: {}]
  %s4 = inlined_call_operand.vmem [shape: f32[1,256], index: 4, kind: input, shape index: {}]
  %s5 = inlined_call_operand.vmem [shape: f32[256,128], index: 5, kind: input, shape index: {}]
  %s6 = inlined_call_operand.vmem [shape: f32[1,128], index: 6, kind: input, shape index: {}]
  %s7 = inlined_call_operand.vmem [shape: f32[2,16,16,128], index: 7, kind: output, shape index: {}]
  %s8 = sld [smem:[#allocation0]]
  $region61: #{resblock3d_forward.1} parent=0
    _
  %s10 = ssub.s32 1, %s8
  %s11 = scalar_select 0, %s10, %s8
  loop: start=0, step=1, limit=6
  $region2: #{resblock3d_forward.1} parent=0 // loop_pre_header
    _
  $region3: #{resblock3d_forward.1} parent=0 // loop_header
    %s13 = sphi 0, %s17
    %p14 = scmp.ge.s32.totalorder %s13, 6
    %s20 = sphi 0, %s32
    %s21 = sphi 0, %s28
    %s22 = sphi 0, %s20
    %s23 = sphi 0, %s21
    %s24 = sphi 0, %s22
    %s25 = sphi 0, %s23
    %s37 = sphi 0, %s39
    %s40 = sphi 0, %s37
    %s41 = sphi 0, %s40
    %s57 = sphi 0, %s41
    %s69 = sphi 0, %s71
    %s72 = sphi 0, %s69
    %s73 = sphi 0, %s72
    %s89 = sphi 0, %s73
    %s103 = sphi 0, %s105
    %s106 = sphi 0, %s103
    %s107 = sphi 0, %s106
    %s123 = sphi 0, %s107
    %s127 = sphi 0, %s127
    %s129 = sphi 0, %s127
    %s130 = sphi 0, %s129
    %s144 = sphi 0, %s130
    %s148 = sphi 0, %s148
    %s150 = sphi 0, %s148
    %s151 = sphi 0, %s150
    %s165 = sphi 0, %s151
    %s169 = sphi 0, %s169
    %s171 = sphi 0, %s169
    %s172 = sphi 0, %s171
    %s186 = sphi 0, %s172
    %s190 = sphi 0, %s190
    %s192 = sphi 0, %s190
    %s193 = sphi 0, %s192
    %s207 = sphi 0, %s193
    %s215 = sphi 0, %s217
    %s218 = sphi 0, %s215
    %s219 = sphi 0, %s218
    %s235 = sphi 0, %s219
  $region4: #{resblock3d_forward.1} parent=0 // loop_header_branch
    %16 = sbr.rel (%p14) target = $region8
  $region5: #{resblock3d_forward.1} parent=0 // loop_body
    %s18 = ssub.s32 %s13, 1
    %s19 = ssub.s32 %s13, 2
    %s26 = sadd.s32 1, %s21
    %p27 = scmp.ge.s32.totalorder %s26, 2
    %s28 = scalar_select %p27, 0, %s26
    %s29 = sadd.s32 1, %s20
    %s30 = scalar_select %p27, %s29, %s20
    %p31 = scmp.ge.s32.totalorder %s30, 2
    %s32 = scalar_select %p31, 0, %s30
    %s33 = ssub.s32 %s20, %s32
    %s34 = ssub.s32 %s21, %s28
    %s35 = sor.u32 %s33, %s34
    %p36 = scmp.eq.s32.totalorder %s35, 0
    %s38 = sadd.s32 %s37, 1
    %s39 = scalar_select %p36, %s37, %s38
    %p42 = pneg %p36
    %p43 = scmp.eq.s32.totalorder %s13, 3
    %p44 = por %p42, %p43
    %p45 = scmp.ne.s32.totalorder %s37, %s40
    %p46 = scmp.eq.s32.totalorder %s13, 0
    %p47 = por %p45, %p46
    %p48 = scmp.ne.s32.totalorder %s37, %s40
    %p49 = scmp.eq.s32.totalorder %s18, 3
    %p50 = por %p48, %p49
    %p51 = scmp.ne.s32.totalorder %s40, %s41
    %p52 = scmp.eq.s32.totalorder %s18, 0
    %p53 = por %p51, %p52
    %p54 = scmp.ne.s32.totalorder %s40, %s41
    %p55 = scmp.eq.s32.totalorder %s19, 3
    %p56 = por %p54, %p55
    %p58 = scmp.ne.s32.totalorder %s41, %s57
    %p59 = scmp.eq.s32.totalorder %s19, 0
    %p60 = por %p58, %p59
    %s61 = sadd.s32 %s21, 1
    %s62 = smul.u32 %s61, 8
    %s63 = sadd.s32 %s28, 1
    %s64 = smul.u32 %s63, 8
    %s65 = ssub.s32 %s20, %s32
    %s66 = ssub.s32 %s62, %s64
    %s67 = sor.u32 %s65, %s66
    %p68 = scmp.eq.s32.totalorder %s67, 0
    %s70 = sadd.s32 %s69, 1
    %s71 = scalar_select %p68, %s69, %s70
    %p74 = pneg %p68
    %p75 = scmp.eq.s32.totalorder %s13, 3
    %p76 = por %p74, %p75
    %p77 = scmp.ne.s32.totalorder %s69, %s72
    %p78 = scmp.eq.s32.totalorder %s13, 0
    %p79 = por %p77, %p78
    %p80 = scmp.ne.s32.totalorder %s69, %s72
    %p81 = scmp.eq.s32.totalorder %s18, 3
    %p82 = por %p80, %p81
    %p83 = scmp.ne.s32.totalorder %s72, %s73
    %p84 = scmp.eq.s32.totalorder %s18, 0
    %p85 = por %p83, %p84
    %p86 = scmp.ne.s32.totalorder %s72, %s73
    %p87 = scmp.eq.s32.totalorder %s19, 3
    %p88 = por %p86, %p87
    %p90 = scmp.ne.s32.totalorder %s73, %s89
    %p91 = scmp.eq.s32.totalorder %s19, 0
    %p92 = por %p90, %p91
    %s93 = sadd.s32 %s21, 1
    %s94 = smul.u32 %s93, 8
    %s95 = sadd.s32 %s94, 1
    %s96 = sadd.s32 %s28, 1
    %s97 = smul.u32 %s96, 8
    %s98 = sadd.s32 %s97, 1
    %s99 = ssub.s32 %s20, %s32
    %s100 = ssub.s32 %s95, %s98
    %s101 = sor.u32 %s99, %s100
    %p102 = scmp.eq.s32.totalorder %s101, 0
    %s104 = sadd.s32 %s103, 1
    %s105 = scalar_select %p102, %s103, %s104
    %p108 = pneg %p102
    %p109 = scmp.eq.s32.totalorder %s13, 3
    %p110 = por %p108, %p109
    %p111 = scmp.ne.s32.totalorder %s103, %s106
    %p112 = scmp.eq.s32.totalorder %s13, 0
    %p113 = por %p111, %p112
    %p114 = scmp.ne.s32.totalorder %s103, %s106
    %p115 = scmp.eq.s32.totalorder %s18, 3
    %p116 = por %p114, %p115
    %p117 = scmp.ne.s32.totalorder %s106, %s107
    %p118 = scmp.eq.s32.totalorder %s18, 0
    %p119 = por %p117, %p118
    %p120 = scmp.ne.s32.totalorder %s106, %s107
    %p121 = scmp.eq.s32.totalorder %s19, 3
    %p122 = por %p120, %p121
    %p124 = scmp.ne.s32.totalorder %s107, %s123
    %p125 = scmp.eq.s32.totalorder %s19, 0
    %p126 = por %p124, %p125
    %s128 = sadd.s32 %s127, 1
    %p131 = scmp.eq.s32.totalorder %s13, 3
    %p132 = scmp.ne.s32.totalorder %s127, %s129
    %p133 = scmp.eq.s32.totalorder %s13, 0
    %p134 = por %p132, %p133
    %p135 = scmp.ne.s32.totalorder %s127, %s129
    %p136 = scmp.eq.s32.totalorder %s18, 3
    %p137 = por %p135, %p136
    %p138 = scmp.ne.s32.totalorder %s129, %s130
    %p139 = scmp.eq.s32.totalorder %s18, 0
    %p140 = por %p138, %p139
    %p141 = scmp.ne.s32.totalorder %s129, %s130
    %p142 = scmp.eq.s32.totalorder %s19, 3
    %p143 = por %p141, %p142
    %p145 = scmp.ne.s32.totalorder %s130, %s144
    %p146 = scmp.eq.s32.totalorder %s19, 0
    %p147 = por %p145, %p146
    %s149 = sadd.s32 %s148, 1
    %p152 = scmp.eq.s32.totalorder %s13, 3
    %p153 = scmp.ne.s32.totalorder %s148, %s150
    %p154 = scmp.eq.s32.totalorder %s13, 0
    %p155 = por %p153, %p154
    %p156 = scmp.ne.s32.totalorder %s148, %s150
    %p157 = scmp.eq.s32.totalorder %s18, 3
    %p158 = por %p156, %p157
    %p159 = scmp.ne.s32.totalorder %s150, %s151
    %p160 = scmp.eq.s32.totalorder %s18, 0
    %p161 = por %p159, %p160
    %p162 = scmp.ne.s32.totalorder %s150, %s151
    %p163 = scmp.eq.s32.totalorder %s19, 3
    %p164 = por %p162, %p163
    %p166 = scmp.ne.s32.totalorder %s151, %s165
    %p167 = scmp.eq.s32.totalorder %s19, 0
    %p168 = por %p166, %p167
    %s170 = sadd.s32 %s169, 1
    %p173 = scmp.eq.s32.totalorder %s13, 3
    %p174 = scmp.ne.s32.totalorder %s169, %s171
    %p175 = scmp.eq.s32.totalorder %s13, 0
    %p176 = por %p174, %p175
    %p177 = scmp.ne.s32.totalorder %s169, %s171
    %p178 = scmp.eq.s32.totalorder %s18, 3
    %p179 = por %p177, %p178
    %p180 = scmp.ne.s32.totalorder %s171, %s172
    %p181 = scmp.eq.s32.totalorder %s18, 0
    %p182 = por %p180, %p181
    %p183 = scmp.ne.s32.totalorder %s171, %s172
    %p184 = scmp.eq.s32.totalorder %s19, 3
    %p185 = por %p183, %p184
    %p187 = scmp.ne.s32.totalorder %s172, %s186
    %p188 = scmp.eq.s32.totalorder %s19, 0
    %p189 = por %p187, %p188
    %s191 = sadd.s32 %s190, 1
    %p194 = scmp.eq.s32.totalorder %s13, 3
    %p195 = scmp.ne.s32.totalorder %s190, %s192
    %p196 = scmp.eq.s32.totalorder %s13, 0
    %p197 = por %p195, %p196
    %p198 = scmp.ne.s32.totalorder %s190, %s192
    %p199 = scmp.eq.s32.totalorder %s18, 3
    %p200 = por %p198, %p199
    %p201 = scmp.ne.s32.totalorder %s192, %s193
    %p202 = scmp.eq.s32.totalorder %s18, 0
    %p203 = por %p201, %p202
    %p204 = scmp.ne.s32.totalorder %s192, %s193
    %p205 = scmp.eq.s32.totalorder %s19, 3
    %p206 = por %p204, %p205
    %p208 = scmp.ne.s32.totalorder %s193, %s207
    %p209 = scmp.eq.s32.totalorder %s19, 0
    %p210 = por %p208, %p209
    %s211 = ssub.s32 %s20, %s32
    %s212 = ssub.s32 %s21, %s28
    %s213 = sor.u32 %s211, %s212
    %p214 = scmp.eq.s32.totalorder %s213, 0
    %s216 = sadd.s32 %s215, 1
    %s217 = scalar_select %p214, %s215, %s216
    %p220 = pneg %p214
    %p221 = scmp.eq.s32.totalorder %s13, 3
    %p222 = por %p220, %p221
    %p223 = scmp.ne.s32.totalorder %s215, %s218
    %p224 = scmp.eq.s32.totalorder %s13, 0
    %p225 = por %p223, %p224
    %p226 = scmp.ne.s32.totalorder %s215, %s218
    %p227 = scmp.eq.s32.totalorder %s18, 3
    %p228 = por %p226, %p227
    %p229 = scmp.ne.s32.totalorder %s218, %s219
    %p230 = scmp.eq.s32.totalorder %s18, 0
    %p231 = por %p229, %p230
    %p232 = scmp.ne.s32.totalorder %s218, %s219
    %p233 = scmp.eq.s32.totalorder %s19, 3
    %p234 = por %p232, %p233
    %p236 = scmp.ne.s32.totalorder %s219, %s235
    %p237 = scmp.eq.s32.totalorder %s19, 0
    %p238 = por %p236, %p237
    %p239 = scmp.le.s32.totalorder 1, %s13
    %p240 = scmp.lt.s32.totalorder %s13, 5
    %p241 = pnand %p239, %p240
    %p242 = pneg %p241
    // Predicated region
    $region9: #{resblock3d_forward.1} parent=5 // pred_check
      _
    $region10: #{resblock3d_forward.1} parent=5 // pred_check_branch
      %244 = sbr.rel (%p241) target = $region12
    $region11: #{resblock3d_forward.1} parent=5 // pred_region
      %s245 = ssub.s32 %s13, 1
      // Predicated region
      $region13: #{resblock3d_forward.1} parent=11 // pred_check
        %p246 = pneg %p140
      $region14: #{resblock3d_forward.1} parent=11 // pred_check_branch
        %248 = sbr.rel (%p246) target = $region16
      $region15: #{resblock3d_forward.1} parent=11 // pred_region
        _
      $region16: #{resblock3d_forward.1} parent=11 // pred_fallthru
        _
      // Predicated region
      $region17: #{resblock3d_forward.1} parent=11 // pred_check
        %p249 = pneg %p161
      $region18: #{resblock3d_forward.1} parent=11 // pred_check_branch
        %251 = sbr.rel (%p249) target = $region20
      $region19: #{resblock3d_forward.1} parent=11 // pred_region
        _
      $region20: #{resblock3d_forward.1} parent=11 // pred_fallthru
        _
      // Predicated region
      $region21: #{resblock3d_forward.1} parent=11 // pred_check
        %p252 = pneg %p182
      $region22: #{resblock3d_forward.1} parent=11 // pred_check_branch
        %254 = sbr.rel (%p252) target = $region24
      $region23: #{resblock3d_forward.1} parent=11 // pred_region
        _
      $region24: #{resblock3d_forward.1} parent=11 // pred_fallthru
        _
      // Predicated region
      $region25: #{resblock3d_forward.1} parent=11 // pred_check
        %p255 = pneg %p203
      $region26: #{resblock3d_forward.1} parent=11 // pred_check_branch
        %257 = sbr.rel (%p255) target = $region28
      $region27: #{resblock3d_forward.1} parent=11 // pred_region
        _
      $region28: #{resblock3d_forward.1} parent=11 // pred_fallthru
        _
    $region12: #{resblock3d_forward.1} parent=5 // pred_fallthru
      _
    %p258 = scmp.lt.s32.totalorder %s13, 4
    // Predicated region
    $region29: #{resblock3d_forward.1} parent=5 // pred_check
      %p259 = pneg %p258
    $region30: #{resblock3d_forward.1} parent=5 // pred_check_branch
      %261 = sbr.rel (%p259) target = $region32
    $region31: #{resblock3d_forward.1} parent=5 // pred_region
      // Predicated region
      $region33: #{resblock3d_forward.1} parent=31 // pred_check
        %p262 = pneg %p47
      $region34: #{resblock3d_forward.1} parent=31 // pred_check_branch
        %264 = sbr.rel (%p262) target = $region36
      $region35: #{resblock3d_forward.1} parent=31 // pred_region
        %s265 = smul.u32 8, %s21
        %s266 = ssub.s32 18, %s265
        %p267 = scmp.lt.s32.totalorder %s266, 8
        %s268 = scalar_select %p267, %s266, 8
        %s269 = smul.u32 128, %s268
        %s270 = smul.u32 %s269, 3
        %s271 = smul.u32 %s270, 2
        %p272 = scmp.lt.s32.totalorder %s20, 1
        %s273 = scalar_select %p272, %s20, 1
        %p274 = scmp.lt.s32.totalorder %s265, 17
        %s275 = scalar_select %p274, %s265, 17
        %s276 = smul.addr %s275, 6
        %s277 = smul.addr %s273, 108
        %s278 = sadd.s32 %s276, %s277
        %s279 = smul.addr %s278, 8
        %s280 = scalar_lea.vmem %s0, %s279
        %s281 = smul.u32 8, %s21
        %s282 = ssub.s32 18, %s281
        %p283 = scmp.lt.s32.totalorder %s282, 8
        %s284 = scalar_select %p283, %s282, 8
        %s285 = smul.u32 128, %s284
        %s286 = smul.u32 %s285, 3
        %s287 = smul.u32 %s286, 2
      $region36: #{resblock3d_forward.1} parent=31 // pred_fallthru
        _
      // Predicated region
      $region37: #{resblock3d_forward.1} parent=31 // pred_check
        %p288 = pneg %p79
      $region38: #{resblock3d_forward.1} parent=31 // pred_check_branch
        %290 = sbr.rel (%p288) target = $region40
      $region39: #{resblock3d_forward.1} parent=31 // pred_region
        %s291 = sadd.s32 %s21, 1
        %s292 = smul.u32 %s291, 8
        %p293 = scmp.lt.s32.totalorder %s20, 1
        %s294 = scalar_select %p293, %s20, 1
        %p295 = scmp.lt.s32.totalorder %s292, 17
        %s296 = scalar_select %p295, %s292, 17
        %s297 = smul.addr %s296, 6
        %s298 = smul.addr %s294, 108
        %s299 = sadd.s32 %s297, %s298
        %s300 = smul.addr %s299, 8
        %s301 = scalar_lea.vmem %s1, %s300
        %s302 = sadd.s32 %s21, 1
        %s303 = smul.u32 %s302, 8
      $region40: #{resblock3d_forward.1} parent=31 // pred_fallthru
        _
      // Predicated region
      $region41: #{resblock3d_forward.1} parent=31 // pred_check
        %p304 = pneg %p113
      $region42: #{resblock3d_forward.1} parent=31 // pred_check_branch
        %306 = sbr.rel (%p304) target = $region44
      $region43: #{resblock3d_forward.1} parent=31 // pred_region
        %s307 = sadd.s32 %s21, 1
        %s308 = smul.u32 %s307, 8
        %s309 = sadd.s32 %s308, 1
        %p310 = scmp.lt.s32.totalorder %s20, 1
        %s311 = scalar_select %p310, %s20, 1
        %p312 = scmp.lt.s32.totalorder %s309, 17
        %s313 = scalar_select %p312, %s309, 17
        %s314 = smul.addr %s313, 6
        %s315 = smul.addr %s311, 108
        %s316 = sadd.s32 %s314, %s315
        %s317 = smul.addr %s316, 8
        %s318 = scalar_lea.vmem %s2, %s317
        %s319 = sadd.s32 %s21, 1
        %s320 = smul.u32 %s319, 8
        %s321 = sadd.s32 %s320, 1
      $region44: #{resblock3d_forward.1} parent=31 // pred_fallthru
        _
    $region32: #{resblock3d_forward.1} parent=5 // pred_fallthru
      _
    %p322 = scmp.le.s32.totalorder 1, %s13
    %p323 = scmp.lt.s32.totalorder %s13, 5
    %p324 = pnand %p322, %p323
    %p325 = pneg %p324
    // Predicated region
    $region45: #{resblock3d_forward.1} parent=5 // pred_check
      _
    $region46: #{resblock3d_forward.1} parent=5 // pred_check_branch
      %327 = sbr.rel (%p324) target = $region48
    $region47: #{resblock3d_forward.1} parent=5 // pred_region
      %s328 = ssub.s32 %s13, 1
      %s329 = smul.u32 8, %s23
      %s330 = ssub.s32 18, %s329
      %p331 = scmp.lt.s32.totalorder %s330, 8
      %s332 = scalar_select %p331, %s330, 8
      %s333 = smul.u32 128, %s332
      %s334 = smul.u32 %s333, 3
      %s335 = smul.u32 %s334, 2
      %p336 = scmp.lt.s32.totalorder %s22, 1
      %s337 = scalar_select %p336, %s22, 1
      %p338 = scmp.lt.s32.totalorder %s329, 17
      %s339 = scalar_select %p338, %s329, 17
      %s340 = smul.addr %s339, 6
      %s341 = smul.addr %s337, 108
      %s342 = sadd.s32 %s340, %s341
      %s343 = smul.addr %s342, 8
      %s344 = scalar_lea.vmem %s0, %s343
      %p345 = pneg %p53
      %p346 = pneg %p50
      %s347 = sadd.s32 %s23, 1
      %s348 = smul.u32 %s347, 8
      %p349 = scmp.lt.s32.totalorder %s22, 1
      %s350 = scalar_select %p349, %s22, 1
      %p351 = scmp.lt.s32.totalorder %s348, 17
      %s352 = scalar_select %p351, %s348, 17
      %s353 = smul.addr %s352, 6
      %s354 = smul.addr %s350, 108
      %s355 = sadd.s32 %s353, %s354
      %s356 = smul.addr %s355, 8
      %s357 = scalar_lea.vmem %s1, %s356
      %p358 = pneg %p85
      %p359 = pneg %p82
      %s360 = sadd.s32 %s23, 1
      %s361 = smul.u32 %s360, 8
      %s362 = sadd.s32 %s361, 1
      %p363 = scmp.lt.s32.totalorder %s22, 1
      %s364 = scalar_select %p363, %s22, 1
      %p365 = scmp.lt.s32.totalorder %s362, 17
      %s366 = scalar_select %p365, %s362, 17
      %s367 = smul.addr %s366, 6
      %s368 = smul.addr %s364, 108
      %s369 = sadd.s32 %s367, %s368
      %s370 = smul.addr %s369, 8
      %s371 = scalar_lea.vmem %s2, %s370
      %p372 = pneg %p119
      %p373 = pneg %p116
      %p374 = pneg %p140
      %p375 = pneg %p137
      %p376 = pneg %p161
      %p377 = pneg %p158
      %p378 = pneg %p182
      %p379 = pneg %p179
      %p380 = pneg %p203
      %p381 = pneg %p200
      %p382 = pneg %p231
      %p383 = pneg %p228
      %s384 = smul.u32 8, %s23
      %p385 = scmp.lt.s32.totalorder %s22, 1
      %s386 = scalar_select %p385, %s22, 1
      %p387 = scmp.lt.s32.totalorder %s384, 15
      %s388 = scalar_select %p387, %s384, 15
      %s389 = smul.addr %s388, 2
      %s390 = smul.addr %s386, 32
      %s391 = sadd.s32 %s389, %s390
      %s392 = smul.addr %s391, 8
      %s393 = scalar_lea.vmem %s7, %s392
      %s394 = smul.u32 8, %s23
      %s395 = ssub.s32 18, %s394
      %p396 = scmp.lt.s32.totalorder %s395, 8
      %s397 = scalar_select %p396, %s395, 8
      %s398 = smul.u32 128, %s397
      %s399 = smul.u32 %s398, 3
      %s400 = smul.u32 %s399, 2
      %p401 = scmp.lt.s32.totalorder %s22, 1
      %s402 = scalar_select %p401, %s22, 1
      %p403 = scmp.lt.s32.totalorder %s394, 17
      %s404 = scalar_select %p403, %s394, 17
      %s405 = smul.addr %s404, 6
      %s406 = smul.addr %s402, 108
      %s407 = sadd.s32 %s405, %s406
      %s408 = smul.addr %s407, 8
      %s409 = scalar_lea.vmem %s0, %s408
      %s410 = smul.u32 8, %s23
      %s411 = ssub.s32 18, %s410
      %p412 = scmp.lt.s32.totalorder %s411, 8
      %s413 = scalar_select %p412, %s411, 8
      %s414 = smul.u32 128, %s413
      %s415 = smul.u32 %s414, 3
      %s416 = smul.u32 %s415, 2
      %s417 = sadd.s32 %s23, 1
      %s418 = smul.u32 %s417, 8
      %p419 = scmp.lt.s32.totalorder %s22, 1
      %s420 = scalar_select %p419, %s22, 1
      %p421 = scmp.lt.s32.totalorder %s418, 17
      %s422 = scalar_select %p421, %s418, 17
      %s423 = smul.addr %s422, 6
      %s424 = smul.addr %s420, 108
      %s425 = sadd.s32 %s423, %s424
      %s426 = smul.addr %s425, 8
      %s427 = scalar_lea.vmem %s1, %s426
      %s428 = sadd.s32 %s23, 1
      %s429 = smul.u32 %s428, 8
      %s430 = sadd.s32 %s23, 1
      %s431 = smul.u32 %s430, 8
      %s432 = sadd.s32 %s431, 1
      %p433 = scmp.lt.s32.totalorder %s22, 1
      %s434 = scalar_select %p433, %s22, 1
      %p435 = scmp.lt.s32.totalorder %s432, 17
      %s436 = scalar_select %p435, %s432, 17
      %s437 = smul.addr %s436, 6
      %s438 = smul.addr %s434, 108
      %s439 = sadd.s32 %s437, %s438
      %s440 = smul.addr %s439, 8
      %s441 = scalar_lea.vmem %s2, %s440
      %s442 = sadd.s32 %s23, 1
      %s443 = smul.u32 %s442, 8
      %s444 = sadd.s32 %s443, 1
      %s445 = smul.u32 8, %s23
      %p446 = scmp.lt.s32.totalorder %s22, 1
      %s447 = scalar_select %p446, %s22, 1
      %p448 = scmp.lt.s32.totalorder %s445, 15
      %s449 = scalar_select %p448, %s445, 15
      %s450 = smul.addr %s449, 2
      %s451 = smul.addr %s447, 32
      %s452 = sadd.s32 %s450, %s451
      %s453 = smul.addr %s452, 8
      %s454 = scalar_lea.vmem %s7, %s453
      %s455 = smul.u32 8, %s23
      %v456 = vld [vmem:[%s409] sm:$0xff]
      %v457 = vld [vmem:[%s409 + $0x8] sm:$0xff]
      %v458 = vld [vmem:[%s409 + $0x10] sm:$0xff]
      %v459 = vld [vmem:[%s409 + $0x18] sm:$0xff]
      %v460 = vld [vmem:[%s409 + $0x20] sm:$0x3]
      %v461 = vld [vmem:[%s409 + $0x28] sm:$0x3]
      %v462 = vld [vmem:[%s409 + $0x30] sm:$0xff]
      %v463 = vld [vmem:[%s409 + $0x38] sm:$0xff]
      %v464 = vld [vmem:[%s409 + $0x40] sm:$0xff]
      %v465 = vld [vmem:[%s409 + $0x48] sm:$0xff]
      %v466 = vld [vmem:[%s409 + $0x50] sm:$0x3]
      %v467 = vld [vmem:[%s409 + $0x58] sm:$0x3]
      %v468 = vld [vmem:[%s409 + $0x60] sm:$0xff]
      %v469 = vld [vmem:[%s409 + $0x68] sm:$0xff]
      %v470 = vld [vmem:[%s409 + $0x70] sm:$0xff]
      %v471 = vld [vmem:[%s409 + $0x78] sm:$0xff]
      %v472 = vld [vmem:[%s409 + $0x80] sm:$0x3]
      %v473 = vld [vmem:[%s409 + $0x88] sm:$0x3]
      %v474 = vld [vmem:[%s409 + $0x90] sm:$0xff]
      %v475 = vld [vmem:[%s409 + $0x98] sm:$0xff]
      %v476 = vld [vmem:[%s409 + $0xa0] sm:$0xff]
      %v477 = vld [vmem:[%s409 + $0xa8] sm:$0xff]
      %v478 = vld [vmem:[%s409 + $0xb0] sm:$0x3]
      %v479 = vld [vmem:[%s409 + $0xb8] sm:$0x3]
      %v480 = vld [vmem:[%s409 + $0xc0] sm:$0xff]
      %v481 = vld [vmem:[%s409 + $0xc8] sm:$0xff]
      %v482 = vld [vmem:[%s409 + $0xd0] sm:$0xff]
      %v483 = vld [vmem:[%s409 + $0xd8] sm:$0xff]
      %v484 = vld [vmem:[%s409 + $0xe0] sm:$0x3]
      %v485 = vld [vmem:[%s409 + $0xe8] sm:$0x3]
      %v486 = vld [vmem:[%s409 + $0xf0] sm:$0xff]
      %v487 = vld [vmem:[%s409 + $0xf8] sm:$0xff]
      %v488 = vld [vmem:[%s409 + $0x100] sm:$0xff]
      %v489 = vld [vmem:[%s409 + $0x108] sm:$0xff]
      %v490 = vld [vmem:[%s409 + $0x110] sm:$0x3]
      %v491 = vld [vmem:[%s409 + $0x118] sm:$0x3]
      %v492 = vld [vmem:[%s409 + $0x120] sm:$0xff]
      %v493 = vld [vmem:[%s409 + $0x128] sm:$0xff]
      %v494 = vld [vmem:[%s409 + $0x130] sm:$0xff]
      %v495 = vld [vmem:[%s409 + $0x138] sm:$0xff]
      %v496 = vld [vmem:[%s409 + $0x140] sm:$0x3]
      %v497 = vld [vmem:[%s409 + $0x148] sm:$0x3]
      %v498 = vld [vmem:[%s409 + $0x150] sm:$0xff]
      %v499 = vld [vmem:[%s409 + $0x158] sm:$0xff]
      %v500 = vld [vmem:[%s409 + $0x160] sm:$0xff]
      %v501 = vld [vmem:[%s409 + $0x168] sm:$0xff]
      %v502 = vld [vmem:[%s409 + $0x170] sm:$0x3]
      %v503 = vld [vmem:[%s409 + $0x178] sm:$0x3]
      %504 = vst [vmem:[#allocation2] sm:$0xff] %v456
      %vm505 = vcmask 130048
      %506 = vst.msk [vmem:[#allocation2 + $0x8] sm:$0xff] %vm505, %v457
      %507 = vst [vmem:[#allocation2 + $0x10] sm:$0xff] %v458
      %508 = vst.msk [vmem:[#allocation2 + $0x18] sm:$0xff] %vm505, %v459
      %509 = vst [vmem:[#allocation2 + $0x20] sm:$0x3] %v460
      %vm510 = vcmask 123904
      %511 = vst.msk [vmem:[#allocation2 + $0x28] sm:$0x3] %vm510, %v461
      %512 = vst [vmem:[#allocation2 + $0x30] sm:$0xff] %v462
      %513 = vst.msk [vmem:[#allocation2 + $0x38] sm:$0xff] %vm505, %v463
      %514 = vst [vmem:[#allocation2 + $0x40] sm:$0xff] %v464
      %515 = vst.msk [vmem:[#allocation2 + $0x48] sm:$0xff] %vm505, %v465
      %516 = vst [vmem:[#allocation2 + $0x50] sm:$0x3] %v466
      %517 = vst.msk [vmem:[#allocation2 + $0x58] sm:$0x3] %vm510, %v467
      %518 = vst [vmem:[#allocation2 + $0x60] sm:$0xff] %v468
      %519 = vst.msk [vmem:[#allocation2 + $0x68] sm:$0xff] %vm505, %v469
      %520 = vst [vmem:[#allocation2 + $0x70] sm:$0xff] %v470
      %521 = vst.msk [vmem:[#allocation2 + $0x78] sm:$0xff] %vm505, %v471
      %522 = vst [vmem:[#allocation2 + $0x80] sm:$0x3] %v472
      %523 = vst.msk [vmem:[#allocation2 + $0x88] sm:$0x3] %vm510, %v473
      %524 = vst [vmem:[#allocation2 + $0x90] sm:$0xff] %v474
      %525 = vst.msk [vmem:[#allocation2 + $0x98] sm:$0xff] %vm505, %v475
      %526 = vst [vmem:[#allocation2 + $0xa0] sm:$0xff] %v476
      %527 = vst.msk [vmem:[#allocation2 + $0xa8] sm:$0xff] %vm505, %v477
      %528 = vst [vmem:[#allocation2 + $0xb0] sm:$0x3] %v478
      %529 = vst.msk [vmem:[#allocation2 + $0xb8] sm:$0x3] %vm510, %v479
      %530 = vst [vmem:[#allocation2 + $0xc0] sm:$0xff] %v480
      %531 = vst.msk [vmem:[#allocation2 + $0xc8] sm:$0xff] %vm505, %v481
      %532 = vst [vmem:[#allocation2 + $0xd0] sm:$0xff] %v482
      %533 = vst.msk [vmem:[#allocation2 + $0xd8] sm:$0xff] %vm505, %v483
      %534 = vst [vmem:[#allocation2 + $0xe0] sm:$0x3] %v484
      %535 = vst.msk [vmem:[#allocation2 + $0xe8] sm:$0x3] %vm510, %v485
      %536 = vst [vmem:[#allocation2 + $0xf0] sm:$0xff] %v486
      %537 = vst.msk [vmem:[#allocation2 + $0xf8] sm:$0xff] %vm505, %v487
      %538 = vst [vmem:[#allocation2 + $0x100] sm:$0xff] %v488
      %539 = vst.msk [vmem:[#allocation2 + $0x108] sm:$0xff] %vm505, %v489
      %540 = vst [vmem:[#allocation2 + $0x110] sm:$0x3] %v490
      %541 = vst.msk [vmem:[#allocation2 + $0x118] sm:$0x3] %vm510, %v491
      %542 = vst [vmem:[#allocation2 + $0x120] sm:$0xff] %v492
      %543 = vst.msk [vmem:[#allocation2 + $0x128] sm:$0xff] %vm505, %v493
      %544 = vst [vmem:[#allocation2 + $0x130] sm:$0xff] %v494
      %545 = vst.msk [vmem:[#allocation2 + $0x138] sm:$0xff] %vm505, %v495
      %546 = vst [vmem:[#allocation2 + $0x140] sm:$0x3] %v496
      %547 = vst.msk [vmem:[#allocation2 + $0x148] sm:$0x3] %vm510, %v497
      %548 = vst [vmem:[#allocation2 + $0x150] sm:$0xff] %v498
      %549 = vst.msk [vmem:[#allocation2 + $0x158] sm:$0xff] %vm505, %v499
      %550 = vst [vmem:[#allocation2 + $0x160] sm:$0xff] %v500
      %551 = vst.msk [vmem:[#allocation2 + $0x168] sm:$0xff] %vm505, %v501
      %552 = vst [vmem:[#allocation2 + $0x170] sm:$0x3] %v502
      %553 = vst.msk [vmem:[#allocation2 + $0x178] sm:$0x3] %vm510, %v503
      %v554 = vld [vmem:[%s427] sm:$0xff]
      %v555 = vld [vmem:[%s427 + $0x8] sm:$0xff]
      %v556 = vld [vmem:[%s427 + $0x10] sm:$0xff]
      %v557 = vld [vmem:[%s427 + $0x18] sm:$0xff]
      %v558 = vld [vmem:[%s427 + $0x20] sm:$0x3]
      %v559 = vld [vmem:[%s427 + $0x28] sm:$0x3]
      %s560 = scalar_lea.vmem [#allocation2], 384
      %561 = vst [vmem:[%s560] sm:$0xff] %v554
      %562 = vst.msk [vmem:[%s560 + $0x8] sm:$0xff] %vm505, %v555
      %563 = vst [vmem:[%s560 + $0x10] sm:$0xff] %v556
      %564 = vst.msk [vmem:[%s560 + $0x18] sm:$0xff] %vm505, %v557
      %565 = vst [vmem:[%s560 + $0x20] sm:$0x3] %v558
      %566 = vst.msk [vmem:[%s560 + $0x28] sm:$0x3] %vm510, %v559
      %v567 = vld [vmem:[%s441] sm:$0xff]
      %v568 = vld [vmem:[%s441 + $0x8] sm:$0xff]
      %v569 = vld [vmem:[%s441 + $0x10] sm:$0xff]
      %v570 = vld [vmem:[%s441 + $0x18] sm:$0xff]
      %v571 = vld [vmem:[%s441 + $0x20] sm:$0x3]
      %v572 = vld [vmem:[%s441 + $0x28] sm:$0x3]
      %s573 = scalar_lea.vmem [#allocation2], 432
      %574 = vst [vmem:[%s573] sm:$0xff] %v567
      %575 = vst.msk [vmem:[%s573 + $0x8] sm:$0xff] %vm505, %v568
      %576 = vst [vmem:[%s573 + $0x10] sm:$0xff] %v569
      %577 = vst.msk [vmem:[%s573 + $0x18] sm:$0xff] %vm505, %v570
      %578 = vst [vmem:[%s573 + $0x20] sm:$0x3] %v571
      %579 = vst.msk [vmem:[%s573 + $0x28] sm:$0x3] %vm510, %v572
      %v580 = vld [vmem:[#allocation2] sm:$0xff]
      %v581 = vld [vmem:[#allocation2 + $0x8] sm:$0xff]
      %v582 = vld [vmem:[#allocation2 + $0x10] sm:$0xff]
      %v583 = vld [vmem:[#allocation2 + $0x18] sm:$0xff]
      %v584 = vld [vmem:[#allocation2 + $0x20] sm:$0x3]
      %v585 = vld [vmem:[#allocation2 + $0x28] sm:$0x3]
      %v586 = vld [vmem:[#allocation2 + $0x30] sm:$0xff]
      %v587 = vld [vmem:[#allocation2 + $0x38] sm:$0xff]
      %v588 = vld [vmem:[#allocation2 + $0x40] sm:$0xff]
      %v589 = vld [vmem:[#allocation2 + $0x48] sm:$0xff]
      %v590 = vld [vmem:[#allocation2 + $0x50] sm:$0x3]
      %v591 = vld [vmem:[#allocation2 + $0x58] sm:$0x3]
      %v592 = vld [vmem:[#allocation2 + $0x60] sm:$0xff]
      %v593 = vld [vmem:[#allocation2 + $0x68] sm:$0xff]
      %v594 = vld [vmem:[#allocation2 + $0x70] sm:$0xff]
      %v595 = vld [vmem:[#allocation2 + $0x78] sm:$0xff]
      %v596 = vld [vmem:[#allocation2 + $0x80] sm:$0x3]
      %v597 = vld [vmem:[#allocation2 + $0x88] sm:$0x3]
      %v598 = vld [vmem:[#allocation2 + $0x90] sm:$0xff]
      %v599 = vld [vmem:[#allocation2 + $0x98] sm:$0xff]
      %v600 = vld [vmem:[#allocation2 + $0xa0] sm:$0xff]
      %v601 = vld [vmem:[#allocation2 + $0xa8] sm:$0xff]
      %v602 = vld [vmem:[#allocation2 + $0xb0] sm:$0x3]
      %v603 = vld [vmem:[#allocation2 + $0xb8] sm:$0x3]
      %v604 = vld [vmem:[#allocation2 + $0xc0] sm:$0xff]
      %v605 = vld [vmem:[#allocation2 + $0xc8] sm:$0xff]
      %v606 = vld [vmem:[#allocation2 + $0xd0] sm:$0xff]
      %v607 = vld [vmem:[#allocation2 + $0xd8] sm:$0xff]
      %v608 = vld [vmem:[#allocation2 + $0xe0] sm:$0x3]
      %v609 = vld [vmem:[#allocation2 + $0xe8] sm:$0x3]
      %v610 = vld [vmem:[#allocation2 + $0xf0] sm:$0xff]
      %v611 = vld [vmem:[#allocation2 + $0xf8] sm:$0xff]
      %v612 = vld [vmem:[#allocation2 + $0x100] sm:$0xff]
      %v613 = vld [vmem:[#allocation2 + $0x108] sm:$0xff]
      %v614 = vld [vmem:[#allocation2 + $0x110] sm:$0x3]
      %v615 = vld [vmem:[#allocation2 + $0x118] sm:$0x3]
      %v616 = vld [vmem:[#allocation2 + $0x120] sm:$0xff]
      %v617 = vld [vmem:[#allocation2 + $0x128] sm:$0xff]
      %v618 = vld [vmem:[#allocation2 + $0x130] sm:$0xff]
      %v619 = vld [vmem:[#allocation2 + $0x138] sm:$0xff]
      %v620 = vld [vmem:[#allocation2 + $0x140] sm:$0x3]
      %v621 = vld [vmem:[#allocation2 + $0x148] sm:$0x3]
      %v622 = vld [vmem:[#allocation2 + $0x150] sm:$0xff]
      %v623 = vld [vmem:[#allocation2 + $0x158] sm:$0xff]
      %v624 = vld [vmem:[#allocation2 + $0x160] sm:$0xff]
      %v625 = vld [vmem:[#allocation2 + $0x168] sm:$0xff]
      %v626 = vld [vmem:[#allocation2 + $0x170] sm:$0x3]
      %v627 = vld [vmem:[#allocation2 + $0x178] sm:$0x3]
      %v628 = vld [vmem:[#allocation2 + $0x180] sm:$0xff]
      %v629 = vld [vmem:[#allocation2 + $0x188] sm:$0xff]
      %v630 = vld [vmem:[#allocation2 + $0x190] sm:$0xff]
      %v631 = vld [vmem:[#allocation2 + $0x198] sm:$0xff]
      %v632 = vld [vmem:[#allocation2 + $0x1a0] sm:$0x3]
      %v633 = vld [vmem:[#allocation2 + $0x1a8] sm:$0x3]
      %v634 = vld [vmem:[#allocation2 + $0x1b0] sm:$0xff]
      %v635 = vld [vmem:[#allocation2 + $0x1b8] sm:$0xff]
      %v636 = vld [vmem:[#allocation2 + $0x1c0] sm:$0xff]
      %v637 = vld [vmem:[#allocation2 + $0x1c8] sm:$0xff]
      %v638 = vld [vmem:[#allocation2 + $0x1d0] sm:$0x3]
      %v639 = vld [vmem:[#allocation2 + $0x1d8] sm:$0x3]
      %v640 = vmax.f32 %v580, 0.0
      %v641 = vmax.f32 %v581, 0.0
      %v642 = vmax.f32 %v582, 0.0
      %v643 = vmax.f32 %v583, 0.0
      %v644 = vmax.f32 %v584, 0.0
      %v645 = vmax.f32 %v585, 0.0
      %v646 = vmax.f32 %v586, 0.0
      %v647 = vmax.f32 %v587, 0.0
      %v648 = vmax.f32 %v588, 0.0
      %v649 = vmax.f32 %v589, 0.0
      %v650 = vmax.f32 %v590, 0.0
      %v651 = vmax.f32 %v591, 0.0
      %v652 = vmax.f32 %v592, 0.0
      %v653 = vmax.f32 %v593, 0.0
      %v654 = vmax.f32 %v594, 0.0
      %v655 = vmax.f32 %v595, 0.0
      %v656 = vmax.f32 %v596, 0.0
      %v657 = vmax.f32 %v597, 0.0
      %v658 = vmax.f32 %v598, 0.0
      %v659 = vmax.f32 %v599, 0.0
      %v660 = vmax.f32 %v600, 0.0
      %v661 = vmax.f32 %v601, 0.0
      %v662 = vmax.f32 %v602, 0.0
      %v663 = vmax.f32 %v603, 0.0
      %v664 = vmax.f32 %v604, 0.0
      %v665 = vmax.f32 %v605, 0.0
      %v666 = vmax.f32 %v606, 0.0
      %v667 = vmax.f32 %v607, 0.0
      %v668 = vmax.f32 %v608, 0.0
      %v669 = vmax.f32 %v609, 0.0
      %v670 = vmax.f32 %v610, 0.0
      %v671 = vmax.f32 %v611, 0.0
      %v672 = vmax.f32 %v612, 0.0
      %v673 = vmax.f32 %v613, 0.0
      %v674 = vmax.f32 %v614, 0.0
      %v675 = vmax.f32 %v615, 0.0
      %v676 = vmax.f32 %v616, 0.0
      %v677 = vmax.f32 %v617, 0.0
      %v678 = vmax.f32 %v618, 0.0
      %v679 = vmax.f32 %v619, 0.0
      %v680 = vmax.f32 %v620, 0.0
      %v681 = vmax.f32 %v621, 0.0
      %v682 = vmax.f32 %v622, 0.0
      %v683 = vmax.f32 %v623, 0.0
      %v684 = vmax.f32 %v624, 0.0
      %v685 = vmax.f32 %v625, 0.0
      %v686 = vmax.f32 %v626, 0.0
      %v687 = vmax.f32 %v627, 0.0
      %v688 = vmax.f32 %v628, 0.0
      %v689 = vmax.f32 %v629, 0.0
      %v690 = vmax.f32 %v630, 0.0
      %v691 = vmax.f32 %v631, 0.0
      %v692 = vmax.f32 %v632, 0.0
      %v693 = vmax.f32 %v633, 0.0
      %v694 = vmax.f32 %v634, 0.0
      %v695 = vmax.f32 %v635, 0.0
      %v696 = vmax.f32 %v636, 0.0
      %v697 = vmax.f32 %v637, 0.0
      %v698 = vmax.f32 %v638, 0.0
      %v699 = vmax.f32 %v639, 0.0
      %v700 = vld [vmem:[%s3] sm:$0xff]
      %v701 = vld [vmem:[%s3 + $0x8] sm:$0xff]
      %v702 = vld [vmem:[%s3 + $0x10] sm:$0xff]
      %v703 = vld [vmem:[%s3 + $0x18] sm:$0xff]
      %v704 = vld [vmem:[%s3 + $0x20] sm:$0xff]
      %v705 = vld [vmem:[%s3 + $0x28] sm:$0xff]
      %v706 = vld [vmem:[%s3 + $0x30] sm:$0xff]
      %v707 = vld [vmem:[%s3 + $0x38] sm:$0xff]
      %v708 = vld [vmem:[%s3 + $0x40] sm:$0xff]
      %v709 = vld [vmem:[%s3 + $0x48] sm:$0xff]
      %v710 = vld [vmem:[%s3 + $0x50] sm:$0xff]
      %v711 = vld [vmem:[%s3 + $0x58] sm:$0xff]
      %v712 = vld [vmem:[%s3 + $0x60] sm:$0xff]
      %v713 = vld [vmem:[%s3 + $0x68] sm:$0xff]
      %v714 = vld [vmem:[%s3 + $0x70] sm:$0xff]
      %v715 = vld [vmem:[%s3 + $0x78] sm:$0xff]
      %v716 = vld [vmem:[%s3 + $0x80] sm:$0xff]
      %v717 = vld [vmem:[%s3 + $0x88] sm:$0xff]
      %v718 = vld [vmem:[%s3 + $0x90] sm:$0xff]
      %v719 = vld [vmem:[%s3 + $0x98] sm:$0xff]
      %v720 = vld [vmem:[%s3 + $0xa0] sm:$0xff]
      %v721 = vld [vmem:[%s3 + $0xa8] sm:$0xff]
      %v722 = vld [vmem:[%s3 + $0xb0] sm:$0xff]
      %v723 = vld [vmem:[%s3 + $0xb8] sm:$0xff]
      %v724 = vld [vmem:[%s3 + $0xc0] sm:$0xff]
      %v725 = vld [vmem:[%s3 + $0xc8] sm:$0xff]
      %v726 = vld [vmem:[%s3 + $0xd0] sm:$0xff]
      %v727 = vld [vmem:[%s3 + $0xd8] sm:$0xff]
      %v728 = vld [vmem:[%s3 + $0xe0] sm:$0xff]
      %v729 = vld [vmem:[%s3 + $0xe8] sm:$0xff]
      %v730 = vld [vmem:[%s3 + $0xf0] sm:$0xff]
      %v731 = vld [vmem:[%s3 + $0xf8] sm:$0xff]
      %v732 = vld [vmem:[%s3 + $0x100] sm:$0xff]
      %v733 = vld [vmem:[%s3 + $0x108] sm:$0xff]
      %v734 = vld [vmem:[%s3 + $0x110] sm:$0xff]
      %v735 = vld [vmem:[%s3 + $0x118] sm:$0xff]
      %vm784 = vcmask 1046528
      %v785 = vrot.slane %v640, 1
      %v786 = vrot.slane %v642, 1
      %v787 = vsel %vm784, %v785, %v786
      %v788 = vrot.slane %v641, 1
      %v789 = vrot.slane %v643, 1
      %v790 = vsel %vm784, %v788, %v789
      %v791 = vrot.slane %v644, 1
      %v792 = vsel %vm784, %v786, %v791
      %v793 = vrot.slane %v645, 1
      %v794 = vsel %vm784, %v789, %v793
      %v795 = vrot.slane %v646, 1
      %v796 = vrot.slane %v648, 1
      %v797 = vsel %vm784, %v795, %v796
      %v798 = vrot.slane %v647, 1
      %v799 = vrot.slane %v649, 1
      %v800 = vsel %vm784, %v798, %v799
      %v801 = vrot.slane %v650, 1
      %v802 = vsel %vm784, %v796, %v801
      %v803 = vrot.slane %v651, 1
      %v804 = vsel %vm784, %v799, %v803
      %v805 = vrot.slane %v652, 1
      %v806 = vrot.slane %v654, 1
      %v807 = vsel %vm784, %v805, %v806
      %v808 = vrot.slane %v653, 1
      %v809 = vrot.slane %v655, 1
      %v810 = vsel %vm784, %v808, %v809
      %v811 = vrot.slane %v656, 1
      %v812 = vsel %vm784, %v806, %v811
      %v813 = vrot.slane %v657, 1
      %v814 = vsel %vm784, %v809, %v813
      %v815 = vrot.slane %v658, 1
      %v816 = vrot.slane %v660, 1
      %v817 = vsel %vm784, %v815, %v816
      %v818 = vrot.slane %v659, 1
      %v819 = vrot.slane %v661, 1
      %v820 = vsel %vm784, %v818, %v819
      %v821 = vrot.slane %v662, 1
      %v822 = vsel %vm784, %v816, %v821
      %v823 = vrot.slane %v663, 1
      %v824 = vsel %vm784, %v819, %v823
      %v825 = vrot.slane %v664, 1
      %v826 = vrot.slane %v666, 1
      %v827 = vsel %vm784, %v825, %v826
      %v828 = vrot.slane %v665, 1
      %v829 = vrot.slane %v667, 1
      %v830 = vsel %vm784, %v828, %v829
      %v831 = vrot.slane %v668, 1
      %v832 = vsel %vm784, %v826, %v831
      %v833 = vrot.slane %v669, 1
      %v834 = vsel %vm784, %v829, %v833
      %v835 = vrot.slane %v670, 1
      %v836 = vrot.slane %v672, 1
      %v837 = vsel %vm784, %v835, %v836
      %v838 = vrot.slane %v671, 1
      %v839 = vrot.slane %v673, 1
      %v840 = vsel %vm784, %v838, %v839
      %v841 = vrot.slane %v674, 1
      %v842 = vsel %vm784, %v836, %v841
      %v843 = vrot.slane %v675, 1
      %v844 = vsel %vm784, %v839, %v843
      %v845 = vrot.slane %v676, 1
      %v846 = vrot.slane %v678, 1
      %v847 = vsel %vm784, %v845, %v846
      %v848 = vrot.slane %v677, 1
      %v849 = vrot.slane %v679, 1
      %v850 = vsel %vm784, %v848, %v849
      %v851 = vrot.slane %v680, 1
      %v852 = vsel %vm784, %v846, %v851
      %v853 = vrot.slane %v681, 1
      %v854 = vsel %vm784, %v849, %v853
      %v855 = vrot.slane %v682, 1
      %v856 = vrot.slane %v684, 1
      %v857 = vsel %vm784, %v855, %v856
      %v858 = vrot.slane %v683, 1
      %v859 = vrot.slane %v685, 1
      %v860 = vsel %vm784, %v858, %v859
      %v861 = vrot.slane %v686, 1
      %v862 = vsel %vm784, %v856, %v861
      %v863 = vrot.slane %v687, 1
      %v864 = vsel %vm784, %v859, %v863
      %s881 = scalar_lea.vmem %s3, 288
      %v882 = vld [vmem:[%s881] sm:$0xff]
      %v883 = vld [vmem:[%s881 + $0x8] sm:$0xff]
      %v884 = vld [vmem:[%s881 + $0x10] sm:$0xff]
      %v885 = vld [vmem:[%s881 + $0x18] sm:$0xff]
      %v886 = vld [vmem:[%s881 + $0x20] sm:$0xff]
      %v887 = vld [vmem:[%s881 + $0x28] sm:$0xff]
      %v888 = vld [vmem:[%s881 + $0x30] sm:$0xff]
      %v889 = vld [vmem:[%s881 + $0x38] sm:$0xff]
      %v890 = vld [vmem:[%s881 + $0x40] sm:$0xff]
      %v891 = vld [vmem:[%s881 + $0x48] sm:$0xff]
      %v892 = vld [vmem:[%s881 + $0x50] sm:$0xff]
      %v893 = vld [vmem:[%s881 + $0x58] sm:$0xff]
      %v894 = vld [vmem:[%s881 + $0x60] sm:$0xff]
      %v895 = vld [vmem:[%s881 + $0x68] sm:$0xff]
      %v896 = vld [vmem:[%s881 + $0x70] sm:$0xff]
      %v897 = vld [vmem:[%s881 + $0x78] sm:$0xff]
      %v898 = vld [vmem:[%s881 + $0x80] sm:$0xff]
      %v899 = vld [vmem:[%s881 + $0x88] sm:$0xff]
      %v900 = vld [vmem:[%s881 + $0x90] sm:$0xff]
      %v901 = vld [vmem:[%s881 + $0x98] sm:$0xff]
      %v902 = vld [vmem:[%s881 + $0xa0] sm:$0xff]
      %v903 = vld [vmem:[%s881 + $0xa8] sm:$0xff]
      %v904 = vld [vmem:[%s881 + $0xb0] sm:$0xff]
      %v905 = vld [vmem:[%s881 + $0xb8] sm:$0xff]
      %v906 = vld [vmem:[%s881 + $0xc0] sm:$0xff]
      %v907 = vld [vmem:[%s881 + $0xc8] sm:$0xff]
      %v908 = vld [vmem:[%s881 + $0xd0] sm:$0xff]
      %v909 = vld [vmem:[%s881 + $0xd8] sm:$0xff]
      %v910 = vld [vmem:[%s881 + $0xe0] sm:$0xff]
      %v911 = vld [vmem:[%s881 + $0xe8] sm:$0xff]
      %v912 = vld [vmem:[%s881 + $0xf0] sm:$0xff]
      %v913 = vld [vmem:[%s881 + $0xf8] sm:$0xff]
      %v914 = vld [vmem:[%s881 + $0x100] sm:$0xff]
      %v915 = vld [vmem:[%s881 + $0x108] sm:$0xff]
      %v916 = vld [vmem:[%s881 + $0x110] sm:$0xff]
      %v917 = vld [vmem:[%s881 + $0x118] sm:$0xff]
      %v918 = vsel %vm505, %v790, 0
      %v920 = vsel %vm505, %v794, 0
      %v922 = vsel %vm505, %v800, 0
      %v924 = vsel %vm505, %v804, 0
      %v926 = vsel %vm505, %v810, 0
      %v928 = vsel %vm505, %v814, 0
      %v930 = vsel %vm505, %v820, 0
      %v932 = vsel %vm505, %v824, 0
      %v934 = vsel %vm505, %v830, 0
      %v936 = vsel %vm505, %v834, 0
      %v938 = vsel %vm505, %v840, 0
      %v940 = vsel %vm505, %v844, 0
      %v942 = vsel %vm505, %v850, 0
      %v944 = vsel %vm505, %v854, 0
      %v946 = vsel %vm505, %v860, 0
      %v948 = vsel %vm505, %v864, 0
      %950 = vmatprep.subr.mxu0 %v913
      %951 = vmatpush1.msra.mxu0 %v912
      %952 = vmatprep.subr.mxu0 %v911
      %953 = vmatpush1.msra.mxu0 %v910
      %954 = vmatprep.subr.mxu0 %v909
      %955 = vmatpush1.msra.mxu0 %v908
      %956 = vmatprep.subr.mxu0 %v907
      %957 = vmatpush1.msra.mxu0 %v906
      %958 = vmatprep.subr.mxu0 %v905
      %959 = vmatpush1.msra.mxu0 %v904
      %960 = vmatprep.subr.mxu0 %v903
      %961 = vmatpush1.msra.mxu0 %v902
      %962 = vmatprep.subr.mxu0 %v901
      %963 = vmatpush1.msra.mxu0 %v900
      %964 = vmatprep.subr.mxu0 %v899
      %965 = vmatpush1.msra.mxu0 %v898
      %966 = vmatprep.subr.mxu0 %v897
      %967 = vmatpush1.msra.mxu0 %v896
      %968 = vmatprep.subr.mxu0 %v895
      %969 = vmatpush1.msra.mxu0 %v894
      %970 = vmatprep.subr.mxu0 %v893
      %971 = vmatpush1.msra.mxu0 %v892
      %972 = vmatprep.subr.mxu0 %v891
      %973 = vmatpush1.msra.mxu0 %v890
      %974 = vmatprep.subr.mxu0 %v889
      %975 = vmatpush1.msra.mxu0 %v888
      %976 = vmatprep.subr.mxu0 %v887
      %977 = vmatpush1.msra.mxu0 %v886
      %978 = vmatprep.subr.mxu0 %v885
      %979 = vmatpush1.msra.mxu0 %v884
      %980 = vmatprep.subr.mxu0 %v883
      %981 = vmatpush1.msra.mxu0 %v882
      %982 = vmatprep.subr.mxu0 0.0
      %983 = vmatpush2.msra.mxu0 0.0
      %984 = vmatprep.subr.mxu0 0.0
      %985 = vmatpush2.msra.mxu0 0.0
      %986 = vmatprep.subr.mxu0 0.0
      %987 = vmatpush2.msra.mxu0 0.0
      %988 = vmatprep.subr.mxu0 0.0
      %989 = vmatpush2.msra.mxu0 0.0
      %990 = vmatprep.subr.mxu0 0.0
      %991 = vmatpush2.msra.mxu0 0.0
      %992 = vmatprep.subr.mxu0 0.0
      %993 = vmatpush2.msra.mxu0 0.0
      %994 = vmatprep.subr.mxu0 0.0
      %995 = vmatpush2.msra.mxu0 0.0
      %996 = vmatprep.subr.mxu0 0.0
      %997 = vmatpush2.msra.mxu0 0.0
      %998 = vmatprep.subr.mxu0 0.0
      %999 = vmatpush2.msra.mxu0 0.0
      %1000 = vmatprep.subr.mxu0 0.0
      %1001 = vmatpush2.msra.mxu0 0.0
      %1002 = vmatprep.subr.mxu0 0.0
      %1003 = vmatpush2.msra.mxu0 0.0
      %1004 = vmatprep.subr.mxu0 0.0
      %1005 = vmatpush2.msra.mxu0 0.0
      %1006 = vmatprep.subr.mxu0 0.0
      %1007 = vmatpush2.msra.mxu0 0.0
      %1008 = vmatprep.subr.mxu0 0.0
      %1009 = vmatpush2.msra.mxu0 0.0
      %1010 = vmatprep.subr.mxu0 %v917
      %1011 = vmatpush2.msra.mxu0 %v916
      %1012 = vmatprep.subr.mxu0 %v915
      %1013 = vmatpush2.msra.mxu0 %v914
      %1014 = vmatprep.mubr.f32.mxu0 %v918
      %1015 = vmatmul.mubr.f32.gmra.mxu0 %v787
      %v1016 = vpop.f32.mrf.mxu0
      %v1017 = vadd.f32 0.0, %v1016
      %v1018 = vpop.f32.mrf.mxu0
      %v1019 = vadd.f32 0.0, %v1018
      %1020 = vmatprep.mubr.f32.mxu0 %v920
      %1021 = vmatmul.mubr.f32.gmra.mxu0 %v792
      %v1022 = vpop.f32.mrf.mxu0
      %v1023 = vadd.f32 0.0, %v1022
      %v1024 = vpop.f32.mrf.mxu0
      %v1025 = vadd.f32 0.0, %v1024
      %1026 = vmatprep.mubr.f32.mxu0 %v922
      %1027 = vmatmul.mubr.f32.gmra.mxu0 %v797
      %v1028 = vpop.f32.mrf.mxu0
      %v1029 = vadd.f32 0.0, %v1028
      %v1030 = vpop.f32.mrf.mxu0
      %v1031 = vadd.f32 0.0, %v1030
      %1032 = vmatprep.mubr.f32.mxu0 %v924
      %1033 = vmatmul.mubr.f32.gmra.mxu0 %v802
      %v1034 = vpop.f32.mrf.mxu0
      %v1035 = vadd.f32 0.0, %v1034
      %v1036 = vpop.f32.mrf.mxu0
      %v1037 = vadd.f32 0.0, %v1036
      %1038 = vmatprep.mubr.f32.mxu0 %v926
      %1039 = vmatmul.mubr.f32.gmra.mxu0 %v807
      %v1040 = vpop.f32.mrf.mxu0
      %v1041 = vadd.f32 0.0, %v1040
      %v1042 = vpop.f32.mrf.mxu0
      %v1043 = vadd.f32 0.0, %v1042
      %1044 = vmatprep.mubr.f32.mxu0 %v928
      %1045 = vmatmul.mubr.f32.gmra.mxu0 %v812
      %v1046 = vpop.f32.mrf.mxu0
      %v1047 = vadd.f32 0.0, %v1046
      %v1048 = vpop.f32.mrf.mxu0
      %v1049 = vadd.f32 0.0, %v1048
      %1050 = vmatprep.mubr.f32.mxu0 %v930
      %1051 = vmatmul.mubr.f32.gmra.mxu0 %v817
      %v1052 = vpop.f32.mrf.mxu0
      %v1053 = vadd.f32 0.0, %v1052
      %v1054 = vpop.f32.mrf.mxu0
      %v1055 = vadd.f32 0.0, %v1054
      %1056 = vmatprep.mubr.f32.mxu0 %v932
      %1057 = vmatmul.mubr.f32.gmra.mxu0 %v822
      %v1058 = vpop.f32.mrf.mxu0
      %v1059 = vadd.f32 0.0, %v1058
      %v1060 = vpop.f32.mrf.mxu0
      %v1061 = vadd.f32 0.0, %v1060
      %1062 = vmatprep.mubr.f32.mxu0 %v934
      %1063 = vmatmul.mubr.f32.gmra.mxu0 %v827
      %v1064 = vpop.f32.mrf.mxu0
      %v1065 = vadd.f32 0.0, %v1064
      %v1066 = vpop.f32.mrf.mxu0
      %v1067 = vadd.f32 0.0, %v1066
      %1068 = vmatprep.mubr.f32.mxu0 %v936
      %1069 = vmatmul.mubr.f32.gmra.mxu0 %v832
      %v1070 = vpop.f32.mrf.mxu0
      %v1071 = vadd.f32 0.0, %v1070
      %v1072 = vpop.f32.mrf.mxu0
      %v1073 = vadd.f32 0.0, %v1072
      %1074 = vmatprep.mubr.f32.mxu0 %v938
      %1075 = vmatmul.mubr.f32.gmra.mxu0 %v837
      %v1076 = vpop.f32.mrf.mxu0
      %v1077 = vadd.f32 0.0, %v1076
      %v1078 = vpop.f32.mrf.mxu0
      %v1079 = vadd.f32 0.0, %v1078
      %1080 = vmatprep.mubr.f32.mxu0 %v940
      %1081 = vmatmul.mubr.f32.gmra.mxu0 %v842
      %v1082 = vpop.f32.mrf.mxu0
      %v1083 = vadd.f32 0.0, %v1082
      %v1084 = vpop.f32.mrf.mxu0
      %v1085 = vadd.f32 0.0, %v1084
      %1086 = vmatprep.mubr.f32.mxu0 %v942
      %1087 = vmatmul.mubr.f32.gmra.mxu0 %v847
      %v1088 = vpop.f32.mrf.mxu0
      %v1089 = vadd.f32 0.0, %v1088
      %v1090 = vpop.f32.mrf.mxu0
      %v1091 = vadd.f32 0.0, %v1090
      %1092 = vmatprep.mubr.f32.mxu0 %v944
      %1093 = vmatmul.mubr.f32.gmra.mxu0 %v852
      %v1094 = vpop.f32.mrf.mxu0
      %v1095 = vadd.f32 0.0, %v1094
      %v1096 = vpop.f32.mrf.mxu0
      %v1097 = vadd.f32 0.0, %v1096
      %1098 = vmatprep.mubr.f32.mxu0 %v946
      %1099 = vmatmul.mubr.f32.gmra.mxu0 %v857
      %v1100 = vpop.f32.mrf.mxu0
      %v1101 = vadd.f32 0.0, %v1100
      %v1102 = vpop.f32.mrf.mxu0
      %v1103 = vadd.f32 0.0, %v1102
      %1104 = vmatprep.mubr.f32.mxu0 %v948
      %1105 = vmatmul.mubr.f32.gmra.mxu0 %v862
      %v1106 = vpop.f32.mrf.mxu0
      %v1107 = vadd.f32 0.0, %v1106
      %v1108 = vpop.f32.mrf.mxu0
      %v1109 = vadd.f32 0.0, %v1108
      %1110 = vdwg.mxu0
      %v1111 = vsel %vm505, %v641, 0
      %v1113 = vsel %vm505, %v643, 0
      %v1115 = vsel %vm505, %v647, 0
      %v1117 = vsel %vm505, %v649, 0
      %v1119 = vsel %vm505, %v653, 0
      %v1121 = vsel %vm505, %v655, 0
      %v1123 = vsel %vm505, %v659, 0
      %v1125 = vsel %vm505, %v661, 0
      %v1127 = vsel %vm505, %v665, 0
      %v1129 = vsel %vm505, %v667, 0
      %v1131 = vsel %vm505, %v671, 0
      %v1133 = vsel %vm505, %v673, 0
      %v1135 = vsel %vm505, %v677, 0
      %v1137 = vsel %vm505, %v679, 0
      %v1139 = vsel %vm505, %v683, 0
      %v1141 = vsel %vm505, %v685, 0
      %1143 = vmatprep.subr.mxu0 %v731
      %1144 = vmatpush1.msra.mxu0 %v730
      %1145 = vmatprep.subr.mxu0 %v729
      %1146 = vmatpush1.msra.mxu0 %v728
      %1147 = vmatprep.subr.mxu0 %v727
      %1148 = vmatpush1.msra.mxu0 %v726
      %1149 = vmatprep.subr.mxu0 %v725
      %1150 = vmatpush1.msra.mxu0 %v724
      %1151 = vmatprep.subr.mxu0 %v723
      %1152 = vmatpush1.msra.mxu0 %v722
      %1153 = vmatprep.subr.mxu0 %v721
      %1154 = vmatpush1.msra.mxu0 %v720
      %1155 = vmatprep.subr.mxu0 %v719
      %1156 = vmatpush1.msra.mxu0 %v718
      %1157 = vmatprep.subr.mxu0 %v717
      %1158 = vmatpush1.msra.mxu0 %v716
      %1159 = vmatprep.subr.mxu0 %v715
      %1160 = vmatpush1.msra.mxu0 %v714
      %1161 = vmatprep.subr.mxu0 %v713
      %1162 = vmatpush1.msra.mxu0 %v712
      %1163 = vmatprep.subr.mxu0 %v711
      %1164 = vmatpush1.msra.mxu0 %v710
      %1165 = vmatprep.subr.mxu0 %v709
      %1166 = vmatpush1.msra.mxu0 %v708
      %1167 = vmatprep.subr.mxu0 %v707
      %1168 = vmatpush1.msra.mxu0 %v706
      %1169 = vmatprep.subr.mxu0 %v705
      %1170 = vmatpush1.msra.mxu0 %v704
      %1171 = vmatprep.subr.mxu0 %v703
      %1172 = vmatpush1.msra.mxu0 %v702
      %1173 = vmatprep.subr.mxu0 %v701
      %1174 = vmatpush1.msra.mxu0 %v700
      %1175 = vmatprep.subr.mxu0 0.0
      %1176 = vmatpush2.msra.mxu0 0.0
      %1177 = vmatprep.subr.mxu0 0.0
      %1178 = vmatpush2.msra.mxu0 0.0
      %1179 = vmatprep.subr.mxu0 0.0
      %1180 = vmatpush2.msra.mxu0 0.0
      %1181 = vmatprep.subr.mxu0 0.0
      %1182 = vmatpush2.msra.mxu0 0.0
      %1183 = vmatprep.subr.mxu0 0.0
      %1184 = vmatpush2.msra.mxu0 0.0
      %1185 = vmatprep.subr.mxu0 0.0
      %1186 = vmatpush2.msra.mxu0 0.0
      %1187 = vmatprep.subr.mxu0 0.0
      %1188 = vmatpush2.msra.mxu0 0.0
      %1189 = vmatprep.subr.mxu0 0.0
      %1190 = vmatpush2.msra.mxu0 0.0
      %1191 = vmatprep.subr.mxu0 0.0
      %1192 = vmatpush2.msra.mxu0 0.0
      %1193 = vmatprep.subr.mxu0 0.0
      %1194 = vmatpush2.msra.mxu0 0.0
      %1195 = vmatprep.subr.mxu0 0.0
      %1196 = vmatpush2.msra.mxu0 0.0
      %1197 = vmatprep.subr.mxu0 0.0
      %1198 = vmatpush2.msra.mxu0 0.0
      %1199 = vmatprep.subr.mxu0 0.0
      %1200 = vmatpush2.msra.mxu0 0.0
      %1201 = vmatprep.subr.mxu0 0.0
      %1202 = vmatpush2.msra.mxu0 0.0
      %1203 = vmatprep.subr.mxu0 %v735
      %1204 = vmatpush2.msra.mxu0 %v734
      %1205 = vmatprep.subr.mxu0 %v733
      %1206 = vmatpush2.msra.mxu0 %v732
      %1207 = vmatprep.mubr.f32.mxu0 %v1111
      %1208 = vmatmul.mubr.f32.gmra.mxu0 %v640
      %v1209 = vpop.f32.mrf.mxu0
      %v1210 = vadd.f32 %v1017, %v1209
      %v1211 = vpop.f32.mrf.mxu0
      %v1212 = vadd.f32 %v1019, %v1211
      %1213 = vmatprep.mubr.f32.mxu0 %v1113
      %1214 = vmatmul.mubr.f32.gmra.mxu0 %v642
      %v1215 = vpop.f32.mrf.mxu0
      %v1216 = vadd.f32 %v1023, %v1215
      %v1217 = vpop.f32.mrf.mxu0
      %v1218 = vadd.f32 %v1025, %v1217
      %1219 = vmatprep.mubr.f32.mxu0 %v1115
      %1220 = vmatmul.mubr.f32.gmra.mxu0 %v646
      %v1221 = vpop.f32.mrf.mxu0
      %v1222 = vadd.f32 %v1029, %v1221
      %v1223 = vpop.f32.mrf.mxu0
      %v1224 = vadd.f32 %v1031, %v1223
      %1225 = vmatprep.mubr.f32.mxu0 %v1117
      %1226 = vmatmul.mubr.f32.gmra.mxu0 %v648
      %v1227 = vpop.f32.mrf.mxu0
      %v1228 = vadd.f32 %v1035, %v1227
      %v1229 = vpop.f32.mrf.mxu0
      %v1230 = vadd.f32 %v1037, %v1229
      %1231 = vmatprep.mubr.f32.mxu0 %v1119
      %1232 = vmatmul.mubr.f32.gmra.mxu0 %v652
      %v1233 = vpop.f32.mrf.mxu0
      %v1234 = vadd.f32 %v1041, %v1233
      %v1235 = vpop.f32.mrf.mxu0
      %v1236 = vadd.f32 %v1043, %v1235
      %1237 = vmatprep.mubr.f32.mxu0 %v1121
      %1238 = vmatmul.mubr.f32.gmra.mxu0 %v654
      %v1239 = vpop.f32.mrf.mxu0
      %v1240 = vadd.f32 %v1047, %v1239
      %v1241 = vpop.f32.mrf.mxu0
      %v1242 = vadd.f32 %v1049, %v1241
      %1243 = vmatprep.mubr.f32.mxu0 %v1123
      %1244 = vmatmul.mubr.f32.gmra.mxu0 %v658
      %v1245 = vpop.f32.mrf.mxu0
      %v1246 = vadd.f32 %v1053, %v1245
      %v1247 = vpop.f32.mrf.mxu0
      %v1248 = vadd.f32 %v1055, %v1247
      %1249 = vmatprep.mubr.f32.mxu0 %v1125
      %1250 = vmatmul.mubr.f32.gmra.mxu0 %v660
      %v1251 = vpop.f32.mrf.mxu0
      %v1252 = vadd.f32 %v1059, %v1251
      %v1253 = vpop.f32.mrf.mxu0
      %v1254 = vadd.f32 %v1061, %v1253
      %1255 = vmatprep.mubr.f32.mxu0 %v1127
      %1256 = vmatmul.mubr.f32.gmra.mxu0 %v664
      %v1257 = vpop.f32.mrf.mxu0
      %v1258 = vadd.f32 %v1065, %v1257
      %v1259 = vpop.f32.mrf.mxu0
      %v1260 = vadd.f32 %v1067, %v1259
      %1261 = vmatprep.mubr.f32.mxu0 %v1129
      %1262 = vmatmul.mubr.f32.gmra.mxu0 %v666
      %v1263 = vpop.f32.mrf.mxu0
      %v1264 = vadd.f32 %v1071, %v1263
      %v1265 = vpop.f32.mrf.mxu0
      %v1266 = vadd.f32 %v1073, %v1265
      %1267 = vmatprep.mubr.f32.mxu0 %v1131
      %1268 = vmatmul.mubr.f32.gmra.mxu0 %v670
      %v1269 = vpop.f32.mrf.mxu0
      %v1270 = vadd.f32 %v1077, %v1269
      %v1271 = vpop.f32.mrf.mxu0
      %v1272 = vadd.f32 %v1079, %v1271
      %1273 = vmatprep.mubr.f32.mxu0 %v1133
      %1274 = vmatmul.mubr.f32.gmra.mxu0 %v672
      %v1275 = vpop.f32.mrf.mxu0
      %v1276 = vadd.f32 %v1083, %v1275
      %v1277 = vpop.f32.mrf.mxu0
      %v1278 = vadd.f32 %v1085, %v1277
      %1279 = vmatprep.mubr.f32.mxu0 %v1135
      %1280 = vmatmul.mubr.f32.gmra.mxu0 %v676
      %v1281 = vpop.f32.mrf.mxu0
      %v1282 = vadd.f32 %v1089, %v1281
      %v1283 = vpop.f32.mrf.mxu0
      %v1284 = vadd.f32 %v1091, %v1283
      %1285 = vmatprep.mubr.f32.mxu0 %v1137
      %1286 = vmatmul.mubr.f32.gmra.mxu0 %v678
      %v1287 = vpop.f32.mrf.mxu0
      %v1288 = vadd.f32 %v1095, %v1287
      %v1289 = vpop.f32.mrf.mxu0
      %v1290 = vadd.f32 %v1097, %v1289
      %1291 = vmatprep.mubr.f32.mxu0 %v1139
      %1292 = vmatmul.mubr.f32.gmra.mxu0 %v682
      %v1293 = vpop.f32.mrf.mxu0
      %v1294 = vadd.f32 %v1101, %v1293
      %v1295 = vpop.f32.mrf.mxu0
      %v1296 = vadd.f32 %v1103, %v1295
      %1297 = vmatprep.mubr.f32.mxu0 %v1141
      %1298 = vmatmul.mubr.f32.gmra.mxu0 %v684
      %v1299 = vpop.f32.mrf.mxu0
      %v1300 = vadd.f32 %v1107, %v1299
      %v1301 = vpop.f32.mrf.mxu0
      %v1302 = vadd.f32 %v1109, %v1301
      %1303 = vdwg.mxu0
      %vm1304 = vcmask 1045504
      %v1305 = vrot.slane %v640, 2
      %v1306 = vrot.slane %v642, 2
      %v1307 = vsel %vm1304, %v1305, %v1306
      %v1308 = vrot.slane %v641, 2
      %v1309 = vrot.slane %v643, 2
      %v1310 = vsel %vm1304, %v1308, %v1309
      %v1311 = vrot.slane %v644, 2
      %v1312 = vsel %vm1304, %v1306, %v1311
      %v1313 = vrot.slane %v645, 2
      %v1314 = vsel %vm1304, %v1309, %v1313
      %v1315 = vrot.slane %v646, 2
      %v1316 = vrot.slane %v648, 2
      %v1317 = vsel %vm1304, %v1315, %v1316
      %v1318 = vrot.slane %v647, 2
      %v1319 = vrot.slane %v649, 2
      %v1320 = vsel %vm1304, %v1318, %v1319
      %v1321 = vrot.slane %v650, 2
      %v1322 = vsel %vm1304, %v1316, %v1321
      %v1323 = vrot.slane %v651, 2
      %v1324 = vsel %vm1304, %v1319, %v1323
      %v1325 = vrot.slane %v652, 2
      %v1326 = vrot.slane %v654, 2
      %v1327 = vsel %vm1304, %v1325, %v1326
      %v1328 = vrot.slane %v653, 2
      %v1329 = vrot.slane %v655, 2
      %v1330 = vsel %vm1304, %v1328, %v1329
      %v1331 = vrot.slane %v656, 2
      %v1332 = vsel %vm1304, %v1326, %v1331
      %v1333 = vrot.slane %v657, 2
      %v1334 = vsel %vm1304, %v1329, %v1333
      %v1335 = vrot.slane %v658, 2
      %v1336 = vrot.slane %v660, 2
      %v1337 = vsel %vm1304, %v1335, %v1336
      %v1338 = vrot.slane %v659, 2
      %v1339 = vrot.slane %v661, 2
      %v1340 = vsel %vm1304, %v1338, %v1339
      %v1341 = vrot.slane %v662, 2
      %v1342 = vsel %vm1304, %v1336, %v1341
      %v1343 = vrot.slane %v663, 2
      %v1344 = vsel %vm1304, %v1339, %v1343
      %v1345 = vrot.slane %v664, 2
      %v1346 = vrot.slane %v666, 2
      %v1347 = vsel %vm1304, %v1345, %v1346
      %v1348 = vrot.slane %v665, 2
      %v1349 = vrot.slane %v667, 2
      %v1350 = vsel %vm1304, %v1348, %v1349
      %v1351 = vrot.slane %v668, 2
      %v1352 = vsel %vm1304, %v1346, %v1351
      %v1353 = vrot.slane %v669, 2
      %v1354 = vsel %vm1304, %v1349, %v1353
      %v1355 = vrot.slane %v670, 2
      %v1356 = vrot.slane %v672, 2
      %v1357 = vsel %vm1304, %v1355, %v1356
      %v1358 = vrot.slane %v671, 2
      %v1359 = vrot.slane %v673, 2
      %v1360 = vsel %vm1304, %v1358, %v1359
      %v1361 = vrot.slane %v674, 2
      %v1362 = vsel %vm1304, %v1356, %v1361
      %v1363 = vrot.slane %v675, 2
      %v1364 = vsel %vm1304, %v1359, %v1363
      %v1365 = vrot.slane %v676, 2
      %v1366 = vrot.slane %v678, 2
      %v1367 = vsel %vm1304, %v1365, %v1366
      %v1368 = vrot.slane %v677, 2
      %v1369 = vrot.slane %v679, 2
      %v1370 = vsel %vm1304, %v1368, %v1369
      %v1371 = vrot.slane %v680, 2
      %v1372 = vsel %vm1304, %v1366, %v1371
      %v1373 = vrot.slane %v681, 2
      %v1374 = vsel %vm1304, %v1369, %v1373
      %v1375 = vrot.slane %v682, 2
      %v1376 = vrot.slane %v684, 2
      %v1377 = vsel %vm1304, %v1375, %v1376
      %v1378 = vrot.slane %v683, 2
      %v1379 = vrot.slane %v685, 2
      %v1380 = vsel %vm1304, %v1378, %v1379
      %v1381 = vrot.slane %v686, 2
      %v1382 = vsel %vm1304, %v1376, %v1381
      %v1383 = vrot.slane %v687, 2
      %v1384 = vsel %vm1304, %v1379, %v1383
      %s1401 = scalar_lea.vmem %s3, 576
      %v1402 = vld [vmem:[%s1401] sm:$0xff]
      %v1403 = vld [vmem:[%s1401 + $0x8] sm:$0xff]
      %v1404 = vld [vmem:[%s1401 + $0x10] sm:$0xff]
      %v1405 = vld [vmem:[%s1401 + $0x18] sm:$0xff]
      %v1406 = vld [vmem:[%s1401 + $0x20] sm:$0xff]
      %v1407 = vld [vmem:[%s1401 + $0x28] sm:$0xff]
      %v1408 = vld [vmem:[%s1401 + $0x30] sm:$0xff]
      %v1409 = vld [vmem:[%s1401 + $0x38] sm:$0xff]
      %v1410 = vld [vmem:[%s1401 + $0x40] sm:$0xff]
      %v1411 = vld [vmem:[%s1401 + $0x48] sm:$0xff]
      %v1412 = vld [vmem:[%s1401 + $0x50] sm:$0xff]
      %v1413 = vld [vmem:[%s1401 + $0x58] sm:$0xff]
      %v1414 = vld [vmem:[%s1401 + $0x60] sm:$0xff]
      %v1415 = vld [vmem:[%s1401 + $0x68] sm:$0xff]
      %v1416 = vld [vmem:[%s1401 + $0x70] sm:$0xff]
      %v1417 = vld [vmem:[%s1401 + $0x78] sm:$0xff]
      %v1418 = vld [vmem:[%s1401 + $0x80] sm:$0xff]
      %v1419 = vld [vmem:[%s1401 + $0x88] sm:$0xff]
      %v1420 = vld [vmem:[%s1401 + $0x90] sm:$0xff]
      %v1421 = vld [vmem:[%s1401 + $0x98] sm:$0xff]
      %v1422 = vld [vmem:[%s1401 + $0xa0] sm:$0xff]
      %v1423 = vld [vmem:[%s1401 + $0xa8] sm:$0xff]
      %v1424 = vld [vmem:[%s1401 + $0xb0] sm:$0xff]
      %v1425 = vld [vmem:[%s1401 + $0xb8] sm:$0xff]
      %v1426 = vld [vmem:[%s1401 + $0xc0] sm:$0xff]
      %v1427 = vld [vmem:[%s1401 + $0xc8] sm:$0xff]
      %v1428 = vld [vmem:[%s1401 + $0xd0] sm:$0xff]
      %v1429 = vld [vmem:[%s1401 + $0xd8] sm:$0xff]
      %v1430 = vld [vmem:[%s1401 + $0xe0] sm:$0xff]
      %v1431 = vld [vmem:[%s1401 + $0xe8] sm:$0xff]
      %v1432 = vld [vmem:[%s1401 + $0xf0] sm:$0xff]
      %v1433 = vld [vmem:[%s1401 + $0xf8] sm:$0xff]
      %v1434 = vld [vmem:[%s1401 + $0x100] sm:$0xff]
      %v1435 = vld [vmem:[%s1401 + $0x108] sm:$0xff]
      %v1436 = vld [vmem:[%s1401 + $0x110] sm:$0xff]
      %v1437 = vld [vmem:[%s1401 + $0x118] sm:$0xff]
      %v1438 = vsel %vm505, %v1310, 0
      %v1440 = vsel %vm505, %v1314, 0
      %v1442 = vsel %vm505, %v1320, 0
      %v1444 = vsel %vm505, %v1324, 0
      %v1446 = vsel %vm505, %v1330, 0
      %v1448 = vsel %vm505, %v1334, 0
      %v1450 = vsel %vm505, %v1340, 0
      %v1452 = vsel %vm505, %v1344, 0
      %v1454 = vsel %vm505, %v1350, 0
      %v1456 = vsel %vm505, %v1354, 0
      %v1458 = vsel %vm505, %v1360, 0
      %v1460 = vsel %vm505, %v1364, 0
      %v1462 = vsel %vm505, %v1370, 0
      %v1464 = vsel %vm505, %v1374, 0
      %v1466 = vsel %vm505, %v1380, 0
      %v1468 = vsel %vm505, %v1384, 0
      %1470 = vmatprep.subr.mxu0 %v1433
      %1471 = vmatpush1.msra.mxu0 %v1432
      %1472 = vmatprep.subr.mxu0 %v1431
      %1473 = vmatpush1.msra.mxu0 %v1430
      %1474 = vmatprep.subr.mxu0 %v1429
      %1475 = vmatpush1.msra.mxu0 %v1428
      %1476 = vmatprep.subr.mxu0 %v1427
      %1477 = vmatpush1.msra.mxu0 %v1426
      %1478 = vmatprep.subr.mxu0 %v1425
      %1479 = vmatpush1.msra.mxu0 %v1424
      %1480 = vmatprep.subr.mxu0 %v1423
      %1481 = vmatpush1.msra.mxu0 %v1422
      %1482 = vmatprep.subr.mxu0 %v1421
      %1483 = vmatpush1.msra.mxu0 %v1420
      %1484 = vmatprep.subr.mxu0 %v1419
      %1485 = vmatpush1.msra.mxu0 %v1418
      %1486 = vmatprep.subr.mxu0 %v1417
      %1487 = vmatpush1.msra.mxu0 %v1416
      %1488 = vmatprep.subr.mxu0 %v1415
      %1489 = vmatpush1.msra.mxu0 %v1414
      %1490 = vmatprep.subr.mxu0 %v1413
      %1491 = vmatpush1.msra.mxu0 %v1412
      %1492 = vmatprep.subr.mxu0 %v1411
      %1493 = vmatpush1.msra.mxu0 %v1410
      %1494 = vmatprep.subr.mxu0 %v1409
      %1495 = vmatpush1.msra.mxu0 %v1408
      %1496 = vmatprep.subr.mxu0 %v1407
      %1497 = vmatpush1.msra.mxu0 %v1406
      %1498 = vmatprep.subr.mxu0 %v1405
      %1499 = vmatpush1.msra.mxu0 %v1404
      %1500 = vmatprep.subr.mxu0 %v1403
      %1501 = vmatpush1.msra.mxu0 %v1402
      %1502 = vmatprep.subr.mxu0 0.0
      %1503 = vmatpush2.msra.mxu0 0.0
      %1504 = vmatprep.subr.mxu0 0.0
      %1505 = vmatpush2.msra.mxu0 0.0
      %1506 = vmatprep.subr.mxu0 0.0
      %1507 = vmatpush2.msra.mxu0 0.0
      %1508 = vmatprep.subr.mxu0 0.0
      %1509 = vmatpush2.msra.mxu0 0.0
      %1510 = vmatprep.subr.mxu0 0.0
      %1511 = vmatpush2.msra.mxu0 0.0
      %1512 = vmatprep.subr.mxu0 0.0
      %1513 = vmatpush2.msra.mxu0 0.0
      %1514 = vmatprep.subr.mxu0 0.0
      %1515 = vmatpush2.msra.mxu0 0.0
      %1516 = vmatprep.subr.mxu0 0.0
      %1517 = vmatpush2.msra.mxu0 0.0
      %1518 = vmatprep.subr.mxu0 0.0
      %1519 = vmatpush2.msra.mxu0 0.0
      %1520 = vmatprep.subr.mxu0 0.0
      %1521 = vmatpush2.msra.mxu0 0.0
      %1522 = vmatprep.subr.mxu0 0.0
      %1523 = vmatpush2.msra.mxu0 0.0
      %1524 = vmatprep.subr.mxu0 0.0
      %1525 = vmatpush2.msra.mxu0 0.0
      %1526 = vmatprep.subr.mxu0 0.0
      %1527 = vmatpush2.msra.mxu0 0.0
      %1528 = vmatprep.subr.mxu0 0.0
      %1529 = vmatpush2.msra.mxu0 0.0
      %1530 = vmatprep.subr.mxu0 %v1437
      %1531 = vmatpush2.msra.mxu0 %v1436
      %1532 = vmatprep.subr.mxu0 %v1435
      %1533 = vmatpush2.msra.mxu0 %v1434
      %1534 = vmatprep.mubr.f32.mxu0 %v1438
      %1535 = vmatmul.mubr.f32.gmra.mxu0 %v1307
      %v1536 = vpop.f32.mrf.mxu0
      %v1537 = vadd.f32 0.0, %v1536
      %v1538 = vpop.f32.mrf.mxu0
      %v1539 = vadd.f32 0.0, %v1538
      %1540 = vmatprep.mubr.f32.mxu0 %v1440
      %1541 = vmatmul.mubr.f32.gmra.mxu0 %v1312
      %v1542 = vpop.f32.mrf.mxu0
      %v1543 = vadd.f32 0.0, %v1542
      %v1544 = vpop.f32.mrf.mxu0
      %v1545 = vadd.f32 0.0, %v1544
      %1546 = vmatprep.mubr.f32.mxu0 %v1442
      %1547 = vmatmul.mubr.f32.gmra.mxu0 %v1317
      %v1548 = vpop.f32.mrf.mxu0
      %v1549 = vadd.f32 0.0, %v1548
      %v1550 = vpop.f32.mrf.mxu0
      %v1551 = vadd.f32 0.0, %v1550
      %1552 = vmatprep.mubr.f32.mxu0 %v1444
      %1553 = vmatmul.mubr.f32.gmra.mxu0 %v1322
      %v1554 = vpop.f32.mrf.mxu0
      %v1555 = vadd.f32 0.0, %v1554
      %v1556 = vpop.f32.mrf.mxu0
      %v1557 = vadd.f32 0.0, %v1556
      %1558 = vmatprep.mubr.f32.mxu0 %v1446
      %1559 = vmatmul.mubr.f32.gmra.mxu0 %v1327
      %v1560 = vpop.f32.mrf.mxu0
      %v1561 = vadd.f32 0.0, %v1560
      %v1562 = vpop.f32.mrf.mxu0
      %v1563 = vadd.f32 0.0, %v1562
      %1564 = vmatprep.mubr.f32.mxu0 %v1448
      %1565 = vmatmul.mubr.f32.gmra.mxu0 %v1332
      %v1566 = vpop.f32.mrf.mxu0
      %v1567 = vadd.f32 0.0, %v1566
      %v1568 = vpop.f32.mrf.mxu0
      %v1569 = vadd.f32 0.0, %v1568
      %1570 = vmatprep.mubr.f32.mxu0 %v1450
      %1571 = vmatmul.mubr.f32.gmra.mxu0 %v1337
      %v1572 = vpop.f32.mrf.mxu0
      %v1573 = vadd.f32 0.0, %v1572
      %v1574 = vpop.f32.mrf.mxu0
      %v1575 = vadd.f32 0.0, %v1574
      %1576 = vmatprep.mubr.f32.mxu0 %v1452
      %1577 = vmatmul.mubr.f32.gmra.mxu0 %v1342
      %v1578 = vpop.f32.mrf.mxu0
      %v1579 = vadd.f32 0.0, %v1578
      %v1580 = vpop.f32.mrf.mxu0
      %v1581 = vadd.f32 0.0, %v1580
      %1582 = vmatprep.mubr.f32.mxu0 %v1454
      %1583 = vmatmul.mubr.f32.gmra.mxu0 %v1347
      %v1584 = vpop.f32.mrf.mxu0
      %v1585 = vadd.f32 0.0, %v1584
      %v1586 = vpop.f32.mrf.mxu0
      %v1587 = vadd.f32 0.0, %v1586
      %1588 = vmatprep.mubr.f32.mxu0 %v1456
      %1589 = vmatmul.mubr.f32.gmra.mxu0 %v1352
      %v1590 = vpop.f32.mrf.mxu0
      %v1591 = vadd.f32 0.0, %v1590
      %v1592 = vpop.f32.mrf.mxu0
      %v1593 = vadd.f32 0.0, %v1592
      %1594 = vmatprep.mubr.f32.mxu0 %v1458
      %1595 = vmatmul.mubr.f32.gmra.mxu0 %v1357
      %v1596 = vpop.f32.mrf.mxu0
      %v1597 = vadd.f32 0.0, %v1596
      %v1598 = vpop.f32.mrf.mxu0
      %v1599 = vadd.f32 0.0, %v1598
      %1600 = vmatprep.mubr.f32.mxu0 %v1460
      %1601 = vmatmul.mubr.f32.gmra.mxu0 %v1362
      %v1602 = vpop.f32.mrf.mxu0
      %v1603 = vadd.f32 0.0, %v1602
      %v1604 = vpop.f32.mrf.mxu0
      %v1605 = vadd.f32 0.0, %v1604
      %1606 = vmatprep.mubr.f32.mxu0 %v1462
      %1607 = vmatmul.mubr.f32.gmra.mxu0 %v1367
      %v1608 = vpop.f32.mrf.mxu0
      %v1609 = vadd.f32 0.0, %v1608
      %v1610 = vpop.f32.mrf.mxu0
      %v1611 = vadd.f32 0.0, %v1610
      %1612 = vmatprep.mubr.f32.mxu0 %v1464
      %1613 = vmatmul.mubr.f32.gmra.mxu0 %v1372
      %v1614 = vpop.f32.mrf.mxu0
      %v1615 = vadd.f32 0.0, %v1614
      %v1616 = vpop.f32.mrf.mxu0
      %v1617 = vadd.f32 0.0, %v1616
      %1618 = vmatprep.mubr.f32.mxu0 %v1466
      %1619 = vmatmul.mubr.f32.gmra.mxu0 %v1377
      %v1620 = vpop.f32.mrf.mxu0
      %v1621 = vadd.f32 0.0, %v1620
      %v1622 = vpop.f32.mrf.mxu0
      %v1623 = vadd.f32 0.0, %v1622
      %1624 = vmatprep.mubr.f32.mxu0 %v1468
      %1625 = vmatmul.mubr.f32.gmra.mxu0 %v1382
      %v1626 = vpop.f32.mrf.mxu0
      %v1627 = vadd.f32 0.0, %v1626
      %v1628 = vpop.f32.mrf.mxu0
      %v1629 = vadd.f32 0.0, %v1628
      %1630 = vdwg.mxu0
      %v1631 = vadd.f32 %v1210, %v1537
      %v1632 = vadd.f32 %v1212, %v1539
      %v1633 = vadd.f32 %v1216, %v1543
      %v1634 = vadd.f32 %v1218, %v1545
      %v1635 = vadd.f32 %v1222, %v1549
      %v1636 = vadd.f32 %v1224, %v1551
      %v1637 = vadd.f32 %v1228, %v1555
      %v1638 = vadd.f32 %v1230, %v1557
      %v1639 = vadd.f32 %v1234, %v1561
      %v1640 = vadd.f32 %v1236, %v1563
      %v1641 = vadd.f32 %v1240, %v1567
      %v1642 = vadd.f32 %v1242, %v1569
      %v1643 = vadd.f32 %v1246, %v1573
      %v1644 = vadd.f32 %v1248, %v1575
      %v1645 = vadd.f32 %v1252, %v1579
      %v1646 = vadd.f32 %v1254, %v1581
      %v1647 = vadd.f32 %v1258, %v1585
      %v1648 = vadd.f32 %v1260, %v1587
      %v1649 = vadd.f32 %v1264, %v1591
      %v1650 = vadd.f32 %v1266, %v1593
      %v1651 = vadd.f32 %v1270, %v1597
      %v1652 = vadd.f32 %v1272, %v1599
      %v1653 = vadd.f32 %v1276, %v1603
      %v1654 = vadd.f32 %v1278, %v1605
      %v1655 = vadd.f32 %v1282, %v1609
      %v1656 = vadd.f32 %v1284, %v1611
      %v1657 = vadd.f32 %v1288, %v1615
      %v1658 = vadd.f32 %v1290, %v1617
      %v1659 = vadd.f32 %v1294, %v1621
      %v1660 = vadd.f32 %v1296, %v1623
      %v1661 = vadd.f32 %v1300, %v1627
      %v1662 = vadd.f32 %v1302, %v1629
      %s1663 = scalar_lea.vmem %s3, 864
      %v1664 = vld [vmem:[%s1663] sm:$0xff]
      %v1665 = vld [vmem:[%s1663 + $0x8] sm:$0xff]
      %v1666 = vld [vmem:[%s1663 + $0x10] sm:$0xff]
      %v1667 = vld [vmem:[%s1663 + $0x18] sm:$0xff]
      %v1668 = vld [vmem:[%s1663 + $0x20] sm:$0xff]
      %v1669 = vld [vmem:[%s1663 + $0x28] sm:$0xff]
      %v1670 = vld [vmem:[%s1663 + $0x30] sm:$0xff]
      %v1671 = vld [vmem:[%s1663 + $0x38] sm:$0xff]
      %v1672 = vld [vmem:[%s1663 + $0x40] sm:$0xff]
      %v1673 = vld [vmem:[%s1663 + $0x48] sm:$0xff]
      %v1674 = vld [vmem:[%s1663 + $0x50] sm:$0xff]
      %v1675 = vld [vmem:[%s1663 + $0x58] sm:$0xff]
      %v1676 = vld [vmem:[%s1663 + $0x60] sm:$0xff]
      %v1677 = vld [vmem:[%s1663 + $0x68] sm:$0xff]
      %v1678 = vld [vmem:[%s1663 + $0x70] sm:$0xff]
      %v1679 = vld [vmem:[%s1663 + $0x78] sm:$0xff]
      %v1680 = vld [vmem:[%s1663 + $0x80] sm:$0xff]
      %v1681 = vld [vmem:[%s1663 + $0x88] sm:$0xff]
      %v1682 = vld [vmem:[%s1663 + $0x90] sm:$0xff]
      %v1683 = vld [vmem:[%s1663 + $0x98] sm:$0xff]
      %v1684 = vld [vmem:[%s1663 + $0xa0] sm:$0xff]
      %v1685 = vld [vmem:[%s1663 + $0xa8] sm:$0xff]
      %v1686 = vld [vmem:[%s1663 + $0xb0] sm:$0xff]
      %v1687 = vld [vmem:[%s1663 + $0xb8] sm:$0xff]
      %v1688 = vld [vmem:[%s1663 + $0xc0] sm:$0xff]
      %v1689 = vld [vmem:[%s1663 + $0xc8] sm:$0xff]
      %v1690 = vld [vmem:[%s1663 + $0xd0] sm:$0xff]
      %v1691 = vld [vmem:[%s1663 + $0xd8] sm:$0xff]
      %v1692 = vld [vmem:[%s1663 + $0xe0] sm:$0xff]
      %v1693 = vld [vmem:[%s1663 + $0xe8] sm:$0xff]
      %v1694 = vld [vmem:[%s1663 + $0xf0] sm:$0xff]
      %v1695 = vld [vmem:[%s1663 + $0xf8] sm:$0xff]
      %v1696 = vld [vmem:[%s1663 + $0x100] sm:$0xff]
      %v1697 = vld [vmem:[%s1663 + $0x108] sm:$0xff]
      %v1698 = vld [vmem:[%s1663 + $0x110] sm:$0xff]
      %v1699 = vld [vmem:[%s1663 + $0x118] sm:$0xff]
      %v1701 = vsel %vm505, %v689, 0
      %v1704 = vsel %vm505, %v691, 0
      %1706 = vmatprep.subr.mxu0 %v1695
      %1707 = vmatpush1.msra.mxu0 %v1694
      %1708 = vmatprep.subr.mxu0 %v1693
      %1709 = vmatpush1.msra.mxu0 %v1692
      %1710 = vmatprep.subr.mxu0 %v1691
      %1711 = vmatpush1.msra.mxu0 %v1690
      %1712 = vmatprep.subr.mxu0 %v1689
      %1713 = vmatpush1.msra.mxu0 %v1688
      %1714 = vmatprep.subr.mxu0 %v1687
      %1715 = vmatpush1.msra.mxu0 %v1686
      %1716 = vmatprep.subr.mxu0 %v1685
      %1717 = vmatpush1.msra.mxu0 %v1684
      %1718 = vmatprep.subr.mxu0 %v1683
      %1719 = vmatpush1.msra.mxu0 %v1682
      %1720 = vmatprep.subr.mxu0 %v1681
      %1721 = vmatpush1.msra.mxu0 %v1680
      %1722 = vmatprep.subr.mxu0 %v1679
      %1723 = vmatpush1.msra.mxu0 %v1678
      %1724 = vmatprep.subr.mxu0 %v1677
      %1725 = vmatpush1.msra.mxu0 %v1676
      %1726 = vmatprep.subr.mxu0 %v1675
      %1727 = vmatpush1.msra.mxu0 %v1674
      %1728 = vmatprep.subr.mxu0 %v1673
      %1729 = vmatpush1.msra.mxu0 %v1672
      %1730 = vmatprep.subr.mxu0 %v1671
      %1731 = vmatpush1.msra.mxu0 %v1670
      %1732 = vmatprep.subr.mxu0 %v1669
      %1733 = vmatpush1.msra.mxu0 %v1668
      %1734 = vmatprep.subr.mxu0 %v1667
      %1735 = vmatpush1.msra.mxu0 %v1666
      %1736 = vmatprep.subr.mxu0 %v1665
      %1737 = vmatpush1.msra.mxu0 %v1664
      %1738 = vmatprep.subr.mxu0 0.0
      %1739 = vmatpush2.msra.mxu0 0.0
      %1740 = vmatprep.subr.mxu0 0.0
      %1741 = vmatpush2.msra.mxu0 0.0
      %1742 = vmatprep.subr.mxu0 0.0
      %1743 = vmatpush2.msra.mxu0 0.0
      %1744 = vmatprep.subr.mxu0 0.0
      %1745 = vmatpush2.msra.mxu0 0.0
      %1746 = vmatprep.subr.mxu0 0.0
      %1747 = vmatpush2.msra.mxu0 0.0
      %1748 = vmatprep.subr.mxu0 0.0
      %1749 = vmatpush2.msra.mxu0 0.0
      %1750 = vmatprep.subr.mxu0 0.0
      %1751 = vmatpush2.msra.mxu0 0.0
      %1752 = vmatprep.subr.mxu0 0.0
      %1753 = vmatpush2.msra.mxu0 0.0
      %1754 = vmatprep.subr.mxu0 0.0
      %1755 = vmatpush2.msra.mxu0 0.0
      %1756 = vmatprep.subr.mxu0 0.0
      %1757 = vmatpush2.msra.mxu0 0.0
      %1758 = vmatprep.subr.mxu0 0.0
      %1759 = vmatpush2.msra.mxu0 0.0
      %1760 = vmatprep.subr.mxu0 0.0
      %1761 = vmatpush2.msra.mxu0 0.0
      %1762 = vmatprep.subr.mxu0 0.0
      %1763 = vmatpush2.msra.mxu0 0.0
      %1764 = vmatprep.subr.mxu0 0.0
      %1765 = vmatpush2.msra.mxu0 0.0
      %1766 = vmatprep.subr.mxu0 %v1699
      %1767 = vmatpush2.msra.mxu0 %v1698
      %1768 = vmatprep.subr.mxu0 %v1697
      %1769 = vmatpush2.msra.mxu0 %v1696
      %1770 = vmatprep.mubr.f32.mxu0 %v1115
      %1771 = vmatmul.mubr.f32.gmra.mxu0 %v646
      %v1772 = vpop.f32.mrf.mxu0
      %v1773 = vadd.f32 0.0, %v1772
      %v1774 = vpop.f32.mrf.mxu0
      %v1775 = vadd.f32 0.0, %v1774
      %1776 = vmatprep.mubr.f32.mxu0 %v1117
      %1777 = vmatmul.mubr.f32.gmra.mxu0 %v648
      %v1778 = vpop.f32.mrf.mxu0
      %v1779 = vadd.f32 0.0, %v1778
      %v1780 = vpop.f32.mrf.mxu0
      %v1781 = vadd.f32 0.0, %v1780
      %1782 = vmatprep.mubr.f32.mxu0 %v1119
      %1783 = vmatmul.mubr.f32.gmra.mxu0 %v652
      %v1784 = vpop.f32.mrf.mxu0
      %v1785 = vadd.f32 0.0, %v1784
      %v1786 = vpop.f32.mrf.mxu0
      %v1787 = vadd.f32 0.0, %v1786
      %1788 = vmatprep.mubr.f32.mxu0 %v1121
      %1789 = vmatmul.mubr.f32.gmra.mxu0 %v654
      %v1790 = vpop.f32.mrf.mxu0
      %v1791 = vadd.f32 0.0, %v1790
      %v1792 = vpop.f32.mrf.mxu0
      %v1793 = vadd.f32 0.0, %v1792
      %1794 = vmatprep.mubr.f32.mxu0 %v1123
      %1795 = vmatmul.mubr.f32.gmra.mxu0 %v658
      %v1796 = vpop.f32.mrf.mxu0
      %v1797 = vadd.f32 0.0, %v1796
      %v1798 = vpop.f32.mrf.mxu0
      %v1799 = vadd.f32 0.0, %v1798
      %1800 = vmatprep.mubr.f32.mxu0 %v1125
      %1801 = vmatmul.mubr.f32.gmra.mxu0 %v660
      %v1802 = vpop.f32.mrf.mxu0
      %v1803 = vadd.f32 0.0, %v1802
      %v1804 = vpop.f32.mrf.mxu0
      %v1805 = vadd.f32 0.0, %v1804
      %1806 = vmatprep.mubr.f32.mxu0 %v1127
      %1807 = vmatmul.mubr.f32.gmra.mxu0 %v664
      %v1808 = vpop.f32.mrf.mxu0
      %v1809 = vadd.f32 0.0, %v1808
      %v1810 = vpop.f32.mrf.mxu0
      %v1811 = vadd.f32 0.0, %v1810
      %1812 = vmatprep.mubr.f32.mxu0 %v1129
      %1813 = vmatmul.mubr.f32.gmra.mxu0 %v666
      %v1814 = vpop.f32.mrf.mxu0
      %v1815 = vadd.f32 0.0, %v1814
      %v1816 = vpop.f32.mrf.mxu0
      %v1817 = vadd.f32 0.0, %v1816
      %1818 = vmatprep.mubr.f32.mxu0 %v1131
      %1819 = vmatmul.mubr.f32.gmra.mxu0 %v670
      %v1820 = vpop.f32.mrf.mxu0
      %v1821 = vadd.f32 0.0, %v1820
      %v1822 = vpop.f32.mrf.mxu0
      %v1823 = vadd.f32 0.0, %v1822
      %1824 = vmatprep.mubr.f32.mxu0 %v1133
      %1825 = vmatmul.mubr.f32.gmra.mxu0 %v672
      %v1826 = vpop.f32.mrf.mxu0
      %v1827 = vadd.f32 0.0, %v1826
      %v1828 = vpop.f32.mrf.mxu0
      %v1829 = vadd.f32 0.0, %v1828
      %1830 = vmatprep.mubr.f32.mxu0 %v1135
      %1831 = vmatmul.mubr.f32.gmra.mxu0 %v676
      %v1832 = vpop.f32.mrf.mxu0
      %v1833 = vadd.f32 0.0, %v1832
      %v1834 = vpop.f32.mrf.mxu0
      %v1835 = vadd.f32 0.0, %v1834
      %1836 = vmatprep.mubr.f32.mxu0 %v1137
      %1837 = vmatmul.mubr.f32.gmra.mxu0 %v678
      %v1838 = vpop.f32.mrf.mxu0
      %v1839 = vadd.f32 0.0, %v1838
      %v1840 = vpop.f32.mrf.mxu0
      %v1841 = vadd.f32 0.0, %v1840
      %1842 = vmatprep.mubr.f32.mxu0 %v1139
      %1843 = vmatmul.mubr.f32.gmra.mxu0 %v682
      %v1844 = vpop.f32.mrf.mxu0
      %v1845 = vadd.f32 0.0, %v1844
      %v1846 = vpop.f32.mrf.mxu0
      %v1847 = vadd.f32 0.0, %v1846
      %1848 = vmatprep.mubr.f32.mxu0 %v1141
      %1849 = vmatmul.mubr.f32.gmra.mxu0 %v684
      %v1850 = vpop.f32.mrf.mxu0
      %v1851 = vadd.f32 0.0, %v1850
      %v1852 = vpop.f32.mrf.mxu0
      %v1853 = vadd.f32 0.0, %v1852
      %1854 = vmatprep.mubr.f32.mxu0 %v1701
      %1855 = vmatmul.mubr.f32.gmra.mxu0 %v688
      %v1856 = vpop.f32.mrf.mxu0
      %v1857 = vadd.f32 0.0, %v1856
      %v1858 = vpop.f32.mrf.mxu0
      %v1859 = vadd.f32 0.0, %v1858
      %1860 = vmatprep.mubr.f32.mxu0 %v1704
      %1861 = vmatmul.mubr.f32.gmra.mxu0 %v690
      %v1862 = vpop.f32.mrf.mxu0
      %v1863 = vadd.f32 0.0, %v1862
      %v1864 = vpop.f32.mrf.mxu0
      %v1865 = vadd.f32 0.0, %v1864
      %1866 = vdwg.mxu0
      %v1867 = vadd.f32 %v1631, %v1773
      %v1868 = vadd.f32 %v1632, %v1775
      %v1869 = vadd.f32 %v1633, %v1779
      %v1870 = vadd.f32 %v1634, %v1781
      %v1871 = vadd.f32 %v1635, %v1785
      %v1872 = vadd.f32 %v1636, %v1787
      %v1873 = vadd.f32 %v1637, %v1791
      %v1874 = vadd.f32 %v1638, %v1793
      %v1875 = vadd.f32 %v1639, %v1797
      %v1876 = vadd.f32 %v1640, %v1799
      %v1877 = vadd.f32 %v1641, %v1803
      %v1878 = vadd.f32 %v1642, %v1805
      %v1879 = vadd.f32 %v1643, %v1809
      %v1880 = vadd.f32 %v1644, %v1811
      %v1881 = vadd.f32 %v1645, %v1815
      %v1882 = vadd.f32 %v1646, %v1817
      %v1883 = vadd.f32 %v1647, %v1821
      %v1884 = vadd.f32 %v1648, %v1823
      %v1885 = vadd.f32 %v1649, %v1827
      %v1886 = vadd.f32 %v1650, %v1829
      %v1887 = vadd.f32 %v1651, %v1833
      %v1888 = vadd.f32 %v1652, %v1835
      %v1889 = vadd.f32 %v1653, %v1839
      %v1890 = vadd.f32 %v1654, %v1841
      %v1891 = vadd.f32 %v1655, %v1845
      %v1892 = vadd.f32 %v1656, %v1847
      %v1893 = vadd.f32 %v1657, %v1851
      %v1894 = vadd.f32 %v1658, %v1853
      %v1895 = vadd.f32 %v1659, %v1857
      %v1896 = vadd.f32 %v1660, %v1859
      %v1897 = vadd.f32 %v1661, %v1863
      %v1898 = vadd.f32 %v1662, %v1865
      %v1903 = vrot.slane %v688, 1
      %v1904 = vrot.slane %v690, 1
      %v1905 = vsel %vm784, %v1903, %v1904
      %v1906 = vrot.slane %v689, 1
      %v1907 = vrot.slane %v691, 1
      %v1908 = vsel %vm784, %v1906, %v1907
      %v1909 = vrot.slane %v692, 1
      %v1910 = vsel %vm784, %v1904, %v1909
      %v1911 = vrot.slane %v693, 1
      %v1912 = vsel %vm784, %v1907, %v1911
      %s1915 = scalar_lea.vmem %s3, 1152
      %v1916 = vld [vmem:[%s1915] sm:$0xff]
      %v1917 = vld [vmem:[%s1915 + $0x8] sm:$0xff]
      %v1918 = vld [vmem:[%s1915 + $0x10] sm:$0xff]
      %v1919 = vld [vmem:[%s1915 + $0x18] sm:$0xff]
      %v1920 = vld [vmem:[%s1915 + $0x20] sm:$0xff]
      %v1921 = vld [vmem:[%s1915 + $0x28] sm:$0xff]
      %v1922 = vld [vmem:[%s1915 + $0x30] sm:$0xff]
      %v1923 = vld [vmem:[%s1915 + $0x38] sm:$0xff]
      %v1924 = vld [vmem:[%s1915 + $0x40] sm:$0xff]
      %v1925 = vld [vmem:[%s1915 + $0x48] sm:$0xff]
      %v1926 = vld [vmem:[%s1915 + $0x50] sm:$0xff]
      %v1927 = vld [vmem:[%s1915 + $0x58] sm:$0xff]
      %v1928 = vld [vmem:[%s1915 + $0x60] sm:$0xff]
      %v1929 = vld [vmem:[%s1915 + $0x68] sm:$0xff]
      %v1930 = vld [vmem:[%s1915 + $0x70] sm:$0xff]
      %v1931 = vld [vmem:[%s1915 + $0x78] sm:$0xff]
      %v1932 = vld [vmem:[%s1915 + $0x80] sm:$0xff]
      %v1933 = vld [vmem:[%s1915 + $0x88] sm:$0xff]
      %v1934 = vld [vmem:[%s1915 + $0x90] sm:$0xff]
      %v1935 = vld [vmem:[%s1915 + $0x98] sm:$0xff]
      %v1936 = vld [vmem:[%s1915 + $0xa0] sm:$0xff]
      %v1937 = vld [vmem:[%s1915 + $0xa8] sm:$0xff]
      %v1938 = vld [vmem:[%s1915 + $0xb0] sm:$0xff]
      %v1939 = vld [vmem:[%s1915 + $0xb8] sm:$0xff]
      %v1940 = vld [vmem:[%s1915 + $0xc0] sm:$0xff]
      %v1941 = vld [vmem:[%s1915 + $0xc8] sm:$0xff]
      %v1942 = vld [vmem:[%s1915 + $0xd0] sm:$0xff]
      %v1943 = vld [vmem:[%s1915 + $0xd8] sm:$0xff]
      %v1944 = vld [vmem:[%s1915 + $0xe0] sm:$0xff]
      %v1945 = vld [vmem:[%s1915 + $0xe8] sm:$0xff]
      %v1946 = vld [vmem:[%s1915 + $0xf0] sm:$0xff]
      %v1947 = vld [vmem:[%s1915 + $0xf8] sm:$0xff]
      %v1948 = vld [vmem:[%s1915 + $0x100] sm:$0xff]
      %v1949 = vld [vmem:[%s1915 + $0x108] sm:$0xff]
      %v1950 = vld [vmem:[%s1915 + $0x110] sm:$0xff]
      %v1951 = vld [vmem:[%s1915 + $0x118] sm:$0xff]
      %v1952 = vsel %vm505, %v1908, 0
      %v1954 = vsel %vm505, %v1912, 0
      %1956 = vmatprep.subr.mxu0 %v1947
      %1957 = vmatpush1.msra.mxu0 %v1946
      %1958 = vmatprep.subr.mxu0 %v1945
      %1959 = vmatpush1.msra.mxu0 %v1944
      %1960 = vmatprep.subr.mxu0 %v1943
      %1961 = vmatpush1.msra.mxu0 %v1942
      %1962 = vmatprep.subr.mxu0 %v1941
      %1963 = vmatpush1.msra.mxu0 %v1940
      %1964 = vmatprep.subr.mxu0 %v1939
      %1965 = vmatpush1.msra.mxu0 %v1938
      %1966 = vmatprep.subr.mxu0 %v1937
      %1967 = vmatpush1.msra.mxu0 %v1936
      %1968 = vmatprep.subr.mxu0 %v1935
      %1969 = vmatpush1.msra.mxu0 %v1934
      %1970 = vmatprep.subr.mxu0 %v1933
      %1971 = vmatpush1.msra.mxu0 %v1932
      %1972 = vmatprep.subr.mxu0 %v1931
      %1973 = vmatpush1.msra.mxu0 %v1930
      %1974 = vmatprep.subr.mxu0 %v1929
      %1975 = vmatpush1.msra.mxu0 %v1928
      %1976 = vmatprep.subr.mxu0 %v1927
      %1977 = vmatpush1.msra.mxu0 %v1926
      %1978 = vmatprep.subr.mxu0 %v1925
      %1979 = vmatpush1.msra.mxu0 %v1924
      %1980 = vmatprep.subr.mxu0 %v1923
      %1981 = vmatpush1.msra.mxu0 %v1922
      %1982 = vmatprep.subr.mxu0 %v1921
      %1983 = vmatpush1.msra.mxu0 %v1920
      %1984 = vmatprep.subr.mxu0 %v1919
      %1985 = vmatpush1.msra.mxu0 %v1918
      %1986 = vmatprep.subr.mxu0 %v1917
      %1987 = vmatpush1.msra.mxu0 %v1916
      %1988 = vmatprep.subr.mxu0 0.0
      %1989 = vmatpush2.msra.mxu0 0.0
      %1990 = vmatprep.subr.mxu0 0.0
      %1991 = vmatpush2.msra.mxu0 0.0
      %1992 = vmatprep.subr.mxu0 0.0
      %1993 = vmatpush2.msra.mxu0 0.0
      %1994 = vmatprep.subr.mxu0 0.0
      %1995 = vmatpush2.msra.mxu0 0.0
      %1996 = vmatprep.subr.mxu0 0.0
      %1997 = vmatpush2.msra.mxu0 0.0
      %1998 = vmatprep.subr.mxu0 0.0
      %1999 = vmatpush2.msra.mxu0 0.0
      %2000 = vmatprep.subr.mxu0 0.0
      %2001 = vmatpush2.msra.mxu0 0.0
      %2002 = vmatprep.subr.mxu0 0.0
      %2003 = vmatpush2.msra.mxu0 0.0
      %2004 = vmatprep.subr.mxu0 0.0
      %2005 = vmatpush2.msra.mxu0 0.0
      %2006 = vmatprep.subr.mxu0 0.0
      %2007 = vmatpush2.msra.mxu0 0.0
      %2008 = vmatprep.subr.mxu0 0.0
      %2009 = vmatpush2.msra.mxu0 0.0
      %2010 = vmatprep.subr.mxu0 0.0
      %2011 = vmatpush2.msra.mxu0 0.0
      %2012 = vmatprep.subr.mxu0 0.0
      %2013 = vmatpush2.msra.mxu0 0.0
      %2014 = vmatprep.subr.mxu0 0.0
      %2015 = vmatpush2.msra.mxu0 0.0
      %2016 = vmatprep.subr.mxu0 %v1951
      %2017 = vmatpush2.msra.mxu0 %v1950
      %2018 = vmatprep.subr.mxu0 %v1949
      %2019 = vmatpush2.msra.mxu0 %v1948
      %2020 = vmatprep.mubr.f32.mxu0 %v922
      %2021 = vmatmul.mubr.f32.gmra.mxu0 %v797
      %v2022 = vpop.f32.mrf.mxu0
      %v2023 = vadd.f32 0.0, %v2022
      %v2024 = vpop.f32.mrf.mxu0
      %v2025 = vadd.f32 0.0, %v2024
      %2026 = vmatprep.mubr.f32.mxu0 %v924
      %2027 = vmatmul.mubr.f32.gmra.mxu0 %v802
      %v2028 = vpop.f32.mrf.mxu0
      %v2029 = vadd.f32 0.0, %v2028
      %v2030 = vpop.f32.mrf.mxu0
      %v2031 = vadd.f32 0.0, %v2030
      %2032 = vmatprep.mubr.f32.mxu0 %v926
      %2033 = vmatmul.mubr.f32.gmra.mxu0 %v807
      %v2034 = vpop.f32.mrf.mxu0
      %v2035 = vadd.f32 0.0, %v2034
      %v2036 = vpop.f32.mrf.mxu0
      %v2037 = vadd.f32 0.0, %v2036
      %2038 = vmatprep.mubr.f32.mxu0 %v928
      %2039 = vmatmul.mubr.f32.gmra.mxu0 %v812
      %v2040 = vpop.f32.mrf.mxu0
      %v2041 = vadd.f32 0.0, %v2040
      %v2042 = vpop.f32.mrf.mxu0
      %v2043 = vadd.f32 0.0, %v2042
      %2044 = vmatprep.mubr.f32.mxu0 %v930
      %2045 = vmatmul.mubr.f32.gmra.mxu0 %v817
      %v2046 = vpop.f32.mrf.mxu0
      %v2047 = vadd.f32 0.0, %v2046
      %v2048 = vpop.f32.mrf.mxu0
      %v2049 = vadd.f32 0.0, %v2048
      %2050 = vmatprep.mubr.f32.mxu0 %v932
      %2051 = vmatmul.mubr.f32.gmra.mxu0 %v822
      %v2052 = vpop.f32.mrf.mxu0
      %v2053 = vadd.f32 0.0, %v2052
      %v2054 = vpop.f32.mrf.mxu0
      %v2055 = vadd.f32 0.0, %v2054
      %2056 = vmatprep.mubr.f32.mxu0 %v934
      %2057 = vmatmul.mubr.f32.gmra.mxu0 %v827
      %v2058 = vpop.f32.mrf.mxu0
      %v2059 = vadd.f32 0.0, %v2058
      %v2060 = vpop.f32.mrf.mxu0
      %v2061 = vadd.f32 0.0, %v2060
      %2062 = vmatprep.mubr.f32.mxu0 %v936
      %2063 = vmatmul.mubr.f32.gmra.mxu0 %v832
      %v2064 = vpop.f32.mrf.mxu0
      %v2065 = vadd.f32 0.0, %v2064
      %v2066 = vpop.f32.mrf.mxu0
      %v2067 = vadd.f32 0.0, %v2066
      %2068 = vmatprep.mubr.f32.mxu0 %v938
      %2069 = vmatmul.mubr.f32.gmra.mxu0 %v837
      %v2070 = vpop.f32.mrf.mxu0
      %v2071 = vadd.f32 0.0, %v2070
      %v2072 = vpop.f32.mrf.mxu0
      %v2073 = vadd.f32 0.0, %v2072
      %2074 = vmatprep.mubr.f32.mxu0 %v940
      %2075 = vmatmul.mubr.f32.gmra.mxu0 %v842
      %v2076 = vpop.f32.mrf.mxu0
      %v2077 = vadd.f32 0.0, %v2076
      %v2078 = vpop.f32.mrf.mxu0
      %v2079 = vadd.f32 0.0, %v2078
      %2080 = vmatprep.mubr.f32.mxu0 %v942
      %2081 = vmatmul.mubr.f32.gmra.mxu0 %v847
      %v2082 = vpop.f32.mrf.mxu0
      %v2083 = vadd.f32 0.0, %v2082
      %v2084 = vpop.f32.mrf.mxu0
      %v2085 = vadd.f32 0.0, %v2084
      %2086 = vmatprep.mubr.f32.mxu0 %v944
      %2087 = vmatmul.mubr.f32.gmra.mxu0 %v852
      %v2088 = vpop.f32.mrf.mxu0
      %v2089 = vadd.f32 0.0, %v2088
      %v2090 = vpop.f32.mrf.mxu0
      %v2091 = vadd.f32 0.0, %v2090
      %2092 = vmatprep.mubr.f32.mxu0 %v946
      %2093 = vmatmul.mubr.f32.gmra.mxu0 %v857
      %v2094 = vpop.f32.mrf.mxu0
      %v2095 = vadd.f32 0.0, %v2094
      %v2096 = vpop.f32.mrf.mxu0
      %v2097 = vadd.f32 0.0, %v2096
      %2098 = vmatprep.mubr.f32.mxu0 %v948
      %2099 = vmatmul.mubr.f32.gmra.mxu0 %v862
      %v2100 = vpop.f32.mrf.mxu0
      %v2101 = vadd.f32 0.0, %v2100
      %v2102 = vpop.f32.mrf.mxu0
      %v2103 = vadd.f32 0.0, %v2102
      %2104 = vmatprep.mubr.f32.mxu0 %v1952
      %2105 = vmatmul.mubr.f32.gmra.mxu0 %v1905
      %v2106 = vpop.f32.mrf.mxu0
      %v2107 = vadd.f32 0.0, %v2106
      %v2108 = vpop.f32.mrf.mxu0
      %v2109 = vadd.f32 0.0, %v2108
      %2110 = vmatprep.mubr.f32.mxu0 %v1954
      %2111 = vmatmul.mubr.f32.gmra.mxu0 %v1910
      %v2112 = vpop.f32.mrf.mxu0
      %v2113 = vadd.f32 0.0, %v2112
      %v2114 = vpop.f32.mrf.mxu0
      %v2115 = vadd.f32 0.0, %v2114
      %2116 = vdwg.mxu0
      %v2117 = vadd.f32 %v1867, %v2023
      %v2118 = vadd.f32 %v1868, %v2025
      %v2119 = vadd.f32 %v1869, %v2029
      %v2120 = vadd.f32 %v1870, %v2031
      %v2121 = vadd.f32 %v1871, %v2035
      %v2122 = vadd.f32 %v1872, %v2037
      %v2123 = vadd.f32 %v1873, %v2041
      %v2124 = vadd.f32 %v1874, %v2043
      %v2125 = vadd.f32 %v1875, %v2047
      %v2126 = vadd.f32 %v1876, %v2049
      %v2127 = vadd.f32 %v1877, %v2053
      %v2128 = vadd.f32 %v1878, %v2055
      %v2129 = vadd.f32 %v1879, %v2059
      %v2130 = vadd.f32 %v1880, %v2061
      %v2131 = vadd.f32 %v1881, %v2065
      %v2132 = vadd.f32 %v1882, %v2067
      %v2133 = vadd.f32 %v1883, %v2071
      %v2134 = vadd.f32 %v1884, %v2073
      %v2135 = vadd.f32 %v1885, %v2077
      %v2136 = vadd.f32 %v1886, %v2079
      %v2137 = vadd.f32 %v1887, %v2083
      %v2138 = vadd.f32 %v1888, %v2085
      %v2139 = vadd.f32 %v1889, %v2089
      %v2140 = vadd.f32 %v1890, %v2091
      %v2141 = vadd.f32 %v1891, %v2095
      %v2142 = vadd.f32 %v1892, %v2097
      %v2143 = vadd.f32 %v1893, %v2101
      %v2144 = vadd.f32 %v1894, %v2103
      %v2145 = vadd.f32 %v1895, %v2107
      %v2146 = vadd.f32 %v1896, %v2109
      %v2147 = vadd.f32 %v1897, %v2113
      %v2148 = vadd.f32 %v1898, %v2115
      %v2149 = vrot.slane %v688, 2
      %v2150 = vrot.slane %v690, 2
      %v2151 = vsel %vm1304, %v2149, %v2150
      %v2152 = vrot.slane %v689, 2
      %v2153 = vrot.slane %v691, 2
      %v2154 = vsel %vm1304, %v2152, %v2153
      %v2155 = vrot.slane %v692, 2
      %v2156 = vsel %vm1304, %v2150, %v2155
      %v2157 = vrot.slane %v693, 2
      %v2158 = vsel %vm1304, %v2153, %v2157
      %s2161 = scalar_lea.vmem %s3, 1440
      %v2162 = vld [vmem:[%s2161] sm:$0xff]
      %v2163 = vld [vmem:[%s2161 + $0x8] sm:$0xff]
      %v2164 = vld [vmem:[%s2161 + $0x10] sm:$0xff]
      %v2165 = vld [vmem:[%s2161 + $0x18] sm:$0xff]
      %v2166 = vld [vmem:[%s2161 + $0x20] sm:$0xff]
      %v2167 = vld [vmem:[%s2161 + $0x28] sm:$0xff]
      %v2168 = vld [vmem:[%s2161 + $0x30] sm:$0xff]
      %v2169 = vld [vmem:[%s2161 + $0x38] sm:$0xff]
      %v2170 = vld [vmem:[%s2161 + $0x40] sm:$0xff]
      %v2171 = vld [vmem:[%s2161 + $0x48] sm:$0xff]
      %v2172 = vld [vmem:[%s2161 + $0x50] sm:$0xff]
      %v2173 = vld [vmem:[%s2161 + $0x58] sm:$0xff]
      %v2174 = vld [vmem:[%s2161 + $0x60] sm:$0xff]
      %v2175 = vld [vmem:[%s2161 + $0x68] sm:$0xff]
      %v2176 = vld [vmem:[%s2161 + $0x70] sm:$0xff]
      %v2177 = vld [vmem:[%s2161 + $0x78] sm:$0xff]
      %v2178 = vld [vmem:[%s2161 + $0x80] sm:$0xff]
      %v2179 = vld [vmem:[%s2161 + $0x88] sm:$0xff]
      %v2180 = vld [vmem:[%s2161 + $0x90] sm:$0xff]
      %v2181 = vld [vmem:[%s2161 + $0x98] sm:$0xff]
      %v2182 = vld [vmem:[%s2161 + $0xa0] sm:$0xff]
      %v2183 = vld [vmem:[%s2161 + $0xa8] sm:$0xff]
      %v2184 = vld [vmem:[%s2161 + $0xb0] sm:$0xff]
      %v2185 = vld [vmem:[%s2161 + $0xb8] sm:$0xff]
      %v2186 = vld [vmem:[%s2161 + $0xc0] sm:$0xff]
      %v2187 = vld [vmem:[%s2161 + $0xc8] sm:$0xff]
      %v2188 = vld [vmem:[%s2161 + $0xd0] sm:$0xff]
      %v2189 = vld [vmem:[%s2161 + $0xd8] sm:$0xff]
      %v2190 = vld [vmem:[%s2161 + $0xe0] sm:$0xff]
      %v2191 = vld [vmem:[%s2161 + $0xe8] sm:$0xff]
      %v2192 = vld [vmem:[%s2161 + $0xf0] sm:$0xff]
      %v2193 = vld [vmem:[%s2161 + $0xf8] sm:$0xff]
      %v2194 = vld [vmem:[%s2161 + $0x100] sm:$0xff]
      %v2195 = vld [vmem:[%s2161 + $0x108] sm:$0xff]
      %v2196 = vld [vmem:[%s2161 + $0x110] sm:$0xff]
      %v2197 = vld [vmem:[%s2161 + $0x118] sm:$0xff]
      %v2198 = vsel %vm505, %v2154, 0
      %v2200 = vsel %vm505, %v2158, 0
      %2202 = vmatprep.subr.mxu0 %v2193
      %2203 = vmatpush1.msra.mxu0 %v2192
      %2204 = vmatprep.subr.mxu0 %v2191
      %2205 = vmatpush1.msra.mxu0 %v2190
      %2206 = vmatprep.subr.mxu0 %v2189
      %2207 = vmatpush1.msra.mxu0 %v2188
      %2208 = vmatprep.subr.mxu0 %v2187
      %2209 = vmatpush1.msra.mxu0 %v2186
      %2210 = vmatprep.subr.mxu0 %v2185
      %2211 = vmatpush1.msra.mxu0 %v2184
      %2212 = vmatprep.subr.mxu0 %v2183
      %2213 = vmatpush1.msra.mxu0 %v2182
      %2214 = vmatprep.subr.mxu0 %v2181
      %2215 = vmatpush1.msra.mxu0 %v2180
      %2216 = vmatprep.subr.mxu0 %v2179
      %2217 = vmatpush1.msra.mxu0 %v2178
      %2218 = vmatprep.subr.mxu0 %v2177
      %2219 = vmatpush1.msra.mxu0 %v2176
      %2220 = vmatprep.subr.mxu0 %v2175
      %2221 = vmatpush1.msra.mxu0 %v2174
      %2222 = vmatprep.subr.mxu0 %v2173
      %2223 = vmatpush1.msra.mxu0 %v2172
      %2224 = vmatprep.subr.mxu0 %v2171
      %2225 = vmatpush1.msra.mxu0 %v2170
      %2226 = vmatprep.subr.mxu0 %v2169
      %2227 = vmatpush1.msra.mxu0 %v2168
      %2228 = vmatprep.subr.mxu0 %v2167
      %2229 = vmatpush1.msra.mxu0 %v2166
      %2230 = vmatprep.subr.mxu0 %v2165
      %2231 = vmatpush1.msra.mxu0 %v2164
      %2232 = vmatprep.subr.mxu0 %v2163
      %2233 = vmatpush1.msra.mxu0 %v2162
      %2234 = vmatprep.subr.mxu0 0.0
      %2235 = vmatpush2.msra.mxu0 0.0
      %2236 = vmatprep.subr.mxu0 0.0
      %2237 = vmatpush2.msra.mxu0 0.0
      %2238 = vmatprep.subr.mxu0 0.0
      %2239 = vmatpush2.msra.mxu0 0.0
      %2240 = vmatprep.subr.mxu0 0.0
      %2241 = vmatpush2.msra.mxu0 0.0
      %2242 = vmatprep.subr.mxu0 0.0
      %2243 = vmatpush2.msra.mxu0 0.0
      %2244 = vmatprep.subr.mxu0 0.0
      %2245 = vmatpush2.msra.mxu0 0.0
      %2246 = vmatprep.subr.mxu0 0.0
      %2247 = vmatpush2.msra.mxu0 0.0
      %2248 = vmatprep.subr.mxu0 0.0
      %2249 = vmatpush2.msra.mxu0 0.0
      %2250 = vmatprep.subr.mxu0 0.0
      %2251 = vmatpush2.msra.mxu0 0.0
      %2252 = vmatprep.subr.mxu0 0.0
      %2253 = vmatpush2.msra.mxu0 0.0
      %2254 = vmatprep.subr.mxu0 0.0
      %2255 = vmatpush2.msra.mxu0 0.0
      %2256 = vmatprep.subr.mxu0 0.0
      %2257 = vmatpush2.msra.mxu0 0.0
      %2258 = vmatprep.subr.mxu0 0.0
      %2259 = vmatpush2.msra.mxu0 0.0
      %2260 = vmatprep.subr.mxu0 0.0
      %2261 = vmatpush2.msra.mxu0 0.0
      %2262 = vmatprep.subr.mxu0 %v2197
      %2263 = vmatpush2.msra.mxu0 %v2196
      %2264 = vmatprep.subr.mxu0 %v2195
      %2265 = vmatpush2.msra.mxu0 %v2194
      %2266 = vmatprep.mubr.f32.mxu0 %v1442
      %2267 = vmatmul.mubr.f32.gmra.mxu0 %v1317
      %v2268 = vpop.f32.mrf.mxu0
      %v2269 = vadd.f32 0.0, %v2268
      %v2270 = vpop.f32.mrf.mxu0
      %v2271 = vadd.f32 0.0, %v2270
      %2272 = vmatprep.mubr.f32.mxu0 %v1444
      %2273 = vmatmul.mubr.f32.gmra.mxu0 %v1322
      %v2274 = vpop.f32.mrf.mxu0
      %v2275 = vadd.f32 0.0, %v2274
      %v2276 = vpop.f32.mrf.mxu0
      %v2277 = vadd.f32 0.0, %v2276
      %2278 = vmatprep.mubr.f32.mxu0 %v1446
      %2279 = vmatmul.mubr.f32.gmra.mxu0 %v1327
      %v2280 = vpop.f32.mrf.mxu0
      %v2281 = vadd.f32 0.0, %v2280
      %v2282 = vpop.f32.mrf.mxu0
      %v2283 = vadd.f32 0.0, %v2282
      %2284 = vmatprep.mubr.f32.mxu0 %v1448
      %2285 = vmatmul.mubr.f32.gmra.mxu0 %v1332
      %v2286 = vpop.f32.mrf.mxu0
      %v2287 = vadd.f32 0.0, %v2286
      %v2288 = vpop.f32.mrf.mxu0
      %v2289 = vadd.f32 0.0, %v2288
      %2290 = vmatprep.mubr.f32.mxu0 %v1450
      %2291 = vmatmul.mubr.f32.gmra.mxu0 %v1337
      %v2292 = vpop.f32.mrf.mxu0
      %v2293 = vadd.f32 0.0, %v2292
      %v2294 = vpop.f32.mrf.mxu0
      %v2295 = vadd.f32 0.0, %v2294
      %2296 = vmatprep.mubr.f32.mxu0 %v1452
      %2297 = vmatmul.mubr.f32.gmra.mxu0 %v1342
      %v2298 = vpop.f32.mrf.mxu0
      %v2299 = vadd.f32 0.0, %v2298
      %v2300 = vpop.f32.mrf.mxu0
      %v2301 = vadd.f32 0.0, %v2300
      %2302 = vmatprep.mubr.f32.mxu0 %v1454
      %2303 = vmatmul.mubr.f32.gmra.mxu0 %v1347
      %v2304 = vpop.f32.mrf.mxu0
      %v2305 = vadd.f32 0.0, %v2304
      %v2306 = vpop.f32.mrf.mxu0
      %v2307 = vadd.f32 0.0, %v2306
      %2308 = vmatprep.mubr.f32.mxu0 %v1456
      %2309 = vmatmul.mubr.f32.gmra.mxu0 %v1352
      %v2310 = vpop.f32.mrf.mxu0
      %v2311 = vadd.f32 0.0, %v2310
      %v2312 = vpop.f32.mrf.mxu0
      %v2313 = vadd.f32 0.0, %v2312
      %2314 = vmatprep.mubr.f32.mxu0 %v1458
      %2315 = vmatmul.mubr.f32.gmra.mxu0 %v1357
      %v2316 = vpop.f32.mrf.mxu0
      %v2317 = vadd.f32 0.0, %v2316
      %v2318 = vpop.f32.mrf.mxu0
      %v2319 = vadd.f32 0.0, %v2318
      %2320 = vmatprep.mubr.f32.mxu0 %v1460
      %2321 = vmatmul.mubr.f32.gmra.mxu0 %v1362
      %v2322 = vpop.f32.mrf.mxu0
      %v2323 = vadd.f32 0.0, %v2322
      %v2324 = vpop.f32.mrf.mxu0
      %v2325 = vadd.f32 0.0, %v2324
      %2326 = vmatprep.mubr.f32.mxu0 %v1462
      %2327 = vmatmul.mubr.f32.gmra.mxu0 %v1367
      %v2328 = vpop.f32.mrf.mxu0
      %v2329 = vadd.f32 0.0, %v2328
      %v2330 = vpop.f32.mrf.mxu0
      %v2331 = vadd.f32 0.0, %v2330
      %2332 = vmatprep.mubr.f32.mxu0 %v1464
      %2333 = vmatmul.mubr.f32.gmra.mxu0 %v1372
      %v2334 = vpop.f32.mrf.mxu0
      %v2335 = vadd.f32 0.0, %v2334
      %v2336 = vpop.f32.mrf.mxu0
      %v2337 = vadd.f32 0.0, %v2336
      %2338 = vmatprep.mubr.f32.mxu0 %v1466
      %2339 = vmatmul.mubr.f32.gmra.mxu0 %v1377
      %v2340 = vpop.f32.mrf.mxu0
      %v2341 = vadd.f32 0.0, %v2340
      %v2342 = vpop.f32.mrf.mxu0
      %v2343 = vadd.f32 0.0, %v2342
      %2344 = vmatprep.mubr.f32.mxu0 %v1468
      %2345 = vmatmul.mubr.f32.gmra.mxu0 %v1382
      %v2346 = vpop.f32.mrf.mxu0
      %v2347 = vadd.f32 0.0, %v2346
      %v2348 = vpop.f32.mrf.mxu0
      %v2349 = vadd.f32 0.0, %v2348
      %2350 = vmatprep.mubr.f32.mxu0 %v2198
      %2351 = vmatmul.mubr.f32.gmra.mxu0 %v2151
      %v2352 = vpop.f32.mrf.mxu0
      %v2353 = vadd.f32 0.0, %v2352
      %v2354 = vpop.f32.mrf.mxu0
      %v2355 = vadd.f32 0.0, %v2354
      %2356 = vmatprep.mubr.f32.mxu0 %v2200
      %2357 = vmatmul.mubr.f32.gmra.mxu0 %v2156
      %v2358 = vpop.f32.mrf.mxu0
      %v2359 = vadd.f32 0.0, %v2358
      %v2360 = vpop.f32.mrf.mxu0
      %v2361 = vadd.f32 0.0, %v2360
      %2362 = vdwg.mxu0
      %v2363 = vadd.f32 %v2117, %v2269
      %v2364 = vadd.f32 %v2118, %v2271
      %v2365 = vadd.f32 %v2119, %v2275
      %v2366 = vadd.f32 %v2120, %v2277
      %v2367 = vadd.f32 %v2121, %v2281
      %v2368 = vadd.f32 %v2122, %v2283
      %v2369 = vadd.f32 %v2123, %v2287
      %v2370 = vadd.f32 %v2124, %v2289
      %v2371 = vadd.f32 %v2125, %v2293
      %v2372 = vadd.f32 %v2126, %v2295
      %v2373 = vadd.f32 %v2127, %v2299
      %v2374 = vadd.f32 %v2128, %v2301
      %v2375 = vadd.f32 %v2129, %v2305
      %v2376 = vadd.f32 %v2130, %v2307
      %v2377 = vadd.f32 %v2131, %v2311
      %v2378 = vadd.f32 %v2132, %v2313
      %v2379 = vadd.f32 %v2133, %v2317
      %v2380 = vadd.f32 %v2134, %v2319
      %v2381 = vadd.f32 %v2135, %v2323
      %v2382 = vadd.f32 %v2136, %v2325
      %v2383 = vadd.f32 %v2137, %v2329
      %v2384 = vadd.f32 %v2138, %v2331
      %v2385 = vadd.f32 %v2139, %v2335
      %v2386 = vadd.f32 %v2140, %v2337
      %v2387 = vadd.f32 %v2141, %v2341
      %v2388 = vadd.f32 %v2142, %v2343
      %v2389 = vadd.f32 %v2143, %v2347
      %v2390 = vadd.f32 %v2144, %v2349
      %v2391 = vadd.f32 %v2145, %v2353
      %v2392 = vadd.f32 %v2146, %v2355
      %v2393 = vadd.f32 %v2147, %v2359
      %v2394 = vadd.f32 %v2148, %v2361
      %s2395 = scalar_lea.vmem %s3, 1728
      %v2396 = vld [vmem:[%s2395] sm:$0xff]
      %v2397 = vld [vmem:[%s2395 + $0x8] sm:$0xff]
      %v2398 = vld [vmem:[%s2395 + $0x10] sm:$0xff]
      %v2399 = vld [vmem:[%s2395 + $0x18] sm:$0xff]
      %v2400 = vld [vmem:[%s2395 + $0x20] sm:$0xff]
      %v2401 = vld [vmem:[%s2395 + $0x28] sm:$0xff]
      %v2402 = vld [vmem:[%s2395 + $0x30] sm:$0xff]
      %v2403 = vld [vmem:[%s2395 + $0x38] sm:$0xff]
      %v2404 = vld [vmem:[%s2395 + $0x40] sm:$0xff]
      %v2405 = vld [vmem:[%s2395 + $0x48] sm:$0xff]
      %v2406 = vld [vmem:[%s2395 + $0x50] sm:$0xff]
      %v2407 = vld [vmem:[%s2395 + $0x58] sm:$0xff]
      %v2408 = vld [vmem:[%s2395 + $0x60] sm:$0xff]
      %v2409 = vld [vmem:[%s2395 + $0x68] sm:$0xff]
      %v2410 = vld [vmem:[%s2395 + $0x70] sm:$0xff]
      %v2411 = vld [vmem:[%s2395 + $0x78] sm:$0xff]
      %v2412 = vld [vmem:[%s2395 + $0x80] sm:$0xff]
      %v2413 = vld [vmem:[%s2395 + $0x88] sm:$0xff]
      %v2414 = vld [vmem:[%s2395 + $0x90] sm:$0xff]
      %v2415 = vld [vmem:[%s2395 + $0x98] sm:$0xff]
      %v2416 = vld [vmem:[%s2395 + $0xa0] sm:$0xff]
      %v2417 = vld [vmem:[%s2395 + $0xa8] sm:$0xff]
      %v2418 = vld [vmem:[%s2395 + $0xb0] sm:$0xff]
      %v2419 = vld [vmem:[%s2395 + $0xb8] sm:$0xff]
      %v2420 = vld [vmem:[%s2395 + $0xc0] sm:$0xff]
      %v2421 = vld [vmem:[%s2395 + $0xc8] sm:$0xff]
      %v2422 = vld [vmem:[%s2395 + $0xd0] sm:$0xff]
      %v2423 = vld [vmem:[%s2395 + $0xd8] sm:$0xff]
      %v2424 = vld [vmem:[%s2395 + $0xe0] sm:$0xff]
      %v2425 = vld [vmem:[%s2395 + $0xe8] sm:$0xff]
      %v2426 = vld [vmem:[%s2395 + $0xf0] sm:$0xff]
      %v2427 = vld [vmem:[%s2395 + $0xf8] sm:$0xff]
      %v2428 = vld [vmem:[%s2395 + $0x100] sm:$0xff]
      %v2429 = vld [vmem:[%s2395 + $0x108] sm:$0xff]
      %v2430 = vld [vmem:[%s2395 + $0x110] sm:$0xff]
      %v2431 = vld [vmem:[%s2395 + $0x118] sm:$0xff]
      %v2433 = vsel %vm505, %v695, 0
      %v2436 = vsel %vm505, %v697, 0
      %2438 = vmatprep.subr.mxu0 %v2427
      %2439 = vmatpush1.msra.mxu0 %v2426
      %2440 = vmatprep.subr.mxu0 %v2425
      %2441 = vmatpush1.msra.mxu0 %v2424
      %2442 = vmatprep.subr.mxu0 %v2423
      %2443 = vmatpush1.msra.mxu0 %v2422
      %2444 = vmatprep.subr.mxu0 %v2421
      %2445 = vmatpush1.msra.mxu0 %v2420
      %2446 = vmatprep.subr.mxu0 %v2419
      %2447 = vmatpush1.msra.mxu0 %v2418
      %2448 = vmatprep.subr.mxu0 %v2417
      %2449 = vmatpush1.msra.mxu0 %v2416
      %2450 = vmatprep.subr.mxu0 %v2415
      %2451 = vmatpush1.msra.mxu0 %v2414
      %2452 = vmatprep.subr.mxu0 %v2413
      %2453 = vmatpush1.msra.mxu0 %v2412
      %2454 = vmatprep.subr.mxu0 %v2411
      %2455 = vmatpush1.msra.mxu0 %v2410
      %2456 = vmatprep.subr.mxu0 %v2409
      %2457 = vmatpush1.msra.mxu0 %v2408
      %2458 = vmatprep.subr.mxu0 %v2407
      %2459 = vmatpush1.msra.mxu0 %v2406
      %2460 = vmatprep.subr.mxu0 %v2405
      %2461 = vmatpush1.msra.mxu0 %v2404
      %2462 = vmatprep.subr.mxu0 %v2403
      %2463 = vmatpush1.msra.mxu0 %v2402
      %2464 = vmatprep.subr.mxu0 %v2401
      %2465 = vmatpush1.msra.mxu0 %v2400
      %2466 = vmatprep.subr.mxu0 %v2399
      %2467 = vmatpush1.msra.mxu0 %v2398
      %2468 = vmatprep.subr.mxu0 %v2397
      %2469 = vmatpush1.msra.mxu0 %v2396
      %2470 = vmatprep.subr.mxu0 0.0
      %2471 = vmatpush2.msra.mxu0 0.0
      %2472 = vmatprep.subr.mxu0 0.0
      %2473 = vmatpush2.msra.mxu0 0.0
      %2474 = vmatprep.subr.mxu0 0.0
      %2475 = vmatpush2.msra.mxu0 0.0
      %2476 = vmatprep.subr.mxu0 0.0
      %2477 = vmatpush2.msra.mxu0 0.0
      %2478 = vmatprep.subr.mxu0 0.0
      %2479 = vmatpush2.msra.mxu0 0.0
      %2480 = vmatprep.subr.mxu0 0.0
      %2481 = vmatpush2.msra.mxu0 0.0
      %2482 = vmatprep.subr.mxu0 0.0
      %2483 = vmatpush2.msra.mxu0 0.0
      %2484 = vmatprep.subr.mxu0 0.0
      %2485 = vmatpush2.msra.mxu0 0.0
      %2486 = vmatprep.subr.mxu0 0.0
      %2487 = vmatpush2.msra.mxu0 0.0
      %2488 = vmatprep.subr.mxu0 0.0
      %2489 = vmatpush2.msra.mxu0 0.0
      %2490 = vmatprep.subr.mxu0 0.0
      %2491 = vmatpush2.msra.mxu0 0.0
      %2492 = vmatprep.subr.mxu0 0.0
      %2493 = vmatpush2.msra.mxu0 0.0
      %2494 = vmatprep.subr.mxu0 0.0
      %2495 = vmatpush2.msra.mxu0 0.0
      %2496 = vmatprep.subr.mxu0 0.0
      %2497 = vmatpush2.msra.mxu0 0.0
      %2498 = vmatprep.subr.mxu0 %v2431
      %2499 = vmatpush2.msra.mxu0 %v2430
      %2500 = vmatprep.subr.mxu0 %v2429
      %2501 = vmatpush2.msra.mxu0 %v2428
      %2502 = vmatprep.mubr.f32.mxu0 %v1119
      %2503 = vmatmul.mubr.f32.gmra.mxu0 %v652
      %v2504 = vpop.f32.mrf.mxu0
      %v2505 = vadd.f32 0.0, %v2504
      %v2506 = vpop.f32.mrf.mxu0
      %v2507 = vadd.f32 0.0, %v2506
      %2508 = vmatprep.mubr.f32.mxu0 %v1121
      %2509 = vmatmul.mubr.f32.gmra.mxu0 %v654
      %v2510 = vpop.f32.mrf.mxu0
      %v2511 = vadd.f32 0.0, %v2510
      %v2512 = vpop.f32.mrf.mxu0
      %v2513 = vadd.f32 0.0, %v2512
      %2514 = vmatprep.mubr.f32.mxu0 %v1123
      %2515 = vmatmul.mubr.f32.gmra.mxu0 %v658
      %v2516 = vpop.f32.mrf.mxu0
      %v2517 = vadd.f32 0.0, %v2516
      %v2518 = vpop.f32.mrf.mxu0
      %v2519 = vadd.f32 0.0, %v2518
      %2520 = vmatprep.mubr.f32.mxu0 %v1125
      %2521 = vmatmul.mubr.f32.gmra.mxu0 %v660
      %v2522 = vpop.f32.mrf.mxu0
      %v2523 = vadd.f32 0.0, %v2522
      %v2524 = vpop.f32.mrf.mxu0
      %v2525 = vadd.f32 0.0, %v2524
      %2526 = vmatprep.mubr.f32.mxu0 %v1127
      %2527 = vmatmul.mubr.f32.gmra.mxu0 %v664
      %v2528 = vpop.f32.mrf.mxu0
      %v2529 = vadd.f32 0.0, %v2528
      %v2530 = vpop.f32.mrf.mxu0
      %v2531 = vadd.f32 0.0, %v2530
      %2532 = vmatprep.mubr.f32.mxu0 %v1129
      %2533 = vmatmul.mubr.f32.gmra.mxu0 %v666
      %v2534 = vpop.f32.mrf.mxu0
      %v2535 = vadd.f32 0.0, %v2534
      %v2536 = vpop.f32.mrf.mxu0
      %v2537 = vadd.f32 0.0, %v2536
      %2538 = vmatprep.mubr.f32.mxu0 %v1131
      %2539 = vmatmul.mubr.f32.gmra.mxu0 %v670
      %v2540 = vpop.f32.mrf.mxu0
      %v2541 = vadd.f32 0.0, %v2540
      %v2542 = vpop.f32.mrf.mxu0
      %v2543 = vadd.f32 0.0, %v2542
      %2544 = vmatprep.mubr.f32.mxu0 %v1133
      %2545 = vmatmul.mubr.f32.gmra.mxu0 %v672
      %v2546 = vpop.f32.mrf.mxu0
      %v2547 = vadd.f32 0.0, %v2546
      %v2548 = vpop.f32.mrf.mxu0
      %v2549 = vadd.f32 0.0, %v2548
      %2550 = vmatprep.mubr.f32.mxu0 %v1135
      %2551 = vmatmul.mubr.f32.gmra.mxu0 %v676
      %v2552 = vpop.f32.mrf.mxu0
      %v2553 = vadd.f32 0.0, %v2552
      %v2554 = vpop.f32.mrf.mxu0
      %v2555 = vadd.f32 0.0, %v2554
      %2556 = vmatprep.mubr.f32.mxu0 %v1137
      %2557 = vmatmul.mubr.f32.gmra.mxu0 %v678
      %v2558 = vpop.f32.mrf.mxu0
      %v2559 = vadd.f32 0.0, %v2558
      %v2560 = vpop.f32.mrf.mxu0
      %v2561 = vadd.f32 0.0, %v2560
      %2562 = vmatprep.mubr.f32.mxu0 %v1139
      %2563 = vmatmul.mubr.f32.gmra.mxu0 %v682
      %v2564 = vpop.f32.mrf.mxu0
      %v2565 = vadd.f32 0.0, %v2564
      %v2566 = vpop.f32.mrf.mxu0
      %v2567 = vadd.f32 0.0, %v2566
      %2568 = vmatprep.mubr.f32.mxu0 %v1141
      %2569 = vmatmul.mubr.f32.gmra.mxu0 %v684
      %v2570 = vpop.f32.mrf.mxu0
      %v2571 = vadd.f32 0.0, %v2570
      %v2572 = vpop.f32.mrf.mxu0
      %v2573 = vadd.f32 0.0, %v2572
      %2574 = vmatprep.mubr.f32.mxu0 %v1701
      %2575 = vmatmul.mubr.f32.gmra.mxu0 %v688
      %v2576 = vpop.f32.mrf.mxu0
      %v2577 = vadd.f32 0.0, %v2576
      %v2578 = vpop.f32.mrf.mxu0
      %v2579 = vadd.f32 0.0, %v2578
      %2580 = vmatprep.mubr.f32.mxu0 %v1704
      %2581 = vmatmul.mubr.f32.gmra.mxu0 %v690
      %v2582 = vpop.f32.mrf.mxu0
      %v2583 = vadd.f32 0.0, %v2582
      %v2584 = vpop.f32.mrf.mxu0
      %v2585 = vadd.f32 0.0, %v2584
      %2586 = vmatprep.mubr.f32.mxu0 %v2433
      %2587 = vmatmul.mubr.f32.gmra.mxu0 %v694
      %v2588 = vpop.f32.mrf.mxu0
      %v2589 = vadd.f32 0.0, %v2588
      %v2590 = vpop.f32.mrf.mxu0
      %v2591 = vadd.f32 0.0, %v2590
      %2592 = vmatprep.mubr.f32.mxu0 %v2436
      %2593 = vmatmul.mubr.f32.gmra.mxu0 %v696
      %v2594 = vpop.f32.mrf.mxu0
      %v2595 = vadd.f32 0.0, %v2594
      %v2596 = vpop.f32.mrf.mxu0
      %v2597 = vadd.f32 0.0, %v2596
      %2598 = vdwg.mxu0
      %v2599 = vadd.f32 %v2363, %v2505
      %v2600 = vadd.f32 %v2364, %v2507
      %v2601 = vadd.f32 %v2365, %v2511
      %v2602 = vadd.f32 %v2366, %v2513
      %v2603 = vadd.f32 %v2367, %v2517
      %v2604 = vadd.f32 %v2368, %v2519
      %v2605 = vadd.f32 %v2369, %v2523
      %v2606 = vadd.f32 %v2370, %v2525
      %v2607 = vadd.f32 %v2371, %v2529
      %v2608 = vadd.f32 %v2372, %v2531
      %v2609 = vadd.f32 %v2373, %v2535
      %v2610 = vadd.f32 %v2374, %v2537
      %v2611 = vadd.f32 %v2375, %v2541
      %v2612 = vadd.f32 %v2376, %v2543
      %v2613 = vadd.f32 %v2377, %v2547
      %v2614 = vadd.f32 %v2378, %v2549
      %v2615 = vadd.f32 %v2379, %v2553
      %v2616 = vadd.f32 %v2380, %v2555
      %v2617 = vadd.f32 %v2381, %v2559
      %v2618 = vadd.f32 %v2382, %v2561
      %v2619 = vadd.f32 %v2383, %v2565
      %v2620 = vadd.f32 %v2384, %v2567
      %v2621 = vadd.f32 %v2385, %v2571
      %v2622 = vadd.f32 %v2386, %v2573
      %v2623 = vadd.f32 %v2387, %v2577
      %v2624 = vadd.f32 %v2388, %v2579
      %v2625 = vadd.f32 %v2389, %v2583
      %v2626 = vadd.f32 %v2390, %v2585
      %v2627 = vadd.f32 %v2391, %v2589
      %v2628 = vadd.f32 %v2392, %v2591
      %v2629 = vadd.f32 %v2393, %v2595
      %v2630 = vadd.f32 %v2394, %v2597
      %v2635 = vrot.slane %v694, 1
      %v2636 = vrot.slane %v696, 1
      %v2637 = vsel %vm784, %v2635, %v2636
      %v2638 = vrot.slane %v695, 1
      %v2639 = vrot.slane %v697, 1
      %v2640 = vsel %vm784, %v2638, %v2639
      %v2641 = vrot.slane %v698, 1
      %v2642 = vsel %vm784, %v2636, %v2641
      %v2643 = vrot.slane %v699, 1
      %v2644 = vsel %vm784, %v2639, %v2643
      %s2647 = scalar_lea.vmem %s3, 2016
      %v2648 = vld [vmem:[%s2647] sm:$0xff]
      %v2649 = vld [vmem:[%s2647 + $0x8] sm:$0xff]
      %v2650 = vld [vmem:[%s2647 + $0x10] sm:$0xff]
      %v2651 = vld [vmem:[%s2647 + $0x18] sm:$0xff]
      %v2652 = vld [vmem:[%s2647 + $0x20] sm:$0xff]
      %v2653 = vld [vmem:[%s2647 + $0x28] sm:$0xff]
      %v2654 = vld [vmem:[%s2647 + $0x30] sm:$0xff]
      %v2655 = vld [vmem:[%s2647 + $0x38] sm:$0xff]
      %v2656 = vld [vmem:[%s2647 + $0x40] sm:$0xff]
      %v2657 = vld [vmem:[%s2647 + $0x48] sm:$0xff]
      %v2658 = vld [vmem:[%s2647 + $0x50] sm:$0xff]
      %v2659 = vld [vmem:[%s2647 + $0x58] sm:$0xff]
      %v2660 = vld [vmem:[%s2647 + $0x60] sm:$0xff]
      %v2661 = vld [vmem:[%s2647 + $0x68] sm:$0xff]
      %v2662 = vld [vmem:[%s2647 + $0x70] sm:$0xff]
      %v2663 = vld [vmem:[%s2647 + $0x78] sm:$0xff]
      %v2664 = vld [vmem:[%s2647 + $0x80] sm:$0xff]
      %v2665 = vld [vmem:[%s2647 + $0x88] sm:$0xff]
      %v2666 = vld [vmem:[%s2647 + $0x90] sm:$0xff]
      %v2667 = vld [vmem:[%s2647 + $0x98] sm:$0xff]
      %v2668 = vld [vmem:[%s2647 + $0xa0] sm:$0xff]
      %v2669 = vld [vmem:[%s2647 + $0xa8] sm:$0xff]
      %v2670 = vld [vmem:[%s2647 + $0xb0] sm:$0xff]
      %v2671 = vld [vmem:[%s2647 + $0xb8] sm:$0xff]
      %v2672 = vld [vmem:[%s2647 + $0xc0] sm:$0xff]
      %v2673 = vld [vmem:[%s2647 + $0xc8] sm:$0xff]
      %v2674 = vld [vmem:[%s2647 + $0xd0] sm:$0xff]
      %v2675 = vld [vmem:[%s2647 + $0xd8] sm:$0xff]
      %v2676 = vld [vmem:[%s2647 + $0xe0] sm:$0xff]
      %v2677 = vld [vmem:[%s2647 + $0xe8] sm:$0xff]
      %v2678 = vld [vmem:[%s2647 + $0xf0] sm:$0xff]
      %v2679 = vld [vmem:[%s2647 + $0xf8] sm:$0xff]
      %v2680 = vld [vmem:[%s2647 + $0x100] sm:$0xff]
      %v2681 = vld [vmem:[%s2647 + $0x108] sm:$0xff]
      %v2682 = vld [vmem:[%s2647 + $0x110] sm:$0xff]
      %v2683 = vld [vmem:[%s2647 + $0x118] sm:$0xff]
      %v2684 = vsel %vm505, %v2640, 0
      %v2686 = vsel %vm505, %v2644, 0
      %2688 = vmatprep.subr.mxu0 %v2679
      %2689 = vmatpush1.msra.mxu0 %v2678
      %2690 = vmatprep.subr.mxu0 %v2677
      %2691 = vmatpush1.msra.mxu0 %v2676
      %2692 = vmatprep.subr.mxu0 %v2675
      %2693 = vmatpush1.msra.mxu0 %v2674
      %2694 = vmatprep.subr.mxu0 %v2673
      %2695 = vmatpush1.msra.mxu0 %v2672
      %2696 = vmatprep.subr.mxu0 %v2671
      %2697 = vmatpush1.msra.mxu0 %v2670
      %2698 = vmatprep.subr.mxu0 %v2669
      %2699 = vmatpush1.msra.mxu0 %v2668
      %2700 = vmatprep.subr.mxu0 %v2667
      %2701 = vmatpush1.msra.mxu0 %v2666
      %2702 = vmatprep.subr.mxu0 %v2665
      %2703 = vmatpush1.msra.mxu0 %v2664
      %2704 = vmatprep.subr.mxu0 %v2663
      %2705 = vmatpush1.msra.mxu0 %v2662
      %2706 = vmatprep.subr.mxu0 %v2661
      %2707 = vmatpush1.msra.mxu0 %v2660
      %2708 = vmatprep.subr.mxu0 %v2659
      %2709 = vmatpush1.msra.mxu0 %v2658
      %2710 = vmatprep.subr.mxu0 %v2657
      %2711 = vmatpush1.msra.mxu0 %v2656
      %2712 = vmatprep.subr.mxu0 %v2655
      %2713 = vmatpush1.msra.mxu0 %v2654
      %2714 = vmatprep.subr.mxu0 %v2653
      %2715 = vmatpush1.msra.mxu0 %v2652
      %2716 = vmatprep.subr.mxu0 %v2651
      %2717 = vmatpush1.msra.mxu0 %v2650
      %2718 = vmatprep.subr.mxu0 %v2649
      %2719 = vmatpush1.msra.mxu0 %v2648
      %2720 = vmatprep.subr.mxu0 0.0
      %2721 = vmatpush2.msra.mxu0 0.0
      %2722 = vmatprep.subr.mxu0 0.0
      %2723 = vmatpush2.msra.mxu0 0.0
      %2724 = vmatprep.subr.mxu0 0.0
      %2725 = vmatpush2.msra.mxu0 0.0
      %2726 = vmatprep.subr.mxu0 0.0
      %2727 = vmatpush2.msra.mxu0 0.0
      %2728 = vmatprep.subr.mxu0 0.0
      %2729 = vmatpush2.msra.mxu0 0.0
      %2730 = vmatprep.subr.mxu0 0.0
      %2731 = vmatpush2.msra.mxu0 0.0
      %2732 = vmatprep.subr.mxu0 0.0
      %2733 = vmatpush2.msra.mxu0 0.0
      %2734 = vmatprep.subr.mxu0 0.0
      %2735 = vmatpush2.msra.mxu0 0.0
      %2736 = vmatprep.subr.mxu0 0.0
      %2737 = vmatpush2.msra.mxu0 0.0
      %2738 = vmatprep.subr.mxu0 0.0
      %2739 = vmatpush2.msra.mxu0 0.0
      %2740 = vmatprep.subr.mxu0 0.0
      %2741 = vmatpush2.msra.mxu0 0.0
      %2742 = vmatprep.subr.mxu0 0.0
      %2743 = vmatpush2.msra.mxu0 0.0
      %2744 = vmatprep.subr.mxu0 0.0
      %2745 = vmatpush2.msra.mxu0 0.0
      %2746 = vmatprep.subr.mxu0 0.0
      %2747 = vmatpush2.msra.mxu0 0.0
      %2748 = vmatprep.subr.mxu0 %v2683
      %2749 = vmatpush2.msra.mxu0 %v2682
      %2750 = vmatprep.subr.mxu0 %v2681
      %2751 = vmatpush2.msra.mxu0 %v2680
      %2752 = vmatprep.mubr.f32.mxu0 %v926
      %2753 = vmatmul.mubr.f32.gmra.mxu0 %v807
      %v2754 = vpop.f32.mrf.mxu0
      %v2755 = vadd.f32 0.0, %v2754
      %v2756 = vpop.f32.mrf.mxu0
      %v2757 = vadd.f32 0.0, %v2756
      %2758 = vmatprep.mubr.f32.mxu0 %v928
      %2759 = vmatmul.mubr.f32.gmra.mxu0 %v812
      %v2760 = vpop.f32.mrf.mxu0
      %v2761 = vadd.f32 0.0, %v2760
      %v2762 = vpop.f32.mrf.mxu0
      %v2763 = vadd.f32 0.0, %v2762
      %2764 = vmatprep.mubr.f32.mxu0 %v930
      %2765 = vmatmul.mubr.f32.gmra.mxu0 %v817
      %v2766 = vpop.f32.mrf.mxu0
      %v2767 = vadd.f32 0.0, %v2766
      %v2768 = vpop.f32.mrf.mxu0
      %v2769 = vadd.f32 0.0, %v2768
      %2770 = vmatprep.mubr.f32.mxu0 %v932
      %2771 = vmatmul.mubr.f32.gmra.mxu0 %v822
      %v2772 = vpop.f32.mrf.mxu0
      %v2773 = vadd.f32 0.0, %v2772
      %v2774 = vpop.f32.mrf.mxu0
      %v2775 = vadd.f32 0.0, %v2774
      %2776 = vmatprep.mubr.f32.mxu0 %v934
      %2777 = vmatmul.mubr.f32.gmra.mxu0 %v827
      %v2778 = vpop.f32.mrf.mxu0
      %v2779 = vadd.f32 0.0, %v2778
      %v2780 = vpop.f32.mrf.mxu0
      %v2781 = vadd.f32 0.0, %v2780
      %2782 = vmatprep.mubr.f32.mxu0 %v936
      %2783 = vmatmul.mubr.f32.gmra.mxu0 %v832
      %v2784 = vpop.f32.mrf.mxu0
      %v2785 = vadd.f32 0.0, %v2784
      %v2786 = vpop.f32.mrf.mxu0
      %v2787 = vadd.f32 0.0, %v2786
      %2788 = vmatprep.mubr.f32.mxu0 %v938
      %2789 = vmatmul.mubr.f32.gmra.mxu0 %v837
      %v2790 = vpop.f32.mrf.mxu0
      %v2791 = vadd.f32 0.0, %v2790
      %v2792 = vpop.f32.mrf.mxu0
      %v2793 = vadd.f32 0.0, %v2792
      %2794 = vmatprep.mubr.f32.mxu0 %v940
      %2795 = vmatmul.mubr.f32.gmra.mxu0 %v842
      %v2796 = vpop.f32.mrf.mxu0
      %v2797 = vadd.f32 0.0, %v2796
      %v2798 = vpop.f32.mrf.mxu0
      %v2799 = vadd.f32 0.0, %v2798
      %2800 = vmatprep.mubr.f32.mxu0 %v942
      %2801 = vmatmul.mubr.f32.gmra.mxu0 %v847
      %v2802 = vpop.f32.mrf.mxu0
      %v2803 = vadd.f32 0.0, %v2802
      %v2804 = vpop.f32.mrf.mxu0
      %v2805 = vadd.f32 0.0, %v2804
      %2806 = vmatprep.mubr.f32.mxu0 %v944
      %2807 = vmatmul.mubr.f32.gmra.mxu0 %v852
      %v2808 = vpop.f32.mrf.mxu0
      %v2809 = vadd.f32 0.0, %v2808
      %v2810 = vpop.f32.mrf.mxu0
      %v2811 = vadd.f32 0.0, %v2810
      %2812 = vmatprep.mubr.f32.mxu0 %v946
      %2813 = vmatmul.mubr.f32.gmra.mxu0 %v857
      %v2814 = vpop.f32.mrf.mxu0
      %v2815 = vadd.f32 0.0, %v2814
      %v2816 = vpop.f32.mrf.mxu0
      %v2817 = vadd.f32 0.0, %v2816
      %2818 = vmatprep.mubr.f32.mxu0 %v948
      %2819 = vmatmul.mubr.f32.gmra.mxu0 %v862
      %v2820 = vpop.f32.mrf.mxu0
      %v2821 = vadd.f32 0.0, %v2820
      %v2822 = vpop.f32.mrf.mxu0
      %v2823 = vadd.f32 0.0, %v2822
      %2824 = vmatprep.mubr.f32.mxu0 %v1952
      %2825 = vmatmul.mubr.f32.gmra.mxu0 %v1905
      %v2826 = vpop.f32.mrf.mxu0
      %v2827 = vadd.f32 0.0, %v2826
      %v2828 = vpop.f32.mrf.mxu0
      %v2829 = vadd.f32 0.0, %v2828
      %2830 = vmatprep.mubr.f32.mxu0 %v1954
      %2831 = vmatmul.mubr.f32.gmra.mxu0 %v1910
      %v2832 = vpop.f32.mrf.mxu0
      %v2833 = vadd.f32 0.0, %v2832
      %v2834 = vpop.f32.mrf.mxu0
      %v2835 = vadd.f32 0.0, %v2834
      %2836 = vmatprep.mubr.f32.mxu0 %v2684
      %2837 = vmatmul.mubr.f32.gmra.mxu0 %v2637
      %v2838 = vpop.f32.mrf.mxu0
      %v2839 = vadd.f32 0.0, %v2838
      %v2840 = vpop.f32.mrf.mxu0
      %v2841 = vadd.f32 0.0, %v2840
      %2842 = vmatprep.mubr.f32.mxu0 %v2686
      %2843 = vmatmul.mubr.f32.gmra.mxu0 %v2642
      %v2844 = vpop.f32.mrf.mxu0
      %v2845 = vadd.f32 0.0, %v2844
      %v2846 = vpop.f32.mrf.mxu0
      %v2847 = vadd.f32 0.0, %v2846
      %2848 = vdwg.mxu0
      %v2849 = vadd.f32 %v2599, %v2755
      %v2850 = vadd.f32 %v2600, %v2757
      %v2851 = vadd.f32 %v2601, %v2761
      %v2852 = vadd.f32 %v2602, %v2763
      %v2853 = vadd.f32 %v2603, %v2767
      %v2854 = vadd.f32 %v2604, %v2769
      %v2855 = vadd.f32 %v2605, %v2773
      %v2856 = vadd.f32 %v2606, %v2775
      %v2857 = vadd.f32 %v2607, %v2779
      %v2858 = vadd.f32 %v2608, %v2781
      %v2859 = vadd.f32 %v2609, %v2785
      %v2860 = vadd.f32 %v2610, %v2787
      %v2861 = vadd.f32 %v2611, %v2791
      %v2862 = vadd.f32 %v2612, %v2793
      %v2863 = vadd.f32 %v2613, %v2797
      %v2864 = vadd.f32 %v2614, %v2799
      %v2865 = vadd.f32 %v2615, %v2803
      %v2866 = vadd.f32 %v2616, %v2805
      %v2867 = vadd.f32 %v2617, %v2809
      %v2868 = vadd.f32 %v2618, %v2811
      %v2869 = vadd.f32 %v2619, %v2815
      %v2870 = vadd.f32 %v2620, %v2817
      %v2871 = vadd.f32 %v2621, %v2821
      %v2872 = vadd.f32 %v2622, %v2823
      %v2873 = vadd.f32 %v2623, %v2827
      %v2874 = vadd.f32 %v2624, %v2829
      %v2875 = vadd.f32 %v2625, %v2833
      %v2876 = vadd.f32 %v2626, %v2835
      %v2877 = vadd.f32 %v2627, %v2839
      %v2878 = vadd.f32 %v2628, %v2841
      %v2879 = vadd.f32 %v2629, %v2845
      %v2880 = vadd.f32 %v2630, %v2847
      %v2881 = vrot.slane %v694, 2
      %v2882 = vrot.slane %v696, 2
      %v2883 = vsel %vm1304, %v2881, %v2882
      %v2884 = vrot.slane %v695, 2
      %v2885 = vrot.slane %v697, 2
      %v2886 = vsel %vm1304, %v2884, %v2885
      %v2887 = vrot.slane %v698, 2
      %v2888 = vsel %vm1304, %v2882, %v2887
      %v2889 = vrot.slane %v699, 2
      %v2890 = vsel %vm1304, %v2885, %v2889
      %s2893 = scalar_lea.vmem %s3, 2304
      %v2894 = vld [vmem:[%s2893] sm:$0xff]
      %v2895 = vld [vmem:[%s2893 + $0x8] sm:$0xff]
      %v2896 = vld [vmem:[%s2893 + $0x10] sm:$0xff]
      %v2897 = vld [vmem:[%s2893 + $0x18] sm:$0xff]
      %v2898 = vld [vmem:[%s2893 + $0x20] sm:$0xff]
      %v2899 = vld [vmem:[%s2893 + $0x28] sm:$0xff]
      %v2900 = vld [vmem:[%s2893 + $0x30] sm:$0xff]
      %v2901 = vld [vmem:[%s2893 + $0x38] sm:$0xff]
      %v2902 = vld [vmem:[%s2893 + $0x40] sm:$0xff]
      %v2903 = vld [vmem:[%s2893 + $0x48] sm:$0xff]
      %v2904 = vld [vmem:[%s2893 + $0x50] sm:$0xff]
      %v2905 = vld [vmem:[%s2893 + $0x58] sm:$0xff]
      %v2906 = vld [vmem:[%s2893 + $0x60] sm:$0xff]
      %v2907 = vld [vmem:[%s2893 + $0x68] sm:$0xff]
      %v2908 = vld [vmem:[%s2893 + $0x70] sm:$0xff]
      %v2909 = vld [vmem:[%s2893 + $0x78] sm:$0xff]
      %v2910 = vld [vmem:[%s2893 + $0x80] sm:$0xff]
      %v2911 = vld [vmem:[%s2893 + $0x88] sm:$0xff]
      %v2912 = vld [vmem:[%s2893 + $0x90] sm:$0xff]
      %v2913 = vld [vmem:[%s2893 + $0x98] sm:$0xff]
      %v2914 = vld [vmem:[%s2893 + $0xa0] sm:$0xff]
      %v2915 = vld [vmem:[%s2893 + $0xa8] sm:$0xff]
      %v2916 = vld [vmem:[%s2893 + $0xb0] sm:$0xff]
      %v2917 = vld [vmem:[%s2893 + $0xb8] sm:$0xff]
      %v2918 = vld [vmem:[%s2893 + $0xc0] sm:$0xff]
      %v2919 = vld [vmem:[%s2893 + $0xc8] sm:$0xff]
      %v2920 = vld [vmem:[%s2893 + $0xd0] sm:$0xff]
      %v2921 = vld [vmem:[%s2893 + $0xd8] sm:$0xff]
      %v2922 = vld [vmem:[%s2893 + $0xe0] sm:$0xff]
      %v2923 = vld [vmem:[%s2893 + $0xe8] sm:$0xff]
      %v2924 = vld [vmem:[%s2893 + $0xf0] sm:$0xff]
      %v2925 = vld [vmem:[%s2893 + $0xf8] sm:$0xff]
      %v2926 = vld [vmem:[%s2893 + $0x100] sm:$0xff]
      %v2927 = vld [vmem:[%s2893 + $0x108] sm:$0xff]
      %v2928 = vld [vmem:[%s2893 + $0x110] sm:$0xff]
      %v2929 = vld [vmem:[%s2893 + $0x118] sm:$0xff]
      %v2930 = vsel %vm505, %v2886, 0
      %v2932 = vsel %vm505, %v2890, 0
      %2934 = vmatprep.subr.mxu0 %v2925
      %2935 = vmatpush1.msra.mxu0 %v2924
      %2936 = vmatprep.subr.mxu0 %v2923
      %2937 = vmatpush1.msra.mxu0 %v2922
      %2938 = vmatprep.subr.mxu0 %v2921
      %2939 = vmatpush1.msra.mxu0 %v2920
      %2940 = vmatprep.subr.mxu0 %v2919
      %2941 = vmatpush1.msra.mxu0 %v2918
      %2942 = vmatprep.subr.mxu0 %v2917
      %2943 = vmatpush1.msra.mxu0 %v2916
      %2944 = vmatprep.subr.mxu0 %v2915
      %2945 = vmatpush1.msra.mxu0 %v2914
      %2946 = vmatprep.subr.mxu0 %v2913
      %2947 = vmatpush1.msra.mxu0 %v2912
      %2948 = vmatprep.subr.mxu0 %v2911
      %2949 = vmatpush1.msra.mxu0 %v2910
      %2950 = vmatprep.subr.mxu0 %v2909
      %2951 = vmatpush1.msra.mxu0 %v2908
      %2952 = vmatprep.subr.mxu0 %v2907
      %2953 = vmatpush1.msra.mxu0 %v2906
      %2954 = vmatprep.subr.mxu0 %v2905
      %2955 = vmatpush1.msra.mxu0 %v2904
      %2956 = vmatprep.subr.mxu0 %v2903
      %2957 = vmatpush1.msra.mxu0 %v2902
      %2958 = vmatprep.subr.mxu0 %v2901
      %2959 = vmatpush1.msra.mxu0 %v2900
      %2960 = vmatprep.subr.mxu0 %v2899
      %2961 = vmatpush1.msra.mxu0 %v2898
      %2962 = vmatprep.subr.mxu0 %v2897
      %2963 = vmatpush1.msra.mxu0 %v2896
      %2964 = vmatprep.subr.mxu0 %v2895
      %2965 = vmatpush1.msra.mxu0 %v2894
      %2966 = vmatprep.subr.mxu0 0.0
      %2967 = vmatpush2.msra.mxu0 0.0
      %2968 = vmatprep.subr.mxu0 0.0
      %2969 = vmatpush2.msra.mxu0 0.0
      %2970 = vmatprep.subr.mxu0 0.0
      %2971 = vmatpush2.msra.mxu0 0.0
      %2972 = vmatprep.subr.mxu0 0.0
      %2973 = vmatpush2.msra.mxu0 0.0
      %2974 = vmatprep.subr.mxu0 0.0
      %2975 = vmatpush2.msra.mxu0 0.0
      %2976 = vmatprep.subr.mxu0 0.0
      %2977 = vmatpush2.msra.mxu0 0.0
      %2978 = vmatprep.subr.mxu0 0.0
      %2979 = vmatpush2.msra.mxu0 0.0
      %2980 = vmatprep.subr.mxu0 0.0
      %2981 = vmatpush2.msra.mxu0 0.0
      %2982 = vmatprep.subr.mxu0 0.0
      %2983 = vmatpush2.msra.mxu0 0.0
      %2984 = vmatprep.subr.mxu0 0.0
      %2985 = vmatpush2.msra.mxu0 0.0
      %2986 = vmatprep.subr.mxu0 0.0
      %2987 = vmatpush2.msra.mxu0 0.0
      %2988 = vmatprep.subr.mxu0 0.0
      %2989 = vmatpush2.msra.mxu0 0.0
      %2990 = vmatprep.subr.mxu0 0.0
      %2991 = vmatpush2.msra.mxu0 0.0
      %2992 = vmatprep.subr.mxu0 0.0
      %2993 = vmatpush2.msra.mxu0 0.0
      %2994 = vmatprep.subr.mxu0 %v2929
      %2995 = vmatpush2.msra.mxu0 %v2928
      %2996 = vmatprep.subr.mxu0 %v2927
      %2997 = vmatpush2.msra.mxu0 %v2926
      %2998 = vmatprep.mubr.f32.mxu0 %v1446
      %2999 = vmatmul.mubr.f32.gmra.mxu0 %v1327
      %v3000 = vpop.f32.mrf.mxu0
      %v3001 = vadd.f32 0.0, %v3000
      %v3002 = vpop.f32.mrf.mxu0
      %v3003 = vadd.f32 0.0, %v3002
      %3004 = vmatprep.mubr.f32.mxu0 %v1448
      %3005 = vmatmul.mubr.f32.gmra.mxu0 %v1332
      %v3006 = vpop.f32.mrf.mxu0
      %v3007 = vadd.f32 0.0, %v3006
      %v3008 = vpop.f32.mrf.mxu0
      %v3009 = vadd.f32 0.0, %v3008
      %3010 = vmatprep.mubr.f32.mxu0 %v1450
      %3011 = vmatmul.mubr.f32.gmra.mxu0 %v1337
      %v3012 = vpop.f32.mrf.mxu0
      %v3013 = vadd.f32 0.0, %v3012
      %v3014 = vpop.f32.mrf.mxu0
      %v3015 = vadd.f32 0.0, %v3014
      %3016 = vmatprep.mubr.f32.mxu0 %v1452
      %3017 = vmatmul.mubr.f32.gmra.mxu0 %v1342
      %v3018 = vpop.f32.mrf.mxu0
      %v3019 = vadd.f32 0.0, %v3018
      %v3020 = vpop.f32.mrf.mxu0
      %v3021 = vadd.f32 0.0, %v3020
      %3022 = vmatprep.mubr.f32.mxu0 %v1454
      %3023 = vmatmul.mubr.f32.gmra.mxu0 %v1347
      %v3024 = vpop.f32.mrf.mxu0
      %v3025 = vadd.f32 0.0, %v3024
      %v3026 = vpop.f32.mrf.mxu0
      %v3027 = vadd.f32 0.0, %v3026
      %3028 = vmatprep.mubr.f32.mxu0 %v1456
      %3029 = vmatmul.mubr.f32.gmra.mxu0 %v1352
      %v3030 = vpop.f32.mrf.mxu0
      %v3031 = vadd.f32 0.0, %v3030
      %v3032 = vpop.f32.mrf.mxu0
      %v3033 = vadd.f32 0.0, %v3032
      %3034 = vmatprep.mubr.f32.mxu0 %v1458
      %3035 = vmatmul.mubr.f32.gmra.mxu0 %v1357
      %v3036 = vpop.f32.mrf.mxu0
      %v3037 = vadd.f32 0.0, %v3036
      %v3038 = vpop.f32.mrf.mxu0
      %v3039 = vadd.f32 0.0, %v3038
      %3040 = vmatprep.mubr.f32.mxu0 %v1460
      %3041 = vmatmul.mubr.f32.gmra.mxu0 %v1362
      %v3042 = vpop.f32.mrf.mxu0
      %v3043 = vadd.f32 0.0, %v3042
      %v3044 = vpop.f32.mrf.mxu0
      %v3045 = vadd.f32 0.0, %v3044
      %3046 = vmatprep.mubr.f32.mxu0 %v1462
      %3047 = vmatmul.mubr.f32.gmra.mxu0 %v1367
      %v3048 = vpop.f32.mrf.mxu0
      %v3049 = vadd.f32 0.0, %v3048
      %v3050 = vpop.f32.mrf.mxu0
      %v3051 = vadd.f32 0.0, %v3050
      %3052 = vmatprep.mubr.f32.mxu0 %v1464
      %3053 = vmatmul.mubr.f32.gmra.mxu0 %v1372
      %v3054 = vpop.f32.mrf.mxu0
      %v3055 = vadd.f32 0.0, %v3054
      %v3056 = vpop.f32.mrf.mxu0
      %v3057 = vadd.f32 0.0, %v3056
      %3058 = vmatprep.mubr.f32.mxu0 %v1466
      %3059 = vmatmul.mubr.f32.gmra.mxu0 %v1377
      %v3060 = vpop.f32.mrf.mxu0
      %v3061 = vadd.f32 0.0, %v3060
      %v3062 = vpop.f32.mrf.mxu0
      %v3063 = vadd.f32 0.0, %v3062
      %3064 = vmatprep.mubr.f32.mxu0 %v1468
      %3065 = vmatmul.mubr.f32.gmra.mxu0 %v1382
      %v3066 = vpop.f32.mrf.mxu0
      %v3067 = vadd.f32 0.0, %v3066
      %v3068 = vpop.f32.mrf.mxu0
      %v3069 = vadd.f32 0.0, %v3068
      %3070 = vmatprep.mubr.f32.mxu0 %v2198
      %3071 = vmatmul.mubr.f32.gmra.mxu0 %v2151
      %v3072 = vpop.f32.mrf.mxu0
      %v3073 = vadd.f32 0.0, %v3072
      %v3074 = vpop.f32.mrf.mxu0
      %v3075 = vadd.f32 0.0, %v3074
      %3076 = vmatprep.mubr.f32.mxu0 %v2200
      %3077 = vmatmul.mubr.f32.gmra.mxu0 %v2156
      %v3078 = vpop.f32.mrf.mxu0
      %v3079 = vadd.f32 0.0, %v3078
      %v3080 = vpop.f32.mrf.mxu0
      %v3081 = vadd.f32 0.0, %v3080
      %3082 = vmatprep.mubr.f32.mxu0 %v2930
      %3083 = vmatmul.mubr.f32.gmra.mxu0 %v2883
      %v3084 = vpop.f32.mrf.mxu0
      %v3085 = vadd.f32 0.0, %v3084
      %v3086 = vpop.f32.mrf.mxu0
      %v3087 = vadd.f32 0.0, %v3086
      %3088 = vmatprep.mubr.f32.mxu0 %v2932
      %3089 = vmatmul.mubr.f32.gmra.mxu0 %v2888
      %v3090 = vpop.f32.mrf.mxu0
      %v3091 = vadd.f32 0.0, %v3090
      %v3092 = vpop.f32.mrf.mxu0
      %v3093 = vadd.f32 0.0, %v3092
      %3094 = vdwg.mxu0
      %v3095 = vadd.f32 %v2849, %v3001
      %v3096 = vadd.f32 %v2850, %v3003
      %v3097 = vadd.f32 %v2851, %v3007
      %v3098 = vadd.f32 %v2852, %v3009
      %v3099 = vadd.f32 %v2853, %v3013
      %v3100 = vadd.f32 %v2854, %v3015
      %v3101 = vadd.f32 %v2855, %v3019
      %v3102 = vadd.f32 %v2856, %v3021
      %v3103 = vadd.f32 %v2857, %v3025
      %v3104 = vadd.f32 %v2858, %v3027
      %v3105 = vadd.f32 %v2859, %v3031
      %v3106 = vadd.f32 %v2860, %v3033
      %v3107 = vadd.f32 %v2861, %v3037
      %v3108 = vadd.f32 %v2862, %v3039
      %v3109 = vadd.f32 %v2863, %v3043
      %v3110 = vadd.f32 %v2864, %v3045
      %v3111 = vadd.f32 %v2865, %v3049
      %v3112 = vadd.f32 %v2866, %v3051
      %v3113 = vadd.f32 %v2867, %v3055
      %v3114 = vadd.f32 %v2868, %v3057
      %v3115 = vadd.f32 %v2869, %v3061
      %v3116 = vadd.f32 %v2870, %v3063
      %v3117 = vadd.f32 %v2871, %v3067
      %v3118 = vadd.f32 %v2872, %v3069
      %v3119 = vadd.f32 %v2873, %v3073
      %v3120 = vadd.f32 %v2874, %v3075
      %v3121 = vadd.f32 %v2875, %v3079
      %v3122 = vadd.f32 %v2876, %v3081
      %v3123 = vadd.f32 %v2877, %v3085
      %v3124 = vadd.f32 %v2878, %v3087
      %v3125 = vadd.f32 %v2879, %v3091
      %v3126 = vadd.f32 %v2880, %v3093
      %v3127 = vld [vmem:[%s4] sm:$0x3]
      %v3129 = vlaneseq
      %v3130 = vshrl.u32 %v3129, 7
      %v3131 = vsub.s32 0, %v3130
      %v3132 = vrot.slane %v3127, %v3131
      %v3133 = vlaneseq
      %v3134 = vshrl.u32 %v3133, 7
      %v3135 = vsub.s32 1, %v3134
      %v3136 = vrot.slane %v3127, %v3135
      %v3139 = vadd.f32 %v3095, %v3132
      %v3140 = vadd.f32 %v3096, %v3136
      %v3141 = vadd.f32 %v3097, %v3132
      %v3142 = vadd.f32 %v3098, %v3136
      %v3143 = vadd.f32 %v3099, %v3132
      %v3144 = vadd.f32 %v3100, %v3136
      %v3145 = vadd.f32 %v3101, %v3132
      %v3146 = vadd.f32 %v3102, %v3136
      %v3147 = vadd.f32 %v3103, %v3132
      %v3148 = vadd.f32 %v3104, %v3136
      %v3149 = vadd.f32 %v3105, %v3132
      %v3150 = vadd.f32 %v3106, %v3136
      %v3151 = vadd.f32 %v3107, %v3132
      %v3152 = vadd.f32 %v3108, %v3136
      %v3153 = vadd.f32 %v3109, %v3132
      %v3154 = vadd.f32 %v3110, %v3136
      %v3155 = vadd.f32 %v3111, %v3132
      %v3156 = vadd.f32 %v3112, %v3136
      %v3157 = vadd.f32 %v3113, %v3132
      %v3158 = vadd.f32 %v3114, %v3136
      %v3159 = vadd.f32 %v3115, %v3132
      %v3160 = vadd.f32 %v3116, %v3136
      %v3161 = vadd.f32 %v3117, %v3132
      %v3162 = vadd.f32 %v3118, %v3136
      %v3163 = vadd.f32 %v3119, %v3132
      %v3164 = vadd.f32 %v3120, %v3136
      %v3165 = vadd.f32 %v3121, %v3132
      %v3166 = vadd.f32 %v3122, %v3136
      %v3167 = vadd.f32 %v3123, %v3132
      %v3168 = vadd.f32 %v3124, %v3136
      %v3169 = vadd.f32 %v3125, %v3132
      %v3170 = vadd.f32 %v3126, %v3136
      %v3171 = vmax.f32 %v3139, 0.0
      %v3172 = vmax.f32 %v3140, 0.0
      %v3173 = vmax.f32 %v3141, 0.0
      %v3174 = vmax.f32 %v3142, 0.0
      %v3175 = vmax.f32 %v3143, 0.0
      %v3176 = vmax.f32 %v3144, 0.0
      %v3177 = vmax.f32 %v3145, 0.0
      %v3178 = vmax.f32 %v3146, 0.0
      %v3179 = vmax.f32 %v3147, 0.0
      %v3180 = vmax.f32 %v3148, 0.0
      %v3181 = vmax.f32 %v3149, 0.0
      %v3182 = vmax.f32 %v3150, 0.0
      %v3183 = vmax.f32 %v3151, 0.0
      %v3184 = vmax.f32 %v3152, 0.0
      %v3185 = vmax.f32 %v3153, 0.0
      %v3186 = vmax.f32 %v3154, 0.0
      %v3187 = vmax.f32 %v3155, 0.0
      %v3188 = vmax.f32 %v3156, 0.0
      %v3189 = vmax.f32 %v3157, 0.0
      %v3190 = vmax.f32 %v3158, 0.0
      %v3191 = vmax.f32 %v3159, 0.0
      %v3192 = vmax.f32 %v3160, 0.0
      %v3193 = vmax.f32 %v3161, 0.0
      %v3194 = vmax.f32 %v3162, 0.0
      %v3195 = vmax.f32 %v3163, 0.0
      %v3196 = vmax.f32 %v3164, 0.0
      %v3197 = vmax.f32 %v3165, 0.0
      %v3198 = vmax.f32 %v3166, 0.0
      %v3199 = vmax.f32 %v3167, 0.0
      %v3200 = vmax.f32 %v3168, 0.0
      %v3201 = vmax.f32 %v3169, 0.0
      %v3202 = vmax.f32 %v3170, 0.0
      %v3203 = vld [vmem:[%s5] sm:$0xff]
      %v3204 = vld [vmem:[%s5 + $0x8] sm:$0xff]
      %v3205 = vld [vmem:[%s5 + $0x10] sm:$0xff]
      %v3206 = vld [vmem:[%s5 + $0x18] sm:$0xff]
      %v3207 = vld [vmem:[%s5 + $0x20] sm:$0xff]
      %v3208 = vld [vmem:[%s5 + $0x28] sm:$0xff]
      %v3209 = vld [vmem:[%s5 + $0x30] sm:$0xff]
      %v3210 = vld [vmem:[%s5 + $0x38] sm:$0xff]
      %v3211 = vld [vmem:[%s5 + $0x40] sm:$0xff]
      %v3212 = vld [vmem:[%s5 + $0x48] sm:$0xff]
      %v3213 = vld [vmem:[%s5 + $0x50] sm:$0xff]
      %v3214 = vld [vmem:[%s5 + $0x58] sm:$0xff]
      %v3215 = vld [vmem:[%s5 + $0x60] sm:$0xff]
      %v3216 = vld [vmem:[%s5 + $0x68] sm:$0xff]
      %v3217 = vld [vmem:[%s5 + $0x70] sm:$0xff]
      %v3218 = vld [vmem:[%s5 + $0x78] sm:$0xff]
      %v3219 = vld [vmem:[%s5 + $0x80] sm:$0xff]
      %v3220 = vld [vmem:[%s5 + $0x88] sm:$0xff]
      %v3221 = vld [vmem:[%s5 + $0x90] sm:$0xff]
      %v3222 = vld [vmem:[%s5 + $0x98] sm:$0xff]
      %v3223 = vld [vmem:[%s5 + $0xa0] sm:$0xff]
      %v3224 = vld [vmem:[%s5 + $0xa8] sm:$0xff]
      %v3225 = vld [vmem:[%s5 + $0xb0] sm:$0xff]
      %v3226 = vld [vmem:[%s5 + $0xb8] sm:$0xff]
      %v3227 = vld [vmem:[%s5 + $0xc0] sm:$0xff]
      %v3228 = vld [vmem:[%s5 + $0xc8] sm:$0xff]
      %v3229 = vld [vmem:[%s5 + $0xd0] sm:$0xff]
      %v3230 = vld [vmem:[%s5 + $0xd8] sm:$0xff]
      %v3231 = vld [vmem:[%s5 + $0xe0] sm:$0xff]
      %v3232 = vld [vmem:[%s5 + $0xe8] sm:$0xff]
      %v3233 = vld [vmem:[%s5 + $0xf0] sm:$0xff]
      %v3234 = vld [vmem:[%s5 + $0xf8] sm:$0xff]
      %v3235 = vld [vmem:[%s6] sm:$0x1]
      %v3237 = vlaneseq
      %v3238 = vshrl.u32 %v3237, 7
      %v3239 = vsub.s32 0, %v3238
      %v3240 = vrot.slane %v3235, %v3239
      %3242 = vmatprep.subr.mxu0 0.0
      %3243 = vmatpush1.msra.mxu0 %v3218
      %3244 = vmatprep.subr.mxu0 0.0
      %3245 = vmatpush1.msra.mxu0 %v3217
      %3246 = vmatprep.subr.mxu0 0.0
      %3247 = vmatpush1.msra.mxu0 %v3216
      %3248 = vmatprep.subr.mxu0 0.0
      %3249 = vmatpush1.msra.mxu0 %v3215
      %3250 = vmatprep.subr.mxu0 0.0
      %3251 = vmatpush1.msra.mxu0 %v3214
      %3252 = vmatprep.subr.mxu0 0.0
      %3253 = vmatpush1.msra.mxu0 %v3213
      %3254 = vmatprep.subr.mxu0 0.0
      %3255 = vmatpush1.msra.mxu0 %v3212
      %3256 = vmatprep.subr.mxu0 0.0
      %3257 = vmatpush1.msra.mxu0 %v3211
      %3258 = vmatprep.subr.mxu0 0.0
      %3259 = vmatpush1.msra.mxu0 %v3210
      %3260 = vmatprep.subr.mxu0 0.0
      %3261 = vmatpush1.msra.mxu0 %v3209
      %3262 = vmatprep.subr.mxu0 0.0
      %3263 = vmatpush1.msra.mxu0 %v3208
      %3264 = vmatprep.subr.mxu0 0.0
      %3265 = vmatpush1.msra.mxu0 %v3207
      %3266 = vmatprep.subr.mxu0 0.0
      %3267 = vmatpush1.msra.mxu0 %v3206
      %3268 = vmatprep.subr.mxu0 0.0
      %3269 = vmatpush1.msra.mxu0 %v3205
      %3270 = vmatprep.subr.mxu0 0.0
      %3271 = vmatpush1.msra.mxu0 %v3204
      %3272 = vmatprep.subr.mxu0 0.0
      %3273 = vmatpush1.msra.mxu0 %v3203
      %3274 = vmatprep.subr.mxu0 0.0
      %3275 = vmatpush2.msra.mxu0 %v3234
      %3276 = vmatprep.subr.mxu0 0.0
      %3277 = vmatpush2.msra.mxu0 %v3233
      %3278 = vmatprep.subr.mxu0 0.0
      %3279 = vmatpush2.msra.mxu0 %v3232
      %3280 = vmatprep.subr.mxu0 0.0
      %3281 = vmatpush2.msra.mxu0 %v3231
      %3282 = vmatprep.subr.mxu0 0.0
      %3283 = vmatpush2.msra.mxu0 %v3230
      %3284 = vmatprep.subr.mxu0 0.0
      %3285 = vmatpush2.msra.mxu0 %v3229
      %3286 = vmatprep.subr.mxu0 0.0
      %3287 = vmatpush2.msra.mxu0 %v3228
      %3288 = vmatprep.subr.mxu0 0.0
      %3289 = vmatpush2.msra.mxu0 %v3227
      %3290 = vmatprep.subr.mxu0 0.0
      %3291 = vmatpush2.msra.mxu0 %v3226
      %3292 = vmatprep.subr.mxu0 0.0
      %3293 = vmatpush2.msra.mxu0 %v3225
      %3294 = vmatprep.subr.mxu0 0.0
      %3295 = vmatpush2.msra.mxu0 %v3224
      %3296 = vmatprep.subr.mxu0 0.0
      %3297 = vmatpush2.msra.mxu0 %v3223
      %3298 = vmatprep.subr.mxu0 0.0
      %3299 = vmatpush2.msra.mxu0 %v3222
      %3300 = vmatprep.subr.mxu0 0.0
      %3301 = vmatpush2.msra.mxu0 %v3221
      %3302 = vmatprep.subr.mxu0 0.0
      %3303 = vmatpush2.msra.mxu0 %v3220
      %3304 = vmatprep.subr.mxu0 0.0
      %3305 = vmatpush2.msra.mxu0 %v3219
      %3306 = vmatprep.mubr.f32.mxu0 %v3172
      %3307 = vmatmul.mubr.f32.gmra.mxu0 %v3171
      %v3308 = vpop.f32.mrf.mxu0
      %v3309 = vadd.f32 %v3240, %v3308
      %v3310 = vpop.f32.mrf.mxu0
      %3311 = vmatprep.mubr.f32.mxu0 %v3174
      %3312 = vmatmul.mubr.f32.gmra.mxu0 %v3173
      %v3313 = vpop.f32.mrf.mxu0
      %v3314 = vadd.f32 %v3240, %v3313
      %v3315 = vpop.f32.mrf.mxu0
      %3316 = vmatprep.mubr.f32.mxu0 %v3176
      %3317 = vmatmul.mubr.f32.gmra.mxu0 %v3175
      %v3318 = vpop.f32.mrf.mxu0
      %v3319 = vadd.f32 %v3240, %v3318
      %v3320 = vpop.f32.mrf.mxu0
      %3321 = vmatprep.mubr.f32.mxu0 %v3178
      %3322 = vmatmul.mubr.f32.gmra.mxu0 %v3177
      %v3323 = vpop.f32.mrf.mxu0
      %v3324 = vadd.f32 %v3240, %v3323
      %v3325 = vpop.f32.mrf.mxu0
      %3326 = vmatprep.mubr.f32.mxu0 %v3180
      %3327 = vmatmul.mubr.f32.gmra.mxu0 %v3179
      %v3328 = vpop.f32.mrf.mxu0
      %v3329 = vadd.f32 %v3240, %v3328
      %v3330 = vpop.f32.mrf.mxu0
      %3331 = vmatprep.mubr.f32.mxu0 %v3182
      %3332 = vmatmul.mubr.f32.gmra.mxu0 %v3181
      %v3333 = vpop.f32.mrf.mxu0
      %v3334 = vadd.f32 %v3240, %v3333
      %v3335 = vpop.f32.mrf.mxu0
      %3336 = vmatprep.mubr.f32.mxu0 %v3184
      %3337 = vmatmul.mubr.f32.gmra.mxu0 %v3183
      %v3338 = vpop.f32.mrf.mxu0
      %v3339 = vadd.f32 %v3240, %v3338
      %v3340 = vpop.f32.mrf.mxu0
      %3341 = vmatprep.mubr.f32.mxu0 %v3186
      %3342 = vmatmul.mubr.f32.gmra.mxu0 %v3185
      %v3343 = vpop.f32.mrf.mxu0
      %v3344 = vadd.f32 %v3240, %v3343
      %v3345 = vpop.f32.mrf.mxu0
      %3346 = vmatprep.mubr.f32.mxu0 %v3188
      %3347 = vmatmul.mubr.f32.gmra.mxu0 %v3187
      %v3348 = vpop.f32.mrf.mxu0
      %v3349 = vadd.f32 %v3240, %v3348
      %v3350 = vpop.f32.mrf.mxu0
      %3351 = vmatprep.mubr.f32.mxu0 %v3190
      %3352 = vmatmul.mubr.f32.gmra.mxu0 %v3189
      %v3353 = vpop.f32.mrf.mxu0
      %v3354 = vadd.f32 %v3240, %v3353
      %v3355 = vpop.f32.mrf.mxu0
      %3356 = vmatprep.mubr.f32.mxu0 %v3192
      %3357 = vmatmul.mubr.f32.gmra.mxu0 %v3191
      %v3358 = vpop.f32.mrf.mxu0
      %v3359 = vadd.f32 %v3240, %v3358
      %v3360 = vpop.f32.mrf.mxu0
      %3361 = vmatprep.mubr.f32.mxu0 %v3194
      %3362 = vmatmul.mubr.f32.gmra.mxu0 %v3193
      %v3363 = vpop.f32.mrf.mxu0
      %v3364 = vadd.f32 %v3240, %v3363
      %v3365 = vpop.f32.mrf.mxu0
      %3366 = vmatprep.mubr.f32.mxu0 %v3196
      %3367 = vmatmul.mubr.f32.gmra.mxu0 %v3195
      %v3368 = vpop.f32.mrf.mxu0
      %v3369 = vadd.f32 %v3240, %v3368
      %v3370 = vpop.f32.mrf.mxu0
      %3371 = vmatprep.mubr.f32.mxu0 %v3198
      %3372 = vmatmul.mubr.f32.gmra.mxu0 %v3197
      %v3373 = vpop.f32.mrf.mxu0
      %v3374 = vadd.f32 %v3240, %v3373
      %v3375 = vpop.f32.mrf.mxu0
      %3376 = vmatprep.mubr.f32.mxu0 %v3200
      %3377 = vmatmul.mubr.f32.gmra.mxu0 %v3199
      %v3378 = vpop.f32.mrf.mxu0
      %v3379 = vadd.f32 %v3240, %v3378
      %v3380 = vpop.f32.mrf.mxu0
      %3381 = vmatprep.mubr.f32.mxu0 %v3202
      %3382 = vmatmul.mubr.f32.gmra.mxu0 %v3201
      %v3383 = vpop.f32.mrf.mxu0
      %v3384 = vadd.f32 %v3240, %v3383
      %v3385 = vpop.f32.mrf.mxu0
      %3386 = vdwg.mxu0
      %v3435 = vrot.slane %v586, 1
      %v3436 = vrot.slane %v588, 1
      %v3437 = vsel %vm784, %v3435, %v3436
      %v3438 = vrot.slane %v587, 1
      %v3439 = vrot.slane %v589, 1
      %v3440 = vsel %vm784, %v3438, %v3439
      %v3441 = vrot.slane %v590, 1
      %v3442 = vsel %vm784, %v3436, %v3441
      %v3443 = vrot.slane %v591, 1
      %v3444 = vsel %vm784, %v3439, %v3443
      %v3445 = vrot.slane %v592, 1
      %v3446 = vrot.slane %v594, 1
      %v3447 = vsel %vm784, %v3445, %v3446
      %v3448 = vrot.slane %v593, 1
      %v3449 = vrot.slane %v595, 1
      %v3450 = vsel %vm784, %v3448, %v3449
      %v3451 = vrot.slane %v596, 1
      %v3452 = vsel %vm784, %v3446, %v3451
      %v3453 = vrot.slane %v597, 1
      %v3454 = vsel %vm784, %v3449, %v3453
      %v3455 = vrot.slane %v598, 1
      %v3456 = vrot.slane %v600, 1
      %v3457 = vsel %vm784, %v3455, %v3456
      %v3458 = vrot.slane %v599, 1
      %v3459 = vrot.slane %v601, 1
      %v3460 = vsel %vm784, %v3458, %v3459
      %v3461 = vrot.slane %v602, 1
      %v3462 = vsel %vm784, %v3456, %v3461
      %v3463 = vrot.slane %v603, 1
      %v3464 = vsel %vm784, %v3459, %v3463
      %v3465 = vrot.slane %v604, 1
      %v3466 = vrot.slane %v606, 1
      %v3467 = vsel %vm784, %v3465, %v3466
      %v3468 = vrot.slane %v605, 1
      %v3469 = vrot.slane %v607, 1
      %v3470 = vsel %vm784, %v3468, %v3469
      %v3471 = vrot.slane %v608, 1
      %v3472 = vsel %vm784, %v3466, %v3471
      %v3473 = vrot.slane %v609, 1
      %v3474 = vsel %vm784, %v3469, %v3473
      %v3475 = vrot.slane %v610, 1
      %v3476 = vrot.slane %v612, 1
      %v3477 = vsel %vm784, %v3475, %v3476
      %v3478 = vrot.slane %v611, 1
      %v3479 = vrot.slane %v613, 1
      %v3480 = vsel %vm784, %v3478, %v3479
      %v3481 = vrot.slane %v614, 1
      %v3482 = vsel %vm784, %v3476, %v3481
      %v3483 = vrot.slane %v615, 1
      %v3484 = vsel %vm784, %v3479, %v3483
      %v3485 = vrot.slane %v616, 1
      %v3486 = vrot.slane %v618, 1
      %v3487 = vsel %vm784, %v3485, %v3486
      %v3488 = vrot.slane %v617, 1
      %v3489 = vrot.slane %v619, 1
      %v3490 = vsel %vm784, %v3488, %v3489
      %v3491 = vrot.slane %v620, 1
      %v3492 = vsel %vm784, %v3486, %v3491
      %v3493 = vrot.slane %v621, 1
      %v3494 = vsel %vm784, %v3489, %v3493
      %v3495 = vrot.slane %v622, 1
      %v3496 = vrot.slane %v624, 1
      %v3497 = vsel %vm784, %v3495, %v3496
      %v3498 = vrot.slane %v623, 1
      %v3499 = vrot.slane %v625, 1
      %v3500 = vsel %vm784, %v3498, %v3499
      %v3501 = vrot.slane %v626, 1
      %v3502 = vsel %vm784, %v3496, %v3501
      %v3503 = vrot.slane %v627, 1
      %v3504 = vsel %vm784, %v3499, %v3503
      %v3505 = vrot.slane %v628, 1
      %v3506 = vrot.slane %v630, 1
      %v3507 = vsel %vm784, %v3505, %v3506
      %v3508 = vrot.slane %v629, 1
      %v3509 = vrot.slane %v631, 1
      %v3510 = vsel %vm784, %v3508, %v3509
      %v3511 = vrot.slane %v632, 1
      %v3512 = vsel %vm784, %v3506, %v3511
      %v3513 = vrot.slane %v633, 1
      %v3514 = vsel %vm784, %v3509, %v3513
      %3515 = vrot.lane.b32.xlu0 %v3437, 120
      %v3516 = vpop.permute.xlu0 %3515
      %3517 = vrot.lane.b32.xlu0 %v3440, 120
      %v3518 = vpop.permute.xlu0 %3517
      %3519 = vrot.lane.b32.xlu0 %v3442, 120
      %v3520 = vpop.permute.xlu0 %3519
      %3521 = vrot.lane.b32.xlu0 %v3444, 120
      %v3522 = vpop.permute.xlu0 %3521
      %3523 = vrot.lane.b32.xlu0 %v3447, 120
      %v3524 = vpop.permute.xlu0 %3523
      %3525 = vrot.lane.b32.xlu0 %v3450, 120
      %v3526 = vpop.permute.xlu0 %3525
      %3527 = vrot.lane.b32.xlu0 %v3452, 120
      %v3528 = vpop.permute.xlu0 %3527
      %3529 = vrot.lane.b32.xlu0 %v3454, 120
      %v3530 = vpop.permute.xlu0 %3529
      %3531 = vrot.lane.b32.xlu0 %v3457, 120
      %v3532 = vpop.permute.xlu0 %3531
      %3533 = vrot.lane.b32.xlu0 %v3460, 120
      %v3534 = vpop.permute.xlu0 %3533
      %3535 = vrot.lane.b32.xlu0 %v3462, 120
      %v3536 = vpop.permute.xlu0 %3535
      %3537 = vrot.lane.b32.xlu0 %v3464, 120
      %v3538 = vpop.permute.xlu0 %3537
      %3539 = vrot.lane.b32.xlu0 %v3467, 120
      %v3540 = vpop.permute.xlu0 %3539
      %3541 = vrot.lane.b32.xlu0 %v3470, 120
      %v3542 = vpop.permute.xlu0 %3541
      %3543 = vrot.lane.b32.xlu0 %v3472, 120
      %v3544 = vpop.permute.xlu0 %3543
      %3545 = vrot.lane.b32.xlu0 %v3474, 120
      %v3546 = vpop.permute.xlu0 %3545
      %3547 = vrot.lane.b32.xlu0 %v3477, 120
      %v3548 = vpop.permute.xlu0 %3547
      %3549 = vrot.lane.b32.xlu0 %v3480, 120
      %v3550 = vpop.permute.xlu0 %3549
      %3551 = vrot.lane.b32.xlu0 %v3482, 120
      %v3552 = vpop.permute.xlu0 %3551
      %3553 = vrot.lane.b32.xlu0 %v3484, 120
      %v3554 = vpop.permute.xlu0 %3553
      %3555 = vrot.lane.b32.xlu0 %v3487, 120
      %v3556 = vpop.permute.xlu0 %3555
      %3557 = vrot.lane.b32.xlu0 %v3490, 120
      %v3558 = vpop.permute.xlu0 %3557
      %3559 = vrot.lane.b32.xlu0 %v3492, 120
      %v3560 = vpop.permute.xlu0 %3559
      %3561 = vrot.lane.b32.xlu0 %v3494, 120
      %v3562 = vpop.permute.xlu0 %3561
      %3563 = vrot.lane.b32.xlu0 %v3497, 120
      %v3564 = vpop.permute.xlu0 %3563
      %3565 = vrot.lane.b32.xlu0 %v3500, 120
      %v3566 = vpop.permute.xlu0 %3565
      %3567 = vrot.lane.b32.xlu0 %v3502, 120
      %v3568 = vpop.permute.xlu0 %3567
      %3569 = vrot.lane.b32.xlu0 %v3504, 120
      %v3570 = vpop.permute.xlu0 %3569
      %3571 = vrot.lane.b32.xlu0 %v3507, 120
      %v3572 = vpop.permute.xlu0 %3571
      %3573 = vrot.lane.b32.xlu0 %v3510, 120
      %v3574 = vpop.permute.xlu0 %3573
      %3575 = vrot.lane.b32.xlu0 %v3512, 120
      %v3576 = vpop.permute.xlu0 %3575
      %3577 = vrot.lane.b32.xlu0 %v3514, 120
      %v3578 = vpop.permute.xlu0 %3577
      %vm3579 = vcmask 982016
      %v3580 = vsel %vm3579, %v3516, %v3518
      %v3581 = vsel %vm3579, %v3520, %v3522
      %v3582 = vsel %vm3579, %v3524, %v3526
      %v3583 = vsel %vm3579, %v3528, %v3530
      %v3584 = vsel %vm3579, %v3532, %v3534
      %v3585 = vsel %vm3579, %v3536, %v3538
      %v3586 = vsel %vm3579, %v3540, %v3542
      %v3587 = vsel %vm3579, %v3544, %v3546
      %v3588 = vsel %vm3579, %v3548, %v3550
      %v3589 = vsel %vm3579, %v3552, %v3554
      %v3590 = vsel %vm3579, %v3556, %v3558
      %v3591 = vsel %vm3579, %v3560, %v3562
      %v3592 = vsel %vm3579, %v3564, %v3566
      %v3593 = vsel %vm3579, %v3568, %v3570
      %v3594 = vsel %vm3579, %v3572, %v3574
      %v3595 = vsel %vm3579, %v3576, %v3578
      %v3612 = vadd.f32 %v3309, %v3580
      %v3613 = vadd.f32 %v3314, %v3581
      %v3614 = vadd.f32 %v3319, %v3582
      %v3615 = vadd.f32 %v3324, %v3583
      %v3616 = vadd.f32 %v3329, %v3584
      %v3617 = vadd.f32 %v3334, %v3585
      %v3618 = vadd.f32 %v3339, %v3586
      %v3619 = vadd.f32 %v3344, %v3587
      %v3620 = vadd.f32 %v3349, %v3588
      %v3621 = vadd.f32 %v3354, %v3589
      %v3622 = vadd.f32 %v3359, %v3590
      %v3623 = vadd.f32 %v3364, %v3591
      %v3624 = vadd.f32 %v3369, %v3592
      %v3625 = vadd.f32 %v3374, %v3593
      %v3626 = vadd.f32 %v3379, %v3594
      %v3627 = vadd.f32 %v3384, %v3595
      %3628 = vst [vmem:[%s454] sm:$0xff] %v3612
      %3629 = vst [vmem:[%s454 + $0x8] sm:$0xff] %v3613
      %3630 = vst [vmem:[%s454 + $0x10] sm:$0xff] %v3614
      %3631 = vst [vmem:[%s454 + $0x18] sm:$0xff] %v3615
      %3632 = vst [vmem:[%s454 + $0x20] sm:$0xff] %v3616
      %3633 = vst [vmem:[%s454 + $0x28] sm:$0xff] %v3617
      %3634 = vst [vmem:[%s454 + $0x30] sm:$0xff] %v3618
      %3635 = vst [vmem:[%s454 + $0x38] sm:$0xff] %v3619
      %3636 = vst [vmem:[%s454 + $0x40] sm:$0xff] %v3620
      %3637 = vst [vmem:[%s454 + $0x48] sm:$0xff] %v3621
      %3638 = vst [vmem:[%s454 + $0x50] sm:$0xff] %v3622
      %3639 = vst [vmem:[%s454 + $0x58] sm:$0xff] %v3623
      %3640 = vst [vmem:[%s454 + $0x60] sm:$0xff] %v3624
      %3641 = vst [vmem:[%s454 + $0x68] sm:$0xff] %v3625
      %3642 = vst [vmem:[%s454 + $0x70] sm:$0xff] %v3626
      %3643 = vst [vmem:[%s454 + $0x78] sm:$0xff] %v3627
      %s3644 = smul.u32 8, %s23
      %p3645 = scmp.lt.s32.totalorder %s22, 1
      %s3646 = scalar_select %p3645, %s22, 1
      %p3647 = scmp.lt.s32.totalorder %s3644, 15
      %s3648 = scalar_select %p3647, %s3644, 15
      %s3649 = smul.addr %s3648, 2
      %s3650 = smul.addr %s3646, 32
      %s3651 = sadd.s32 %s3649, %s3650
      %s3652 = smul.addr %s3651, 8
      %s3653 = scalar_lea.vmem %s7, %s3652
      // Predicated region
      $region49: #{resblock3d_forward.1} parent=47 // pred_check
        %p3654 = pneg %p228
      $region50: #{resblock3d_forward.1} parent=47 // pred_check_branch
        %3656 = sbr.rel (%p3654) target = $region52
      $region51: #{resblock3d_forward.1} parent=47 // pred_region
        %s3657 = smul.u32 8, %s23
      $region52: #{resblock3d_forward.1} parent=47 // pred_fallthru
        _
    $region48: #{resblock3d_forward.1} parent=5 // pred_fallthru
      _
    %p3658 = scmp.le.s32.totalorder 2, %s13
    // Predicated region
    $region53: #{resblock3d_forward.1} parent=5 // pred_check
      %p3659 = pneg %p3658
    $region54: #{resblock3d_forward.1} parent=5 // pred_check_branch
      %3661 = sbr.rel (%p3659) target = $region56
    $region55: #{resblock3d_forward.1} parent=5 // pred_region
      %s3662 = ssub.s32 %s13, 2
      // Predicated region
      $region57: #{resblock3d_forward.1} parent=55 // pred_check
        %p3663 = pneg %p234
      $region58: #{resblock3d_forward.1} parent=55 // pred_check_branch
        %3665 = sbr.rel (%p3663) target = $region60
      $region59: #{resblock3d_forward.1} parent=55 // pred_region
        %s3666 = smul.u32 8, %s25
        %p3667 = scmp.lt.s32.totalorder %s24, 1
        %s3668 = scalar_select %p3667, %s24, 1
        %p3669 = scmp.lt.s32.totalorder %s3666, 15
        %s3670 = scalar_select %p3669, %s3666, 15
        %s3671 = smul.addr %s3670, 2
        %s3672 = smul.addr %s3668, 32
        %s3673 = sadd.s32 %s3671, %s3672
        %s3674 = smul.addr %s3673, 8
        %s3675 = scalar_lea.vmem %s7, %s3674
      $region60: #{resblock3d_forward.1} parent=55 // pred_fallthru
        _
    $region56: #{resblock3d_forward.1} parent=5 // pred_fallthru
      _
  $region6: #{resblock3d_forward.1} parent=0 // loop_footer
    %s17 = sadd.s32 1, %s13
  $region7: #{resblock3d_forward.1} parent=0 // loop_footer_branch
    %12 = sbr.rel target = $region3
  $region8: #{resblock3d_forward.1} parent=0 // loop_exit
    _

</llo_original>
